<compile_context>
chip_gen: v6e
topology: v6e:2x2x1
jax: 0.10.0
libtpu: 0.0.40
codegen_flags: <defaults>
</compile_context>

<pallas_src>
import functools

import jax
import jax.numpy as jnp
import numpy as np
from jax.experimental import pallas as pl
from jax.experimental.pallas import tpu as pltpu


ROW_TILE_TARGET = 512     # rows per tile (multiple of T); VMEM per tile is tiny


def _pick_row_tile(M, T, target=ROW_TILE_TARGET):
    """Rows per tile: multiple of T (whole sequences per tile), divides M,
    <= target, and leaves >= 2 (preferably an even number of) grid steps so
    both TensorCores on v7x get work."""
    cands = [s * T for s in range(1, M // T + 1) if M % (s * T) == 0]
    for need_even in (True, False):
        good = [t for t in cands
                if t <= target and M // t >= 2
                and ((M // t) % 2 == 0 or not need_even)]
        if good:
            return max(good)
    good = [t for t in cands if M // t >= 2]
    return min(good) if good else M


# --------------------------------------------------------------------------
# Fused kernel: enc(+pretrained) -> quant_proj -> VQ -> post_quant(+decoder)
#               -> packed stores + per-tile stats + per-sequence mean pooling
# --------------------------------------------------------------------------
def _fused_tokenizer_kernel(x_ref, ew_ref, eb_ref, qw_ref, qb_ref,
                            bdt_ref, e2_ref, bd_ref, cw_ref, cb_ref,
                            pool_ref,
                            slab_ref, rec_ref, stats_ref, pooled_ref,
                            *, C, K, E):
    tm = x_ref.shape[0]

    # encoder + pretrained-encoder stand-ins: ONE bf16 MXU pass over the
    # concatenated weights [enc_w | pre_w] (x read from HBM once).
    xb = x_ref[...].astype(jnp.bfloat16)
    both = jnp.dot(xb, ew_ref[...],
                   preferred_element_type=jnp.float32) + eb_ref[...]
    high = both[:, :E]                        # encoder 'high_level'
    pre = both[:, E:]                         # pretrained 'high_level'
    pre_n = pre * jax.lax.rsqrt(
        jnp.maximum(jnp.sum(pre * pre, axis=-1, keepdims=True), 1e-24))

    # quant_proj (bf16 inputs, f32 accumulation)
    f = jnp.dot(high.astype(jnp.bfloat16), qw_ref[...],
                preferred_element_type=jnp.float32) + qb_ref[...]      # (tm, V)

    # multi-codebook nearest-neighbour VQ via block-diagonal codebook:
    # one lane-dense (tm, C*K) distance matmul instead of C narrow matmuls
    # + per-codebook transposes.  Kept f32 for torch argmin parity.
    # argmin of ||f_c - e||^2 is invariant to the per-row ||f_c||^2 term.
    dist = e2_ref[...] - 2.0 * jnp.dot(
        f, bdt_ref[...], preferred_element_type=jnp.float32)           # (tm, C*K)
    iota_k = jax.lax.broadcasted_iota(jnp.int32, (tm, K), 1)            # hoisted
    oh_parts, hit_parts = [], []
    for c in range(C):                        # static; K-aligned lane slices
        dc = dist[:, c * K:(c + 1) * K]
        min_d = jnp.min(dc, axis=-1, keepdims=True)
        first = jnp.min(jnp.where(dc <= min_d, iota_k, K),
                        axis=-1, keepdims=True)    # first argmin (= torch)
        oh = (iota_k == first).astype(jnp.float32)
        oh_parts.append(oh)
        hit_parts.append(jnp.sum(oh, axis=0, keepdims=True))            # (1, K)
    onehot = jnp.concatenate(oh_parts, axis=-1)                          # (tm, C*K)

    # codebook gather: one matmul against the block-diagonal codebook
    # (exact f32 codebook rows, matching the autocast-disabled torch quantizer)
    q = jnp.dot(onehot, bd_ref[...], preferred_element_type=jnp.float32)  # (tm, V)

    # post_quant_proj + decoder folded into ONE bf16 matmul [pq_w | pq_w @ dec_w]
    comb = jnp.dot(q.astype(jnp.bfloat16), cw_ref[...],
                   preferred_element_type=jnp.float32) + cb_ref[...]    # (tm, E+Dm)
    post = comb[:, :E]
    rec_ref[...] = comb[:, E:]                # reconstruction (only sub-128 store)

    # lane-dense (2E) packed per-row store: [post_quant tokens | normalized pre]
    slab_ref[...] = jnp.concatenate([post, pre_n], axis=-1)

    # per-tile stats in ONE lane-dense row: [hit histogram (C*K) | sq-err (128)]
    sq = jnp.sum((q - f) ** 2)
    stats_ref[0] = jnp.concatenate(
        hit_parts + [jnp.full((1, 128), sq, jnp.float32)], axis=-1)

    # per-sequence mean pooling of the post-quant tokens (fused here; the tiny
    # LayerNorm -> projection -> normalize epilogue runs on (B, E) in XLA)
    pooled_ref[0] = jnp.dot(pool_ref[...], post,
                            preferred_element_type=jnp.float32)


def fused_tokenizer(x2d, T, params):
    M, Dm = x2d.shape
    E = params["pq_w"].shape[1]
    V = params["qp_w"].shape[1]
    C, K, d = params["codebook"].shape
    CK = C * K
    tm = _pick_row_tile(M, T)
    nt = M // tm
    spt = tm // T                                   # whole sequences per tile

    # ---------------- wrapper-side precomputes (tiny, once per call) ----------
    # block-diagonal codebook: bd[c*K + k, c*d:(c+1)*d] = codebook[c, k]
    cb = params["codebook"]
    bd = jnp.einsum("ckj,cm->ckmj", cb,
                    jnp.eye(C, dtype=cb.dtype)).reshape(CK, C * d)     # (CK, V)
    bdt = bd.T                                                         # (V, CK)
    e2 = jnp.sum(cb * cb, axis=-1).reshape(1, CK)                      # (1, CK)

    # decoder folded through post_quant_proj (f32 re-association; matches the
    # reference reconstruction to small tolerance)
    w_pd = params["pq_w"] @ params["dec_w"]                            # (V, Dm)
    b_pd = params["pq_b"] @ params["dec_w"] + params["dec_b"]          # (1, Dm)
    cw = jnp.concatenate([params["pq_w"], w_pd], axis=1).astype(jnp.bfloat16)
    cbias = jnp.concatenate([params["pq_b"], b_pd], axis=1)            # f32

    # bf16 MXU inputs (halves weight DMA bytes / VMEM residency)
    ew = params["encpre_w"].astype(jnp.bfloat16)
    qw = params["qp_w"].astype(jnp.bfloat16)

    # per-sequence mean-pool matrix (compile-time constant)
    pool = jnp.asarray(np.kron(np.eye(spt, dtype=np.float32),
                               np.full((1, T), 1.0 / T, np.float32)))  # (spt, tm)

    # VMEM limit computed from shapes (double-buffered I/O + weights + slack)
    f32b, bf16b = 4, 2
    per_step_io = (tm * Dm * f32b + tm * 2 * E * f32b + tm * Dm * f32b
                   + (CK + 128) * f32b + spt * E * f32b)
    weight_bytes = (Dm * 2 * E * bf16b + 2 * E * f32b + E * V * bf16b + V * f32b
                    + V * CK * f32b + CK * f32b + CK * V * f32b
                    + V * (E + Dm) * bf16b + (E + Dm) * f32b + spt * tm * f32b)
    vmem_limit = int(min(max(2 * (per_step_io + weight_bytes) + (8 << 20),
                             16 << 20), 64 << 20))

    flops = 2 * M * (Dm * 2 * E + E * V + V * CK + CK * V + V * (E + Dm)
                     + spt * E)
    bytes_accessed = (M * (2 * Dm + 2 * E) * f32b + weight_bytes
                      + nt * (CK + 128) * f32b + (M // T) * E * f32b)
    cost = pl.CostEstimate(flops=int(flops), transcendentals=int(M),
                           bytes_accessed=int(bytes_accessed))

    out_shapes = (
        jax.ShapeDtypeStruct((M, 2 * E), jnp.float32),         # [post | pre_n]
        jax.ShapeDtypeStruct((M, Dm), jnp.float32),            # reconstruction
        jax.ShapeDtypeStruct((nt, 1, CK + 128), jnp.float32),  # [hits | sq-err]
        jax.ShapeDtypeStruct((nt, spt, E), jnp.float32),       # per-seq means
    )
    const2 = lambda i: (0, 0)
    kernel = functools.partial(_fused_tokenizer_kernel, C=C, K=K, E=E)

    # TODO(synk): at production dims on v7x, single-buffer the constant-index
    # weight/codebook specs (pipeline_mode=pl.Buffered(1)) to halve their VMEM
    # residency; irrelevant at these toy sizes.
    return pl.pallas_call(
        kernel,
        out_shape=out_shapes,
        grid=(nt,),
        in_specs=[
            pl.BlockSpec((tm, Dm), lambda i: (i, 0)),          # x row tile
            pl.BlockSpec((Dm, 2 * E), const2),                 # [enc_w|pre_w] bf16
            pl.BlockSpec((1, 2 * E), const2),
            pl.BlockSpec((E, V), const2),                      # quant_proj bf16
            pl.BlockSpec((1, V), const2),
            pl.BlockSpec((V, CK), const2),                     # block-diag cb^T
            pl.BlockSpec((1, CK), const2),                     # ||e||^2
            pl.BlockSpec((CK, V), const2),                     # block-diag cb
            pl.BlockSpec((V, E + Dm), const2),                 # [pq_w|pq_w@dec_w]
            pl.BlockSpec((1, E + Dm), const2),
            pl.BlockSpec((spt, tm), const2),                   # mean-pool matrix
        ],
        out_specs=(
            pl.BlockSpec((tm, 2 * E), lambda i: (i, 0)),
            pl.BlockSpec((tm, Dm), lambda i: (i, 0)),
            pl.BlockSpec((1, 1, CK + 128), lambda i: (i, 0, 0)),
            pl.BlockSpec((1, spt, E), lambda i: (i, 0, 0)),
        ),
        compiler_params=pltpu.CompilerParams(
            dimension_semantics=("parallel",),
            vmem_limit_bytes=vmem_limit,
        ),
        cost_estimate=cost,
    )(x2d, ew, params["encpre_b"], qw, params["qp_b"],
      bdt, e2, bd, cw, cbias, pool)


# --------------------------------------------------------------------------
# Parameter construction (deterministic, synthetic)
# --------------------------------------------------------------------------
def init_params(key, d_motion, embed_dim, vocab_width, num_codebooks,
                vocab_size):
    assert vocab_width % num_codebooks == 0
    ks = jax.random.split(key, 8)

    def lin(k, fin, fout):
        w = jax.random.normal(k, (fin, fout), jnp.float32) / np.sqrt(fin)
        b = jnp.zeros((1, fout), jnp.float32)
        return w, b

    d_cb = vocab_width // num_codebooks
    p = {}
    # TODO(synk): WrapedMotionEncoder / WrapedMotionDecoder / pretrained
    # transformer encoder are undefined in the source repo; deterministic
    # per-token linear stand-ins are used.  Encoder and pretrained-encoder
    # weights are stored pre-concatenated so the fused kernel reads x once.
    enc_w, enc_b = lin(ks[0], d_motion, embed_dim)
    pre_w, pre_b = lin(ks[6], d_motion, embed_dim)
    p["encpre_w"] = jnp.concatenate([enc_w, pre_w], axis=1)        # (Dm, 2E)
    p["encpre_b"] = jnp.concatenate([enc_b, pre_b], axis=1)        # (1, 2E)
    p["qp_w"], p["qp_b"] = lin(ks[1], embed_dim, vocab_width)
    p["codebook"] = jax.random.normal(
        ks[2], (num_codebooks, vocab_size, d_cb), jnp.float32) * 0.1
    p["pq_w"], p["pq_b"] = lin(ks[3], vocab_width, embed_dim)
    p["dec_w"], p["dec_b"] = lin(ks[4], embed_dim, d_motion)
    p["ln_g"] = jnp.ones((1, embed_dim), jnp.float32)
    p["ln_b"] = jnp.zeros((1, embed_dim), jnp.float32)
    p["proj_w"], p["proj_b"] = lin(ks[5], embed_dim, embed_dim)
    p["logit_scale"] = jnp.asarray(np.log(1.0 / 0.07), jnp.float32)
    return p


# --------------------------------------------------------------------------
# Forward pass (mirrors IntentionalTokenizer.forward)
# --------------------------------------------------------------------------
def intentional_tokenizer_forward(motion, params, beta=0.25, vae_bs=None):
    B, T, Dm = motion.shape
    if vae_bs is None:
        vae_bs = B
    E = params["pq_w"].shape[1]
    V = params["qp_w"].shape[1]
    C, K, _ = params["codebook"].shape
    CK = C * K
    M = B * T

    x2d = motion.reshape(M, Dm).astype(jnp.float32)
    slab, rec2d, stats, pooled = fused_tokenizer(x2d, T, params)

    # VQ loss (forward value).  TODO(synk): no straight-through estimator /
    # stop_gradient split of the two loss terms -- forward-only implementation.
    mse = jnp.sum(stats[:, 0, CK]) / (M * V)
    vq_loss = beta * mse + mse
    entropy_loss = jnp.float32(0.0)          # use_entropy_loss=False (le <= 0)

    # per-codebook usage %: fraction of entries hit at least once in the batch
    counts = jnp.sum(stats[:, 0, :CK].reshape(-1, C, K), axis=0)       # (C, K)
    codebook_usages = (jnp.sum((counts > 0).astype(jnp.float32), axis=-1)
                       / K * 100.0)

    # decoder(motion_tokens[:vae_bs]); the decoder stand-in is per-token so the
    # fused kernel decodes every row and we slice here.
    # TODO(synk): when vae_bs < B the extra decoded rows are wasted compute.
    motion_rec = rec2d.reshape(B, T, Dm)[:vae_bs]

    # mean pooling was fused into the main kernel; finish the tiny (B, E)
    # LayerNorm(eps=1e-6) -> projection -> L2-normalize epilogue in plain XLA.
    seq_mean = pooled.reshape(B, E)
    mu = jnp.mean(seq_mean, axis=-1, keepdims=True)
    var = jnp.mean((seq_mean - mu) ** 2, axis=-1, keepdims=True)
    y = (seq_mean - mu) * jax.lax.rsqrt(var + 1e-6)
    y = y * params["ln_g"] + params["ln_b"]
    z = y @ params["proj_w"] + params["proj_b"]
    motion_features = z * jax.lax.rsqrt(
        jnp.maximum(jnp.sum(z * z, axis=-1, keepdims=True), 1e-24))

    motion_pretrain_features = slab[:, E:].reshape(B, T, E)

    return {
        "motion_rec": motion_rec,
        "vq_loss": vq_loss,
        "entropy_loss": entropy_loss,
        "codebook_usages": codebook_usages,
        "motion_features": motion_features,
        "motion_pretrain_features": motion_pretrain_features,
        "logit_scale": jnp.exp(params["logit_scale"]),
    }


# --------------------------------------------------------------------------
if __name__ == "__main__":
    key = jax.random.PRNGKey(0)
    k_motion, k_params = jax.random.split(key)

    # small but lane-friendly, forward-consistent shapes
    B, T, Dm = 4, 128, 32        # batch, tokens per sequence, motion dim
    embed_dim = 64               # encoder.embed_dim
    vocab_width = 32             # tokenizer.vocab_width
    num_codebooks = 2            # tokenizer.num_codebooks
    vocab_size = 128             # tokenizer.vocab_size

    motion = jax.random.normal(k_motion, (B, T, Dm), jnp.float32)
    params = init_params(k_params, Dm, embed_dim, vocab_width,
                         num_codebooks, vocab_size)

    fwd = jax.jit(intentional_tokenizer_forward,
                  static_argnames=("beta", "vae_bs"))
    out = fwd(motion, params)
    out = jax.block_until_ready(out)

    assert out["motion_rec"].shape == (B, T, Dm)
    assert out["motion_features"].shape == (B, embed_dim)
    assert out["motion_pretrain_features"].shape == (B, T, embed_dim)
    assert out["codebook_usages"].shape == (num_codebooks,)
    assert bool(jnp.isfinite(out["vq_loss"]))
    assert bool(jnp.all(jnp.isfinite(out["motion_rec"])))
    assert bool(jnp.all(jnp.isfinite(out["motion_features"])))
    print("KERNEL_OK")
</pallas_src>

<mosaic_0001>
module attributes {stable_mosaic.version = 11 : i64} {
  func.func @_fused_tokenizer_kernel(%arg0: i32, %arg1: memref<256x32xf32, #tpu.memory_space<vmem>>, %arg2: memref<32x128xbf16, #tpu.memory_space<vmem>>, %arg3: memref<1x128xf32, #tpu.memory_space<vmem>>, %arg4: memref<64x32xbf16, #tpu.memory_space<vmem>>, %arg5: memref<1x32xf32, #tpu.memory_space<vmem>>, %arg6: memref<32x256xf32, #tpu.memory_space<vmem>>, %arg7: memref<1x256xf32, #tpu.memory_space<vmem>>, %arg8: memref<256x32xf32, #tpu.memory_space<vmem>>, %arg9: memref<32x96xbf16, #tpu.memory_space<vmem>>, %arg10: memref<1x96xf32, #tpu.memory_space<vmem>>, %arg11: memref<2x256xf32, #tpu.memory_space<vmem>>, %arg12: memref<256x128xf32, #tpu.memory_space<vmem>>, %arg13: memref<256x32xf32, #tpu.memory_space<vmem>>, %arg14: memref<1x1x384xf32, #tpu.memory_space<vmem>>, %arg15: memref<1x2x64xf32, #tpu.memory_space<vmem>>) attributes {dimension_semantics = [#tpu.dimension_semantics<parallel>], iteration_bounds = array<i64: 2>, scalar_prefetch = 0 : i64, scratch_operands = 0 : i64, tpu.core_type = #tpu.core_type<tc>, window_params = [{transform_indices = @transform_0, window_bounds = array<i64: 256, 32>}, {pipeline_mode = #tpu.pipeline_mode<synchronous>, transform_indices = @transform_1, window_bounds = array<i64: 32, 128>}, {pipeline_mode = #tpu.pipeline_mode<synchronous>, transform_indices = @transform_2, window_bounds = array<i64: 1, 128>}, {pipeline_mode = #tpu.pipeline_mode<synchronous>, transform_indices = @transform_3, window_bounds = array<i64: 64, 32>}, {pipeline_mode = #tpu.pipeline_mode<synchronous>, transform_indices = @transform_4, window_bounds = array<i64: 1, 32>}, {pipeline_mode = #tpu.pipeline_mode<synchronous>, transform_indices = @transform_5, window_bounds = array<i64: 32, 256>}, {pipeline_mode = #tpu.pipeline_mode<synchronous>, transform_indices = @transform_6, window_bounds = array<i64: 1, 256>}, {pipeline_mode = #tpu.pipeline_mode<synchronous>, transform_indices = @transform_7, window_bounds = array<i64: 256, 32>}, {pipeline_mode = #tpu.pipeline_mode<synchronous>, transform_indices = @transform_8, window_bounds = array<i64: 32, 96>}, {pipeline_mode = #tpu.pipeline_mode<synchronous>, transform_indices = @transform_9, window_bounds = array<i64: 1, 96>}, {pipeline_mode = #tpu.pipeline_mode<synchronous>, transform_indices = @transform_10, window_bounds = array<i64: 2, 256>}, {transform_indices = @transform_11, window_bounds = array<i64: 256, 128>}, {transform_indices = @transform_12, window_bounds = array<i64: 256, 32>}, {transform_indices = @transform_13, window_bounds = array<i64: 1, 1, 384>}, {transform_indices = @transform_14, window_bounds = array<i64: 1, 2, 64>}]} {
    %c0 = arith.constant 0 : index
    %c0_0 = arith.constant 0 : index
    %0 = vector.load %arg1[%c0, %c0_0] : memref<256x32xf32, #tpu.memory_space<vmem>>, vector<256x32xf32>
    %1 = arith.truncf %0 : vector<256x32xf32> to vector<256x32xbf16>
    %c0_1 = arith.constant 0 : index
    %c0_2 = arith.constant 0 : index
    %2 = vector.load %arg2[%c0_1, %c0_2] : memref<32x128xbf16, #tpu.memory_space<vmem>>, vector<32x128xbf16>
    %cst = arith.constant dense<0.000000e+00> : vector<256x128xf32>
    %3 = tpu.matmul %1, %2, %cst {dimension_numbers = #tpu.dot_dimension_numbers<[1], [0], [0], [1], [0, 0, 1, 1], [], []>} : vector<256x32xbf16>, vector<32x128xbf16>, vector<256x128xf32> -> vector<256x128xf32>
    %c0_3 = arith.constant 0 : index
    %c0_4 = arith.constant 0 : index
    %4 = vector.load %arg3[%c0_3, %c0_4] : memref<1x128xf32, #tpu.memory_space<vmem>>, vector<1x128xf32>
    %5 = vector.broadcast %4 : vector<1x128xf32> to vector<256x128xf32>
    %6 = arith.addf %3, %5 : vector<256x128xf32>
    %7 = vector.extract_strided_slice %6 {offsets = [0, 0], sizes = [256, 64], strides = [1, 1]} : vector<256x128xf32> to vector<256x64xf32>
    %8 = vector.extract_strided_slice %6 {offsets = [0, 64], sizes = [256, 64], strides = [1, 1]} : vector<256x128xf32> to vector<256x64xf32>
    %9 = arith.mulf %8, %8 : vector<256x64xf32>
    %cst_5 = arith.constant dense<0.000000e+00> : vector<256xf32>
    %10 = vector.multi_reduction <add>, %9, %cst_5 [1] : vector<256x64xf32> to vector<256xf32>
    %11 = vector.shape_cast %10 : vector<256xf32> to vector<256x1xf32>
    %cst_6 = arith.constant 1.000000e-24 : f32
    %12 = vector.broadcast %cst_6 : f32 to vector<256x1xf32>
    %13 = arith.maximumf %11, %12 : vector<256x1xf32>
    %14 = math.rsqrt %13 : vector<256x1xf32>
    %15 = vector.broadcast %14 : vector<256x1xf32> to vector<256x64xf32>
    %16 = arith.mulf %8, %15 : vector<256x64xf32>
    %17 = arith.truncf %7 : vector<256x64xf32> to vector<256x64xbf16>
    %c0_7 = arith.constant 0 : index
    %c0_8 = arith.constant 0 : index
    %18 = vector.load %arg4[%c0_7, %c0_8] : memref<64x32xbf16, #tpu.memory_space<vmem>>, vector<64x32xbf16>
    %cst_9 = arith.constant dense<0.000000e+00> : vector<256x32xf32>
    %19 = tpu.matmul %17, %18, %cst_9 {dimension_numbers = #tpu.dot_dimension_numbers<[1], [0], [0], [1], [0, 0, 1, 1], [], []>} : vector<256x64xbf16>, vector<64x32xbf16>, vector<256x32xf32> -> vector<256x32xf32>
    %c0_10 = arith.constant 0 : index
    %c0_11 = arith.constant 0 : index
    %20 = vector.load %arg5[%c0_10, %c0_11] : memref<1x32xf32, #tpu.memory_space<vmem>>, vector<1x32xf32>
    %21 = vector.broadcast %20 : vector<1x32xf32> to vector<256x32xf32>
    %22 = arith.addf %19, %21 : vector<256x32xf32>
    %c0_12 = arith.constant 0 : index
    %c0_13 = arith.constant 0 : index
    %23 = vector.load %arg7[%c0_12, %c0_13] : memref<1x256xf32, #tpu.memory_space<vmem>>, vector<1x256xf32>
    %c0_14 = arith.constant 0 : index
    %c0_15 = arith.constant 0 : index
    %24 = vector.load %arg6[%c0_14, %c0_15] : memref<32x256xf32, #tpu.memory_space<vmem>>, vector<32x256xf32>
    %cst_16 = arith.constant dense<0.000000e+00> : vector<256x256xf32>
    %25 = tpu.matmul %22, %24, %cst_16 {dimension_numbers = #tpu.dot_dimension_numbers<[1], [0], [0], [1], [0, 0, 1, 1], [], []>} : vector<256x32xf32>, vector<32x256xf32>, vector<256x256xf32> -> vector<256x256xf32>
    %cst_17 = arith.constant 2.000000e+00 : f32
    %26 = vector.broadcast %cst_17 : f32 to vector<256x256xf32>
    %27 = arith.mulf %26, %25 : vector<256x256xf32>
    %28 = vector.broadcast %23 : vector<1x256xf32> to vector<256x256xf32>
    %29 = arith.subf %28, %27 : vector<256x256xf32>
    %30 = tpu.iota {dimensions = array<i32: 1>} : vector<256x128xi32>
    %31 = vector.extract_strided_slice %29 {offsets = [0, 0], sizes = [256, 128], strides = [1, 1]} : vector<256x256xf32> to vector<256x128xf32>
    %cst_18 = arith.constant dense<0x7F800000> : vector<256xf32>
    %32 = vector.multi_reduction <minimumf>, %31, %cst_18 [1] : vector<256x128xf32> to vector<256xf32>
    %33 = vector.shape_cast %32 : vector<256xf32> to vector<256x1xf32>
    %34 = vector.broadcast %33 : vector<256x1xf32> to vector<256x128xf32>
    %35 = arith.cmpf ole, %31, %34 : vector<256x128xf32>
    %c128_i32 = arith.constant 128 : i32
    %36 = vector.broadcast %c128_i32 : i32 to vector<256x128xi32>
    %37 = arith.select %35, %30, %36 : vector<256x128xi1>, vector<256x128xi32>
    %cst_19 = arith.constant dense<2147483647> : vector<256xi32>
    %38 = vector.multi_reduction <minsi>, %37, %cst_19 [1] : vector<256x128xi32> to vector<256xi32>
    %39 = vector.shape_cast %38 : vector<256xi32> to vector<256x1xi32>
    %40 = vector.broadcast %39 : vector<256x1xi32> to vector<256x128xi32>
    %41 = arith.cmpi eq, %30, %40 : vector<256x128xi32>
    %42 = arith.extui %41 : vector<256x128xi1> to vector<256x128xi32>
    %43 = arith.sitofp %42 : vector<256x128xi32> to vector<256x128xf32>
    %cst_20 = arith.constant dense<0.000000e+00> : vector<128xf32>
    %44 = vector.multi_reduction <add>, %43, %cst_20 [0] : vector<256x128xf32> to vector<128xf32>
    %45 = vector.shape_cast %44 : vector<128xf32> to vector<1x128xf32>
    %46 = vector.extract_strided_slice %29 {offsets = [0, 128], sizes = [256, 128], strides = [1, 1]} : vector<256x256xf32> to vector<256x128xf32>
    %cst_21 = arith.constant dense<0x7F800000> : vector<256xf32>
    %47 = vector.multi_reduction <minimumf>, %46, %cst_21 [1] : vector<256x128xf32> to vector<256xf32>
    %48 = vector.shape_cast %47 : vector<256xf32> to vector<256x1xf32>
    %49 = vector.broadcast %48 : vector<256x1xf32> to vector<256x128xf32>
    %50 = arith.cmpf ole, %46, %49 : vector<256x128xf32>
    %c128_i32_22 = arith.constant 128 : i32
    %51 = vector.broadcast %c128_i32_22 : i32 to vector<256x128xi32>
    %52 = arith.select %50, %30, %51 : vector<256x128xi1>, vector<256x128xi32>
    %cst_23 = arith.constant dense<2147483647> : vector<256xi32>
    %53 = vector.multi_reduction <minsi>, %52, %cst_23 [1] : vector<256x128xi32> to vector<256xi32>
    %54 = vector.shape_cast %53 : vector<256xi32> to vector<256x1xi32>
    %55 = vector.broadcast %54 : vector<256x1xi32> to vector<256x128xi32>
    %56 = arith.cmpi eq, %30, %55 : vector<256x128xi32>
    %57 = arith.extui %56 : vector<256x128xi1> to vector<256x128xi32>
    %58 = arith.sitofp %57 : vector<256x128xi32> to vector<256x128xf32>
    %cst_24 = arith.constant dense<0.000000e+00> : vector<128xf32>
    %59 = vector.multi_reduction <add>, %58, %cst_24 [0] : vector<256x128xf32> to vector<128xf32>
    %60 = vector.shape_cast %59 : vector<128xf32> to vector<1x128xf32>
    %61 = tpu.concatenate %43, %58 in 1 : vector<256x128xf32>, vector<256x128xf32> -> vector<256x256xf32>
    %c0_25 = arith.constant 0 : index
    %c0_26 = arith.constant 0 : index
    %62 = vector.load %arg8[%c0_25, %c0_26] : memref<256x32xf32, #tpu.memory_space<vmem>>, vector<256x32xf32>
    %cst_27 = arith.constant dense<0.000000e+00> : vector<256x32xf32>
    %63 = tpu.matmul %61, %62, %cst_27 {dimension_numbers = #tpu.dot_dimension_numbers<[1], [0], [0], [1], [0, 0, 1, 1], [], []>} : vector<256x256xf32>, vector<256x32xf32>, vector<256x32xf32> -> vector<256x32xf32>
    %64 = arith.truncf %63 : vector<256x32xf32> to vector<256x32xbf16>
    %c0_28 = arith.constant 0 : index
    %c0_29 = arith.constant 0 : index
    %65 = vector.load %arg9[%c0_28, %c0_29] : memref<32x96xbf16, #tpu.memory_space<vmem>>, vector<32x96xbf16>
    %cst_30 = arith.constant dense<0.000000e+00> : vector<256x96xf32>
    %66 = tpu.matmul %64, %65, %cst_30 {dimension_numbers = #tpu.dot_dimension_numbers<[1], [0], [0], [1], [0, 0, 1, 1], [], []>} : vector<256x32xbf16>, vector<32x96xbf16>, vector<256x96xf32> -> vector<256x96xf32>
    %c0_31 = arith.constant 0 : index
    %c0_32 = arith.constant 0 : index
    %67 = vector.load %arg10[%c0_31, %c0_32] : memref<1x96xf32, #tpu.memory_space<vmem>>, vector<1x96xf32>
    %68 = vector.broadcast %67 : vector<1x96xf32> to vector<256x96xf32>
    %69 = arith.addf %66, %68 : vector<256x96xf32>
    %70 = vector.extract_strided_slice %69 {offsets = [0, 0], sizes = [256, 64], strides = [1, 1]} : vector<256x96xf32> to vector<256x64xf32>
    %71 = vector.extract_strided_slice %69 {offsets = [0, 64], sizes = [256, 32], strides = [1, 1]} : vector<256x96xf32> to vector<256x32xf32>
    %c0_33 = arith.constant 0 : index
    %c0_34 = arith.constant 0 : index
    %72 = vector.load %arg13[%c0_33, %c0_34] : memref<256x32xf32, #tpu.memory_space<vmem>>, vector<256x32xf32>
    tpu.vector_store %arg13[%c0_33, %c0_34], %71 {strides = array<i32>} : memref<256x32xf32, #tpu.memory_space<vmem>>, vector<256x32xf32>,
    %73 = tpu.concatenate %70, %16 in 1 : vector<256x64xf32>, vector<256x64xf32> -> vector<256x128xf32>
    %c0_35 = arith.constant 0 : index
    %c0_36 = arith.constant 0 : index
    %74 = vector.load %arg12[%c0_35, %c0_36] : memref<256x128xf32, #tpu.memory_space<vmem>>, vector<256x128xf32>
    tpu.vector_store %arg12[%c0_35, %c0_36], %73 {strides = array<i32>} : memref<256x128xf32, #tpu.memory_space<vmem>>, vector<256x128xf32>,
    %75 = arith.subf %63, %22 : vector<256x32xf32>
    %76 = arith.mulf %75, %75 : vector<256x32xf32>
    %77 = vector.shape_cast %76 : vector<256x32xf32> to vector<1x256x32xf32>
    %cst_37 = arith.constant dense<0.000000e+00> : vector<1xf32>
    %78 = vector.multi_reduction <add>, %77, %cst_37 [1, 2] : vector<1x256x32xf32> to vector<1xf32>
    %79 = vector.shape_cast %78 : vector<1xf32> to vector<1x1x1xf32>
    %80 = vector.extract %79[0, 0, 0] : f32 from vector<1x1x1xf32>
    %81 = vector.broadcast %80 : f32 to vector<1x128xf32>
    %82 = tpu.concatenate %45, %60, %81 in 1 : vector<1x128xf32>, vector<1x128xf32>, vector<1x128xf32> -> vector<1x384xf32>
    %c0_38 = arith.constant 0 : index
    %c0_39 = arith.constant 0 : index
    %c0_40 = arith.constant 0 : index
    %83 = vector.load %arg14[%c0_38, %c0_39, %c0_40] : memref<1x1x384xf32, #tpu.memory_space<vmem>>, vector<1x1x384xf32>
    %84 = vector.shape_cast %83 : vector<1x1x384xf32> to vector<1x384xf32>
    %85 = vector.shape_cast %82 : vector<1x384xf32> to vector<1x1x384xf32>
    tpu.vector_store %arg14[%c0_38, %c0_39, %c0_40], %85 {strides = array<i32>} : memref<1x1x384xf32, #tpu.memory_space<vmem>>, vector<1x1x384xf32>,
    %c0_41 = arith.constant 0 : index
    %c0_42 = arith.constant 0 : index
    %86 = vector.load %arg11[%c0_41, %c0_42] : memref<2x256xf32, #tpu.memory_space<vmem>>, vector<2x256xf32>
    %cst_43 = arith.constant dense<0.000000e+00> : vector<2x64xf32>
    %87 = tpu.matmul %86, %70, %cst_43 {dimension_numbers = #tpu.dot_dimension_numbers<[1], [0], [0], [1], [0, 0, 1, 1], [], []>} : vector<2x256xf32>, vector<256x64xf32>, vector<2x64xf32> -> vector<2x64xf32>
    %c0_44 = arith.constant 0 : index
    %c0_45 = arith.constant 0 : index
    %c0_46 = arith.constant 0 : index
    %88 = vector.load %arg15[%c0_44, %c0_45, %c0_46] : memref<1x2x64xf32, #tpu.memory_space<vmem>>, vector<1x2x64xf32>
    %89 = vector.shape_cast %88 : vector<1x2x64xf32> to vector<2x64xf32>
    %90 = vector.shape_cast %87 : vector<2x64xf32> to vector<1x2x64xf32>
    tpu.vector_store %arg15[%c0_44, %c0_45, %c0_46], %90 {strides = array<i32>} : memref<1x2x64xf32, #tpu.memory_space<vmem>>, vector<1x2x64xf32>,
    return
  }
  func.func @transform_0(%arg0: i32) -> (i32, i32) {
    %c0_i32 = arith.constant 0 : i32
    %c0_i32_0 = arith.constant 0 : i32
    return %arg0, %c0_i32 : i32, i32
  }
  func.func @transform_1(%arg0: i32) -> (i32, i32) {
    %c0_i32 = arith.constant 0 : i32
    %c0_i32_0 = arith.constant 0 : i32
    %c0_i32_1 = arith.constant 0 : i32
    return %c0_i32, %c0_i32_0 : i32, i32
  }
  func.func @transform_2(%arg0: i32) -> (i32, i32) {
    %c0_i32 = arith.constant 0 : i32
    %c0_i32_0 = arith.constant 0 : i32
    %c0_i32_1 = arith.constant 0 : i32
    return %c0_i32, %c0_i32_0 : i32, i32
  }
  func.func @transform_3(%arg0: i32) -> (i32, i32) {
    %c0_i32 = arith.constant 0 : i32
    %c0_i32_0 = arith.constant 0 : i32
    %c0_i32_1 = arith.constant 0 : i32
    return %c0_i32, %c0_i32_0 : i32, i32
  }
  func.func @transform_4(%arg0: i32) -> (i32, i32) {
    %c0_i32 = arith.constant 0 : i32
    %c0_i32_0 = arith.constant 0 : i32
    %c0_i32_1 = arith.constant 0 : i32
    return %c0_i32, %c0_i32_0 : i32, i32
  }
  func.func @transform_5(%arg0: i32) -> (i32, i32) {
    %c0_i32 = arith.constant 0 : i32
    %c0_i32_0 = arith.constant 0 : i32
    %c0_i32_1 = arith.constant 0 : i32
    return %c0_i32, %c0_i32_0 : i32, i32
  }
  func.func @transform_6(%arg0: i32) -> (i32, i32) {
    %c0_i32 = arith.constant 0 : i32
    %c0_i32_0 = arith.constant 0 : i32
    %c0_i32_1 = arith.constant 0 : i32
    return %c0_i32, %c0_i32_0 : i32, i32
  }
  func.func @transform_7(%arg0: i32) -> (i32, i32) {
    %c0_i32 = arith.constant 0 : i32
    %c0_i32_0 = arith.constant 0 : i32
    %c0_i32_1 = arith.constant 0 : i32
    return %c0_i32, %c0_i32_0 : i32, i32
  }
  func.func @transform_8(%arg0: i32) -> (i32, i32) {
    %c0_i32 = arith.constant 0 : i32
    %c0_i32_0 = arith.constant 0 : i32
    %c0_i32_1 = arith.constant 0 : i32
    return %c0_i32, %c0_i32_0 : i32, i32
  }
  func.func @transform_9(%arg0: i32) -> (i32, i32) {
    %c0_i32 = arith.constant 0 : i32
    %c0_i32_0 = arith.constant 0 : i32
    %c0_i32_1 = arith.constant 0 : i32
    return %c0_i32, %c0_i32_0 : i32, i32
  }
  func.func @transform_10(%arg0: i32) -> (i32, i32) {
    %c0_i32 = arith.constant 0 : i32
    %c0_i32_0 = arith.constant 0 : i32
    %c0_i32_1 = arith.constant 0 : i32
    return %c0_i32, %c0_i32_0 : i32, i32
  }
  func.func @transform_11(%arg0: i32) -> (i32, i32) {
    %c0_i32 = arith.constant 0 : i32
    %c0_i32_0 = arith.constant 0 : i32
    return %arg0, %c0_i32 : i32, i32
  }
  func.func @transform_12(%arg0: i32) -> (i32, i32) {
    %c0_i32 = arith.constant 0 : i32
    %c0_i32_0 = arith.constant 0 : i32
    return %arg0, %c0_i32 : i32, i32
  }
  func.func @transform_13(%arg0: i32) -> (i32, i32, i32) {
    %c0_i32 = arith.constant 0 : i32
    %c0_i32_0 = arith.constant 0 : i32
    %c0_i32_1 = arith.constant 0 : i32
    return %arg0, %c0_i32, %c0_i32_0 : i32, i32, i32
  }
  func.func @transform_14(%arg0: i32) -> (i32, i32, i32) {
    %c0_i32 = arith.constant 0 : i32
    %c0_i32_0 = arith.constant 0 : i32
    %c0_i32_1 = arith.constant 0 : i32
    return %arg0, %c0_i32, %c0_i32_0 : i32, i32, i32
  }
}

</mosaic_0001>

<llo_original>
// kernel: intentional_tokenizer_forward.1
$region0: #{intentional_tokenizer_forward.1}
  #allocation0 [shape = 'u32[]', space=smem, size = 0x4, offset = 0x4, fixed_abs, tag = 'smem constant byte address 0x4 - core index']
  #allocation1 [shape = 'u32[144,128]{1,0:T(1,128)}', space=vmem, size = 0x12000, scoped, tag = 'internal scratch']
  %s0 = inlined_call_operand.vmem [shape: f32[512,32], index: 0, kind: input, shape index: {}]
  %s1 = inlined_call_operand.vmem [shape: bf16[32,128], index: 1, kind: input, shape index: {}]
  %s2 = inlined_call_operand.vmem [shape: f32[1,128], index: 2, kind: input, shape index: {}]
  %s3 = inlined_call_operand.vmem [shape: bf16[64,32], index: 3, kind: input, shape index: {}]
  %s4 = inlined_call_operand.vmem [shape: f32[1,32], index: 4, kind: input, shape index: {}]
  %s5 = inlined_call_operand.vmem [shape: f32[32,256], index: 5, kind: input, shape index: {}]
  %s6 = inlined_call_operand.vmem [shape: f32[1,256], index: 6, kind: input, shape index: {}]
  %s7 = inlined_call_operand.vmem [shape: f32[256,32], index: 7, kind: input, shape index: {}]
  %s8 = inlined_call_operand.vmem [shape: bf16[32,96], index: 8, kind: input, shape index: {}]
  %s9 = inlined_call_operand.vmem [shape: f32[1,96], index: 9, kind: input, shape index: {}]
  %s10 = inlined_call_operand.vmem [shape: f32[2,256], index: 10, kind: input, shape index: {}]
  %s11 = inlined_call_operand.vmem [shape: f32[512,128], index: 11, kind: output, shape index: {0}]
  %s12 = inlined_call_operand.vmem [shape: f32[512,32], index: 12, kind: output, shape index: {1}]
  %s13 = inlined_call_operand.vmem [shape: f32[2,1,384], index: 13, kind: output, shape index: {2}]
  %s14 = inlined_call_operand.vmem [shape: f32[2,2,64], index: 14, kind: output, shape index: {3}]
  %15 = xla_tuple %s11, %s12, %s13, %s14
  %s16 = sld [smem:[#allocation0]]
  $region101: #{intentional_tokenizer_forward.1} parent=0
    _
  %s18 = ssub.s32 1, %s16
  %s19 = scalar_select 0, %s18, %s16
  loop: start=0, step=1, limit=4
  $region2: #{intentional_tokenizer_forward.1} parent=0 // loop_pre_header
    _
  $region3: #{intentional_tokenizer_forward.1} parent=0 // loop_header
    %s21 = sphi 0, %s25
    %p22 = scmp.ge.s32.totalorder %s21, 4
    %s31 = sphi 0, %s33
    %s34 = sphi 0, %s31
    %s35 = sphi 0, %s34
    %s51 = sphi 0, %s35
    %s55 = sphi 0, %s55
    %s57 = sphi 0, %s55
    %s58 = sphi 0, %s57
    %s72 = sphi 0, %s58
    %s76 = sphi 0, %s76
    %s78 = sphi 0, %s76
    %s79 = sphi 0, %s78
    %s93 = sphi 0, %s79
    %s97 = sphi 0, %s97
    %s99 = sphi 0, %s97
    %s100 = sphi 0, %s99
    %s114 = sphi 0, %s100
    %s118 = sphi 0, %s118
    %s120 = sphi 0, %s118
    %s121 = sphi 0, %s120
    %s135 = sphi 0, %s121
    %s139 = sphi 0, %s139
    %s141 = sphi 0, %s139
    %s142 = sphi 0, %s141
    %s156 = sphi 0, %s142
    %s160 = sphi 0, %s160
    %s162 = sphi 0, %s160
    %s163 = sphi 0, %s162
    %s177 = sphi 0, %s163
    %s181 = sphi 0, %s181
    %s183 = sphi 0, %s181
    %s184 = sphi 0, %s183
    %s198 = sphi 0, %s184
    %s202 = sphi 0, %s202
    %s204 = sphi 0, %s202
    %s205 = sphi 0, %s204
    %s219 = sphi 0, %s205
    %s223 = sphi 0, %s223
    %s225 = sphi 0, %s223
    %s226 = sphi 0, %s225
    %s240 = sphi 0, %s226
    %s244 = sphi 0, %s244
    %s246 = sphi 0, %s244
    %s247 = sphi 0, %s246
    %s261 = sphi 0, %s247
    %s267 = sphi 0, %s269
    %s270 = sphi 0, %s267
    %s271 = sphi 0, %s270
    %s287 = sphi 0, %s271
    %s293 = sphi 0, %s295
    %s296 = sphi 0, %s293
    %s297 = sphi 0, %s296
    %s313 = sphi 0, %s297
    %s319 = sphi 0, %s321
    %s322 = sphi 0, %s319
    %s323 = sphi 0, %s322
    %s339 = sphi 0, %s323
    %s345 = sphi 0, %s347
    %s348 = sphi 0, %s345
    %s349 = sphi 0, %s348
    %s365 = sphi 0, %s349
  $region4: #{intentional_tokenizer_forward.1} parent=0 // loop_header_branch
    %24 = sbr.rel (%p22) target = $region8
  $region5: #{intentional_tokenizer_forward.1} parent=0 // loop_body
    %s26 = ssub.s32 %s21, 1
    %s27 = ssub.s32 %s21, 2
    %s28 = sadd.s32 %s21, 1
    %s29 = ssub.s32 %s21, %s28
    %p30 = scmp.eq.s32.totalorder %s29, 0
    %s32 = sadd.s32 %s31, 1
    %s33 = scalar_select %p30, %s31, %s32
    %p36 = pneg %p30
    %p37 = scmp.eq.s32.totalorder %s21, 1
    %p38 = por %p36, %p37
    %p39 = scmp.ne.s32.totalorder %s31, %s34
    %p40 = scmp.eq.s32.totalorder %s21, 0
    %p41 = por %p39, %p40
    %p42 = scmp.ne.s32.totalorder %s31, %s34
    %p43 = scmp.eq.s32.totalorder %s26, 1
    %p44 = por %p42, %p43
    %p45 = scmp.ne.s32.totalorder %s34, %s35
    %p46 = scmp.eq.s32.totalorder %s26, 0
    %p47 = por %p45, %p46
    %p48 = scmp.ne.s32.totalorder %s34, %s35
    %p49 = scmp.eq.s32.totalorder %s27, 1
    %p50 = por %p48, %p49
    %p52 = scmp.ne.s32.totalorder %s35, %s51
    %p53 = scmp.eq.s32.totalorder %s27, 0
    %p54 = por %p52, %p53
    %s56 = sadd.s32 %s55, 1
    %p59 = scmp.eq.s32.totalorder %s21, 1
    %p60 = scmp.ne.s32.totalorder %s55, %s57
    %p61 = scmp.eq.s32.totalorder %s21, 0
    %p62 = por %p60, %p61
    %p63 = scmp.ne.s32.totalorder %s55, %s57
    %p64 = scmp.eq.s32.totalorder %s26, 1
    %p65 = por %p63, %p64
    %p66 = scmp.ne.s32.totalorder %s57, %s58
    %p67 = scmp.eq.s32.totalorder %s26, 0
    %p68 = por %p66, %p67
    %p69 = scmp.ne.s32.totalorder %s57, %s58
    %p70 = scmp.eq.s32.totalorder %s27, 1
    %p71 = por %p69, %p70
    %p73 = scmp.ne.s32.totalorder %s58, %s72
    %p74 = scmp.eq.s32.totalorder %s27, 0
    %p75 = por %p73, %p74
    %s77 = sadd.s32 %s76, 1
    %p80 = scmp.eq.s32.totalorder %s21, 1
    %p81 = scmp.ne.s32.totalorder %s76, %s78
    %p82 = scmp.eq.s32.totalorder %s21, 0
    %p83 = por %p81, %p82
    %p84 = scmp.ne.s32.totalorder %s76, %s78
    %p85 = scmp.eq.s32.totalorder %s26, 1
    %p86 = por %p84, %p85
    %p87 = scmp.ne.s32.totalorder %s78, %s79
    %p88 = scmp.eq.s32.totalorder %s26, 0
    %p89 = por %p87, %p88
    %p90 = scmp.ne.s32.totalorder %s78, %s79
    %p91 = scmp.eq.s32.totalorder %s27, 1
    %p92 = por %p90, %p91
    %p94 = scmp.ne.s32.totalorder %s79, %s93
    %p95 = scmp.eq.s32.totalorder %s27, 0
    %p96 = por %p94, %p95
    %s98 = sadd.s32 %s97, 1
    %p101 = scmp.eq.s32.totalorder %s21, 1
    %p102 = scmp.ne.s32.totalorder %s97, %s99
    %p103 = scmp.eq.s32.totalorder %s21, 0
    %p104 = por %p102, %p103
    %p105 = scmp.ne.s32.totalorder %s97, %s99
    %p106 = scmp.eq.s32.totalorder %s26, 1
    %p107 = por %p105, %p106
    %p108 = scmp.ne.s32.totalorder %s99, %s100
    %p109 = scmp.eq.s32.totalorder %s26, 0
    %p110 = por %p108, %p109
    %p111 = scmp.ne.s32.totalorder %s99, %s100
    %p112 = scmp.eq.s32.totalorder %s27, 1
    %p113 = por %p111, %p112
    %p115 = scmp.ne.s32.totalorder %s100, %s114
    %p116 = scmp.eq.s32.totalorder %s27, 0
    %p117 = por %p115, %p116
    %s119 = sadd.s32 %s118, 1
    %p122 = scmp.eq.s32.totalorder %s21, 1
    %p123 = scmp.ne.s32.totalorder %s118, %s120
    %p124 = scmp.eq.s32.totalorder %s21, 0
    %p125 = por %p123, %p124
    %p126 = scmp.ne.s32.totalorder %s118, %s120
    %p127 = scmp.eq.s32.totalorder %s26, 1
    %p128 = por %p126, %p127
    %p129 = scmp.ne.s32.totalorder %s120, %s121
    %p130 = scmp.eq.s32.totalorder %s26, 0
    %p131 = por %p129, %p130
    %p132 = scmp.ne.s32.totalorder %s120, %s121
    %p133 = scmp.eq.s32.totalorder %s27, 1
    %p134 = por %p132, %p133
    %p136 = scmp.ne.s32.totalorder %s121, %s135
    %p137 = scmp.eq.s32.totalorder %s27, 0
    %p138 = por %p136, %p137
    %s140 = sadd.s32 %s139, 1
    %p143 = scmp.eq.s32.totalorder %s21, 1
    %p144 = scmp.ne.s32.totalorder %s139, %s141
    %p145 = scmp.eq.s32.totalorder %s21, 0
    %p146 = por %p144, %p145
    %p147 = scmp.ne.s32.totalorder %s139, %s141
    %p148 = scmp.eq.s32.totalorder %s26, 1
    %p149 = por %p147, %p148
    %p150 = scmp.ne.s32.totalorder %s141, %s142
    %p151 = scmp.eq.s32.totalorder %s26, 0
    %p152 = por %p150, %p151
    %p153 = scmp.ne.s32.totalorder %s141, %s142
    %p154 = scmp.eq.s32.totalorder %s27, 1
    %p155 = por %p153, %p154
    %p157 = scmp.ne.s32.totalorder %s142, %s156
    %p158 = scmp.eq.s32.totalorder %s27, 0
    %p159 = por %p157, %p158
    %s161 = sadd.s32 %s160, 1
    %p164 = scmp.eq.s32.totalorder %s21, 1
    %p165 = scmp.ne.s32.totalorder %s160, %s162
    %p166 = scmp.eq.s32.totalorder %s21, 0
    %p167 = por %p165, %p166
    %p168 = scmp.ne.s32.totalorder %s160, %s162
    %p169 = scmp.eq.s32.totalorder %s26, 1
    %p170 = por %p168, %p169
    %p171 = scmp.ne.s32.totalorder %s162, %s163
    %p172 = scmp.eq.s32.totalorder %s26, 0
    %p173 = por %p171, %p172
    %p174 = scmp.ne.s32.totalorder %s162, %s163
    %p175 = scmp.eq.s32.totalorder %s27, 1
    %p176 = por %p174, %p175
    %p178 = scmp.ne.s32.totalorder %s163, %s177
    %p179 = scmp.eq.s32.totalorder %s27, 0
    %p180 = por %p178, %p179
    %s182 = sadd.s32 %s181, 1
    %p185 = scmp.eq.s32.totalorder %s21, 1
    %p186 = scmp.ne.s32.totalorder %s181, %s183
    %p187 = scmp.eq.s32.totalorder %s21, 0
    %p188 = por %p186, %p187
    %p189 = scmp.ne.s32.totalorder %s181, %s183
    %p190 = scmp.eq.s32.totalorder %s26, 1
    %p191 = por %p189, %p190
    %p192 = scmp.ne.s32.totalorder %s183, %s184
    %p193 = scmp.eq.s32.totalorder %s26, 0
    %p194 = por %p192, %p193
    %p195 = scmp.ne.s32.totalorder %s183, %s184
    %p196 = scmp.eq.s32.totalorder %s27, 1
    %p197 = por %p195, %p196
    %p199 = scmp.ne.s32.totalorder %s184, %s198
    %p200 = scmp.eq.s32.totalorder %s27, 0
    %p201 = por %p199, %p200
    %s203 = sadd.s32 %s202, 1
    %p206 = scmp.eq.s32.totalorder %s21, 1
    %p207 = scmp.ne.s32.totalorder %s202, %s204
    %p208 = scmp.eq.s32.totalorder %s21, 0
    %p209 = por %p207, %p208
    %p210 = scmp.ne.s32.totalorder %s202, %s204
    %p211 = scmp.eq.s32.totalorder %s26, 1
    %p212 = por %p210, %p211
    %p213 = scmp.ne.s32.totalorder %s204, %s205
    %p214 = scmp.eq.s32.totalorder %s26, 0
    %p215 = por %p213, %p214
    %p216 = scmp.ne.s32.totalorder %s204, %s205
    %p217 = scmp.eq.s32.totalorder %s27, 1
    %p218 = por %p216, %p217
    %p220 = scmp.ne.s32.totalorder %s205, %s219
    %p221 = scmp.eq.s32.totalorder %s27, 0
    %p222 = por %p220, %p221
    %s224 = sadd.s32 %s223, 1
    %p227 = scmp.eq.s32.totalorder %s21, 1
    %p228 = scmp.ne.s32.totalorder %s223, %s225
    %p229 = scmp.eq.s32.totalorder %s21, 0
    %p230 = por %p228, %p229
    %p231 = scmp.ne.s32.totalorder %s223, %s225
    %p232 = scmp.eq.s32.totalorder %s26, 1
    %p233 = por %p231, %p232
    %p234 = scmp.ne.s32.totalorder %s225, %s226
    %p235 = scmp.eq.s32.totalorder %s26, 0
    %p236 = por %p234, %p235
    %p237 = scmp.ne.s32.totalorder %s225, %s226
    %p238 = scmp.eq.s32.totalorder %s27, 1
    %p239 = por %p237, %p238
    %p241 = scmp.ne.s32.totalorder %s226, %s240
    %p242 = scmp.eq.s32.totalorder %s27, 0
    %p243 = por %p241, %p242
    %s245 = sadd.s32 %s244, 1
    %p248 = scmp.eq.s32.totalorder %s21, 1
    %p249 = scmp.ne.s32.totalorder %s244, %s246
    %p250 = scmp.eq.s32.totalorder %s21, 0
    %p251 = por %p249, %p250
    %p252 = scmp.ne.s32.totalorder %s244, %s246
    %p253 = scmp.eq.s32.totalorder %s26, 1
    %p254 = por %p252, %p253
    %p255 = scmp.ne.s32.totalorder %s246, %s247
    %p256 = scmp.eq.s32.totalorder %s26, 0
    %p257 = por %p255, %p256
    %p258 = scmp.ne.s32.totalorder %s246, %s247
    %p259 = scmp.eq.s32.totalorder %s27, 1
    %p260 = por %p258, %p259
    %p262 = scmp.ne.s32.totalorder %s247, %s261
    %p263 = scmp.eq.s32.totalorder %s27, 0
    %p264 = por %p262, %p263
    %s265 = ssub.s32 %s21, %s28
    %p266 = scmp.eq.s32.totalorder %s265, 0
    %s268 = sadd.s32 %s267, 1
    %s269 = scalar_select %p266, %s267, %s268
    %p272 = pneg %p266
    %p273 = scmp.eq.s32.totalorder %s21, 1
    %p274 = por %p272, %p273
    %p275 = scmp.ne.s32.totalorder %s267, %s270
    %p276 = scmp.eq.s32.totalorder %s21, 0
    %p277 = por %p275, %p276
    %p278 = scmp.ne.s32.totalorder %s267, %s270
    %p279 = scmp.eq.s32.totalorder %s26, 1
    %p280 = por %p278, %p279
    %p281 = scmp.ne.s32.totalorder %s270, %s271
    %p282 = scmp.eq.s32.totalorder %s26, 0
    %p283 = por %p281, %p282
    %p284 = scmp.ne.s32.totalorder %s270, %s271
    %p285 = scmp.eq.s32.totalorder %s27, 1
    %p286 = por %p284, %p285
    %p288 = scmp.ne.s32.totalorder %s271, %s287
    %p289 = scmp.eq.s32.totalorder %s27, 0
    %p290 = por %p288, %p289
    %s291 = ssub.s32 %s21, %s28
    %p292 = scmp.eq.s32.totalorder %s291, 0
    %s294 = sadd.s32 %s293, 1
    %s295 = scalar_select %p292, %s293, %s294
    %p298 = pneg %p292
    %p299 = scmp.eq.s32.totalorder %s21, 1
    %p300 = por %p298, %p299
    %p301 = scmp.ne.s32.totalorder %s293, %s296
    %p302 = scmp.eq.s32.totalorder %s21, 0
    %p303 = por %p301, %p302
    %p304 = scmp.ne.s32.totalorder %s293, %s296
    %p305 = scmp.eq.s32.totalorder %s26, 1
    %p306 = por %p304, %p305
    %p307 = scmp.ne.s32.totalorder %s296, %s297
    %p308 = scmp.eq.s32.totalorder %s26, 0
    %p309 = por %p307, %p308
    %p310 = scmp.ne.s32.totalorder %s296, %s297
    %p311 = scmp.eq.s32.totalorder %s27, 1
    %p312 = por %p310, %p311
    %p314 = scmp.ne.s32.totalorder %s297, %s313
    %p315 = scmp.eq.s32.totalorder %s27, 0
    %p316 = por %p314, %p315
    %s317 = ssub.s32 %s21, %s28
    %p318 = scmp.eq.s32.totalorder %s317, 0
    %s320 = sadd.s32 %s319, 1
    %s321 = scalar_select %p318, %s319, %s320
    %p324 = pneg %p318
    %p325 = scmp.eq.s32.totalorder %s21, 1
    %p326 = por %p324, %p325
    %p327 = scmp.ne.s32.totalorder %s319, %s322
    %p328 = scmp.eq.s32.totalorder %s21, 0
    %p329 = por %p327, %p328
    %p330 = scmp.ne.s32.totalorder %s319, %s322
    %p331 = scmp.eq.s32.totalorder %s26, 1
    %p332 = por %p330, %p331
    %p333 = scmp.ne.s32.totalorder %s322, %s323
    %p334 = scmp.eq.s32.totalorder %s26, 0
    %p335 = por %p333, %p334
    %p336 = scmp.ne.s32.totalorder %s322, %s323
    %p337 = scmp.eq.s32.totalorder %s27, 1
    %p338 = por %p336, %p337
    %p340 = scmp.ne.s32.totalorder %s323, %s339
    %p341 = scmp.eq.s32.totalorder %s27, 0
    %p342 = por %p340, %p341
    %s343 = ssub.s32 %s21, %s28
    %p344 = scmp.eq.s32.totalorder %s343, 0
    %s346 = sadd.s32 %s345, 1
    %s347 = scalar_select %p344, %s345, %s346
    %p350 = pneg %p344
    %p351 = scmp.eq.s32.totalorder %s21, 1
    %p352 = por %p350, %p351
    %p353 = scmp.ne.s32.totalorder %s345, %s348
    %p354 = scmp.eq.s32.totalorder %s21, 0
    %p355 = por %p353, %p354
    %p356 = scmp.ne.s32.totalorder %s345, %s348
    %p357 = scmp.eq.s32.totalorder %s26, 1
    %p358 = por %p356, %p357
    %p359 = scmp.ne.s32.totalorder %s348, %s349
    %p360 = scmp.eq.s32.totalorder %s26, 0
    %p361 = por %p359, %p360
    %p362 = scmp.ne.s32.totalorder %s348, %s349
    %p363 = scmp.eq.s32.totalorder %s27, 1
    %p364 = por %p362, %p363
    %p366 = scmp.ne.s32.totalorder %s349, %s365
    %p367 = scmp.eq.s32.totalorder %s27, 0
    %p368 = por %p366, %p367
    %p369 = scmp.le.s32.totalorder 1, %s21
    %p370 = scmp.lt.s32.totalorder %s21, 3
    %p371 = pnand %p369, %p370
    %p372 = pneg %p371
    // Predicated region
    $region9: #{intentional_tokenizer_forward.1} parent=5 // pred_check
      _
    $region10: #{intentional_tokenizer_forward.1} parent=5 // pred_check_branch
      %374 = sbr.rel (%p371) target = $region12
    $region11: #{intentional_tokenizer_forward.1} parent=5 // pred_region
      %s375 = ssub.s32 %s21, 1
      // Predicated region
      $region13: #{intentional_tokenizer_forward.1} parent=11 // pred_check
        %p376 = pneg %p68
      $region14: #{intentional_tokenizer_forward.1} parent=11 // pred_check_branch
        %378 = sbr.rel (%p376) target = $region16
      $region15: #{intentional_tokenizer_forward.1} parent=11 // pred_region
        _
      $region16: #{intentional_tokenizer_forward.1} parent=11 // pred_fallthru
        _
      // Predicated region
      $region17: #{intentional_tokenizer_forward.1} parent=11 // pred_check
        %p379 = pneg %p89
      $region18: #{intentional_tokenizer_forward.1} parent=11 // pred_check_branch
        %381 = sbr.rel (%p379) target = $region20
      $region19: #{intentional_tokenizer_forward.1} parent=11 // pred_region
        _
      $region20: #{intentional_tokenizer_forward.1} parent=11 // pred_fallthru
        _
      // Predicated region
      $region21: #{intentional_tokenizer_forward.1} parent=11 // pred_check
        %p382 = pneg %p110
      $region22: #{intentional_tokenizer_forward.1} parent=11 // pred_check_branch
        %384 = sbr.rel (%p382) target = $region24
      $region23: #{intentional_tokenizer_forward.1} parent=11 // pred_region
        _
      $region24: #{intentional_tokenizer_forward.1} parent=11 // pred_fallthru
        _
      // Predicated region
      $region25: #{intentional_tokenizer_forward.1} parent=11 // pred_check
        %p385 = pneg %p131
      $region26: #{intentional_tokenizer_forward.1} parent=11 // pred_check_branch
        %387 = sbr.rel (%p385) target = $region28
      $region27: #{intentional_tokenizer_forward.1} parent=11 // pred_region
        _
      $region28: #{intentional_tokenizer_forward.1} parent=11 // pred_fallthru
        _
      // Predicated region
      $region29: #{intentional_tokenizer_forward.1} parent=11 // pred_check
        %p388 = pneg %p152
      $region30: #{intentional_tokenizer_forward.1} parent=11 // pred_check_branch
        %390 = sbr.rel (%p388) target = $region32
      $region31: #{intentional_tokenizer_forward.1} parent=11 // pred_region
        _
      $region32: #{intentional_tokenizer_forward.1} parent=11 // pred_fallthru
        _
      // Predicated region
      $region33: #{intentional_tokenizer_forward.1} parent=11 // pred_check
        %p391 = pneg %p173
      $region34: #{intentional_tokenizer_forward.1} parent=11 // pred_check_branch
        %393 = sbr.rel (%p391) target = $region36
      $region35: #{intentional_tokenizer_forward.1} parent=11 // pred_region
        _
      $region36: #{intentional_tokenizer_forward.1} parent=11 // pred_fallthru
        _
      // Predicated region
      $region37: #{intentional_tokenizer_forward.1} parent=11 // pred_check
        %p394 = pneg %p194
      $region38: #{intentional_tokenizer_forward.1} parent=11 // pred_check_branch
        %396 = sbr.rel (%p394) target = $region40
      $region39: #{intentional_tokenizer_forward.1} parent=11 // pred_region
        _
      $region40: #{intentional_tokenizer_forward.1} parent=11 // pred_fallthru
        _
      // Predicated region
      $region41: #{intentional_tokenizer_forward.1} parent=11 // pred_check
        %p397 = pneg %p215
      $region42: #{intentional_tokenizer_forward.1} parent=11 // pred_check_branch
        %399 = sbr.rel (%p397) target = $region44
      $region43: #{intentional_tokenizer_forward.1} parent=11 // pred_region
        _
      $region44: #{intentional_tokenizer_forward.1} parent=11 // pred_fallthru
        _
      // Predicated region
      $region45: #{intentional_tokenizer_forward.1} parent=11 // pred_check
        %p400 = pneg %p236
      $region46: #{intentional_tokenizer_forward.1} parent=11 // pred_check_branch
        %402 = sbr.rel (%p400) target = $region48
      $region47: #{intentional_tokenizer_forward.1} parent=11 // pred_region
        _
      $region48: #{intentional_tokenizer_forward.1} parent=11 // pred_fallthru
        _
      // Predicated region
      $region49: #{intentional_tokenizer_forward.1} parent=11 // pred_check
        %p403 = pneg %p257
      $region50: #{intentional_tokenizer_forward.1} parent=11 // pred_check_branch
        %405 = sbr.rel (%p403) target = $region52
      $region51: #{intentional_tokenizer_forward.1} parent=11 // pred_region
        _
      $region52: #{intentional_tokenizer_forward.1} parent=11 // pred_fallthru
        _
    $region12: #{intentional_tokenizer_forward.1} parent=5 // pred_fallthru
      _
    %p406 = scmp.lt.s32.totalorder %s21, 2
    // Predicated region
    $region53: #{intentional_tokenizer_forward.1} parent=5 // pred_check
      %p407 = pneg %p406
    $region54: #{intentional_tokenizer_forward.1} parent=5 // pred_check_branch
      %409 = sbr.rel (%p407) target = $region56
    $region55: #{intentional_tokenizer_forward.1} parent=5 // pred_region
      // Predicated region
      $region57: #{intentional_tokenizer_forward.1} parent=55 // pred_check
        %p410 = pneg %p41
      $region58: #{intentional_tokenizer_forward.1} parent=55 // pred_check_branch
        %412 = sbr.rel (%p410) target = $region60
      $region59: #{intentional_tokenizer_forward.1} parent=55 // pred_region
        %s413 = smul.u32 32, %s21
        %p414 = scmp.lt.s32.totalorder %s413, 63
        %s415 = scalar_select %p414, %s413, 63
        %s416 = smul.addr %s415, 8
        %s417 = scalar_lea.vmem %s0, %s416
        %s418 = smul.u32 32, %s21
      $region60: #{intentional_tokenizer_forward.1} parent=55 // pred_fallthru
        _
    $region56: #{intentional_tokenizer_forward.1} parent=5 // pred_fallthru
      _
    %p419 = scmp.le.s32.totalorder 1, %s21
    %p420 = scmp.lt.s32.totalorder %s21, 3
    %p421 = pnand %p419, %p420
    %p422 = pneg %p421
    // Predicated region
    $region61: #{intentional_tokenizer_forward.1} parent=5 // pred_check
      _
    $region62: #{intentional_tokenizer_forward.1} parent=5 // pred_check_branch
      %424 = sbr.rel (%p421) target = $region64
    $region63: #{intentional_tokenizer_forward.1} parent=5 // pred_region
      %s425 = ssub.s32 %s21, 1
      %s426 = smul.u32 32, %s26
      %p427 = scmp.lt.s32.totalorder %s426, 63
      %s428 = scalar_select %p427, %s426, 63
      %s429 = smul.addr %s428, 8
      %s430 = scalar_lea.vmem %s0, %s429
      %p431 = pneg %p47
      %p432 = pneg %p44
      %p433 = pneg %p68
      %p434 = pneg %p65
      %p435 = pneg %p89
      %p436 = pneg %p86
      %p437 = pneg %p110
      %p438 = pneg %p107
      %p439 = pneg %p131
      %p440 = pneg %p128
      %p441 = pneg %p152
      %p442 = pneg %p149
      %p443 = pneg %p173
      %p444 = pneg %p170
      %p445 = pneg %p194
      %p446 = pneg %p191
      %p447 = pneg %p215
      %p448 = pneg %p212
      %p449 = pneg %p236
      %p450 = pneg %p233
      %p451 = pneg %p257
      %p452 = pneg %p254
      %p453 = pneg %p283
      %p454 = pneg %p280
      %s455 = smul.u32 32, %s26
      %p456 = scmp.lt.s32.totalorder %s455, 63
      %s457 = scalar_select %p456, %s455, 63
      %s458 = smul.addr %s457, 8
      %s459 = scalar_lea.vmem %s11, %s458
      %p460 = pneg %p309
      %p461 = pneg %p306
      %s462 = smul.u32 32, %s26
      %p463 = scmp.lt.s32.totalorder %s462, 63
      %s464 = scalar_select %p463, %s462, 63
      %s465 = smul.addr %s464, 8
      %s466 = scalar_lea.vmem %s12, %s465
      %p467 = pneg %p335
      %p468 = pneg %p332
      %p469 = scmp.lt.s32.totalorder %s26, 1
      %s470 = scalar_select %p469, %s26, 1
      %s471 = smul.addr %s470, 3
      %s472 = scalar_lea.vmem %s13, %s471
      %p473 = pneg %p361
      %p474 = pneg %p358
      %p475 = scmp.lt.s32.totalorder %s26, 1
      %s476 = scalar_select %p475, %s26, 1
      %s477 = smul.addr %s476, 2
      %s478 = scalar_lea.vmem %s14, %s477
      %s479 = smul.u32 32, %s26
      %p480 = scmp.lt.s32.totalorder %s479, 63
      %s481 = scalar_select %p480, %s479, 63
      %s482 = smul.addr %s481, 8
      %s483 = scalar_lea.vmem %s0, %s482
      %s484 = smul.u32 32, %s26
      %s485 = smul.u32 32, %s26
      %p486 = scmp.lt.s32.totalorder %s485, 63
      %s487 = scalar_select %p486, %s485, 63
      %s488 = smul.addr %s487, 8
      %s489 = scalar_lea.vmem %s11, %s488
      %s490 = smul.u32 32, %s26
      %s491 = smul.u32 32, %s26
      %p492 = scmp.lt.s32.totalorder %s491, 63
      %s493 = scalar_select %p492, %s491, 63
      %s494 = smul.addr %s493, 8
      %s495 = scalar_lea.vmem %s12, %s494
      %s496 = smul.u32 32, %s26
      %p497 = scmp.lt.s32.totalorder %s26, 1
      %s498 = scalar_select %p497, %s26, 1
      %s499 = smul.addr %s498, 3
      %s500 = scalar_lea.vmem %s13, %s499
      %p501 = scmp.lt.s32.totalorder %s26, 1
      %s502 = scalar_select %p501, %s26, 1
      %s503 = smul.addr %s502, 2
      %s504 = scalar_lea.vmem %s14, %s503
      %v506 = vld [vmem:[%s483] sm:$0xff]
      %v507 = vld [vmem:[%s483 + $0x8] sm:$0xff]
      %v508 = vld [vmem:[%s483 + $0x10] sm:$0xff]
      %v509 = vld [vmem:[%s483 + $0x18] sm:$0xff]
      %v510 = vld [vmem:[%s483 + $0x20] sm:$0xff]
      %v511 = vld [vmem:[%s483 + $0x28] sm:$0xff]
      %v512 = vld [vmem:[%s483 + $0x30] sm:$0xff]
      %v513 = vld [vmem:[%s483 + $0x38] sm:$0xff]
      %v514 = vld [vmem:[%s483 + $0x40] sm:$0xff]
      %v515 = vld [vmem:[%s483 + $0x48] sm:$0xff]
      %v516 = vld [vmem:[%s483 + $0x50] sm:$0xff]
      %v517 = vld [vmem:[%s483 + $0x58] sm:$0xff]
      %v518 = vld [vmem:[%s483 + $0x60] sm:$0xff]
      %v519 = vld [vmem:[%s483 + $0x68] sm:$0xff]
      %v520 = vld [vmem:[%s483 + $0x70] sm:$0xff]
      %v521 = vld [vmem:[%s483 + $0x78] sm:$0xff]
      %v522 = vld [vmem:[%s483 + $0x80] sm:$0xff]
      %v523 = vld [vmem:[%s483 + $0x88] sm:$0xff]
      %v524 = vld [vmem:[%s483 + $0x90] sm:$0xff]
      %v525 = vld [vmem:[%s483 + $0x98] sm:$0xff]
      %v526 = vld [vmem:[%s483 + $0xa0] sm:$0xff]
      %v527 = vld [vmem:[%s483 + $0xa8] sm:$0xff]
      %v528 = vld [vmem:[%s483 + $0xb0] sm:$0xff]
      %v529 = vld [vmem:[%s483 + $0xb8] sm:$0xff]
      %v530 = vld [vmem:[%s483 + $0xc0] sm:$0xff]
      %v531 = vld [vmem:[%s483 + $0xc8] sm:$0xff]
      %v532 = vld [vmem:[%s483 + $0xd0] sm:$0xff]
      %v533 = vld [vmem:[%s483 + $0xd8] sm:$0xff]
      %v534 = vld [vmem:[%s483 + $0xe0] sm:$0xff]
      %v535 = vld [vmem:[%s483 + $0xe8] sm:$0xff]
      %v536 = vld [vmem:[%s483 + $0xf0] sm:$0xff]
      %v537 = vld [vmem:[%s483 + $0xf8] sm:$0xff]
      %v538 = vpack.c.bf16 %v507, %v506
      %v539 = vpack.c.bf16 %v509, %v508
      %v540 = vpack.c.bf16 %v511, %v510
      %v541 = vpack.c.bf16 %v513, %v512
      %v542 = vpack.c.bf16 %v515, %v514
      %v543 = vpack.c.bf16 %v517, %v516
      %v544 = vpack.c.bf16 %v519, %v518
      %v545 = vpack.c.bf16 %v521, %v520
      %v546 = vpack.c.bf16 %v523, %v522
      %v547 = vpack.c.bf16 %v525, %v524
      %v548 = vpack.c.bf16 %v527, %v526
      %v549 = vpack.c.bf16 %v529, %v528
      %v550 = vpack.c.bf16 %v531, %v530
      %v551 = vpack.c.bf16 %v533, %v532
      %v552 = vpack.c.bf16 %v535, %v534
      %v553 = vpack.c.bf16 %v537, %v536
      %v554 = vld [vmem:[%s1] sm:$0xf]
      %v555 = vld [vmem:[%s1 + $0x4] sm:$0xf]
      %v556 = vld [vmem:[%s1 + $0x8] sm:$0xf]
      %v557 = vld [vmem:[%s1 + $0xc] sm:$0xf]
      %v558 = vld [vmem:[%s2] sm:$0x1]
      %v560 = vlaneseq
      %v561 = vshrl.u32 %v560, 7
      %v562 = vsub.s32 0, %v561
      %v563 = vrot.slane %v558, %v562
      %v569 = vunpack.c.l.b16 %v554
      %v570 = vunpack.c.l.b16 %v555
      %v571 = vunpack.c.l.b16 %v556
      %v572 = vunpack.c.l.b16 %v557
      %v573 = vpack.c.b16 %v570, %v569
      %v574 = vpack.c.b16 %v572, %v571
      %vm577 = vcmask 261120
      %v579 = vsel %vm577, %v538, 0
      %v582 = vsel %vm577, %v539, 0
      %v585 = vsel %vm577, %v540, 0
      %v588 = vsel %vm577, %v541, 0
      %v591 = vsel %vm577, %v542, 0
      %v594 = vsel %vm577, %v543, 0
      %v597 = vsel %vm577, %v544, 0
      %v600 = vsel %vm577, %v545, 0
      %v603 = vsel %vm577, %v546, 0
      %v606 = vsel %vm577, %v547, 0
      %v609 = vsel %vm577, %v548, 0
      %v612 = vsel %vm577, %v549, 0
      %v615 = vsel %vm577, %v550, 0
      %v618 = vsel %vm577, %v551, 0
      %v621 = vsel %vm577, %v552, 0
      %v624 = vsel %vm577, %v553, 0
      %626 = vmatprep.subr.bf16.mxu0 0
      %627 = vmatpush1.bf16.msra.mxu0 0
      %628 = vmatprep.subr.bf16.mxu0 0
      %629 = vmatpush1.bf16.msra.mxu0 0
      %630 = vmatprep.subr.bf16.mxu0 0
      %631 = vmatpush1.bf16.msra.mxu0 0
      %632 = vmatprep.subr.bf16.mxu0 0
      %633 = vmatpush1.bf16.msra.mxu0 0
      %634 = vmatprep.subr.bf16.mxu0 0
      %635 = vmatpush1.bf16.msra.mxu0 0
      %636 = vmatprep.subr.bf16.mxu0 0
      %637 = vmatpush1.bf16.msra.mxu0 0
      %638 = vmatprep.subr.bf16.mxu0 0
      %639 = vmatpush1.bf16.msra.mxu0 %v574
      %640 = vmatprep.subr.bf16.mxu0 0
      %641 = vmatpush1.bf16.msra.mxu0 %v573
      %642 = vmatprep.subr.bf16.mxu0 0
      %643 = vmatpush2.bf16.msra.mxu0 0
      %644 = vmatprep.subr.bf16.mxu0 0
      %645 = vmatpush2.bf16.msra.mxu0 0
      %646 = vmatprep.subr.bf16.mxu0 0
      %647 = vmatpush2.bf16.msra.mxu0 0
      %648 = vmatprep.subr.bf16.mxu0 0
      %649 = vmatpush2.bf16.msra.mxu0 0
      %650 = vmatprep.subr.bf16.mxu0 0
      %651 = vmatpush2.bf16.msra.mxu0 0
      %652 = vmatprep.subr.bf16.mxu0 0
      %653 = vmatpush2.bf16.msra.mxu0 0
      %654 = vmatprep.subr.bf16.mxu0 0
      %655 = vmatpush2.bf16.msra.mxu0 0
      %656 = vmatprep.subr.bf16.mxu0 0
      %657 = vmatpush2.bf16.msra.mxu0 0
      %658 = vmatprep.mubr.bf16.mxu0 0
      %659 = vmatmul.mubr.bf16.gmra.mxu0 %v579
      %v660 = vpop.f32.mrf.mxu0
      %v661 = vadd.f32 %v563, %v660
      %v662 = vpop.f32.mrf.mxu0
      %v663 = vpop.f32.mrf.mxu0
      %v664 = vadd.f32 %v563, %v663
      %v665 = vpop.f32.mrf.mxu0
      %666 = vmatprep.mubr.bf16.mxu0 0
      %667 = vmatmul.mubr.bf16.gmra.mxu0 %v582
      %v668 = vpop.f32.mrf.mxu0
      %v669 = vadd.f32 %v563, %v668
      %v670 = vpop.f32.mrf.mxu0
      %v671 = vpop.f32.mrf.mxu0
      %v672 = vadd.f32 %v563, %v671
      %v673 = vpop.f32.mrf.mxu0
      %674 = vmatprep.mubr.bf16.mxu0 0
      %675 = vmatmul.mubr.bf16.gmra.mxu0 %v585
      %v676 = vpop.f32.mrf.mxu0
      %v677 = vadd.f32 %v563, %v676
      %v678 = vpop.f32.mrf.mxu0
      %v679 = vpop.f32.mrf.mxu0
      %v680 = vadd.f32 %v563, %v679
      %v681 = vpop.f32.mrf.mxu0
      %682 = vmatprep.mubr.bf16.mxu0 0
      %683 = vmatmul.mubr.bf16.gmra.mxu0 %v588
      %v684 = vpop.f32.mrf.mxu0
      %v685 = vadd.f32 %v563, %v684
      %v686 = vpop.f32.mrf.mxu0
      %v687 = vpop.f32.mrf.mxu0
      %v688 = vadd.f32 %v563, %v687
      %v689 = vpop.f32.mrf.mxu0
      %690 = vmatprep.mubr.bf16.mxu0 0
      %691 = vmatmul.mubr.bf16.gmra.mxu0 %v591
      %v692 = vpop.f32.mrf.mxu0
      %v693 = vadd.f32 %v563, %v692
      %v694 = vpop.f32.mrf.mxu0
      %v695 = vpop.f32.mrf.mxu0
      %v696 = vadd.f32 %v563, %v695
      %v697 = vpop.f32.mrf.mxu0
      %698 = vmatprep.mubr.bf16.mxu0 0
      %699 = vmatmul.mubr.bf16.gmra.mxu0 %v594
      %v700 = vpop.f32.mrf.mxu0
      %v701 = vadd.f32 %v563, %v700
      %v702 = vpop.f32.mrf.mxu0
      %v703 = vpop.f32.mrf.mxu0
      %v704 = vadd.f32 %v563, %v703
      %v705 = vpop.f32.mrf.mxu0
      %706 = vmatprep.mubr.bf16.mxu0 0
      %707 = vmatmul.mubr.bf16.gmra.mxu0 %v597
      %v708 = vpop.f32.mrf.mxu0
      %v709 = vadd.f32 %v563, %v708
      %v710 = vpop.f32.mrf.mxu0
      %v711 = vpop.f32.mrf.mxu0
      %v712 = vadd.f32 %v563, %v711
      %v713 = vpop.f32.mrf.mxu0
      %714 = vmatprep.mubr.bf16.mxu0 0
      %715 = vmatmul.mubr.bf16.gmra.mxu0 %v600
      %v716 = vpop.f32.mrf.mxu0
      %v717 = vadd.f32 %v563, %v716
      %v718 = vpop.f32.mrf.mxu0
      %v719 = vpop.f32.mrf.mxu0
      %v720 = vadd.f32 %v563, %v719
      %v721 = vpop.f32.mrf.mxu0
      %722 = vmatprep.mubr.bf16.mxu0 0
      %723 = vmatmul.mubr.bf16.gmra.mxu0 %v603
      %v724 = vpop.f32.mrf.mxu0
      %v725 = vadd.f32 %v563, %v724
      %v726 = vpop.f32.mrf.mxu0
      %v727 = vpop.f32.mrf.mxu0
      %v728 = vadd.f32 %v563, %v727
      %v729 = vpop.f32.mrf.mxu0
      %730 = vmatprep.mubr.bf16.mxu0 0
      %731 = vmatmul.mubr.bf16.gmra.mxu0 %v606
      %v732 = vpop.f32.mrf.mxu0
      %v733 = vadd.f32 %v563, %v732
      %v734 = vpop.f32.mrf.mxu0
      %v735 = vpop.f32.mrf.mxu0
      %v736 = vadd.f32 %v563, %v735
      %v737 = vpop.f32.mrf.mxu0
      %738 = vmatprep.mubr.bf16.mxu0 0
      %739 = vmatmul.mubr.bf16.gmra.mxu0 %v609
      %v740 = vpop.f32.mrf.mxu0
      %v741 = vadd.f32 %v563, %v740
      %v742 = vpop.f32.mrf.mxu0
      %v743 = vpop.f32.mrf.mxu0
      %v744 = vadd.f32 %v563, %v743
      %v745 = vpop.f32.mrf.mxu0
      %746 = vmatprep.mubr.bf16.mxu0 0
      %747 = vmatmul.mubr.bf16.gmra.mxu0 %v612
      %v748 = vpop.f32.mrf.mxu0
      %v749 = vadd.f32 %v563, %v748
      %v750 = vpop.f32.mrf.mxu0
      %v751 = vpop.f32.mrf.mxu0
      %v752 = vadd.f32 %v563, %v751
      %v753 = vpop.f32.mrf.mxu0
      %754 = vmatprep.mubr.bf16.mxu0 0
      %755 = vmatmul.mubr.bf16.gmra.mxu0 %v615
      %v756 = vpop.f32.mrf.mxu0
      %v757 = vadd.f32 %v563, %v756
      %v758 = vpop.f32.mrf.mxu0
      %v759 = vpop.f32.mrf.mxu0
      %v760 = vadd.f32 %v563, %v759
      %v761 = vpop.f32.mrf.mxu0
      %762 = vmatprep.mubr.bf16.mxu0 0
      %763 = vmatmul.mubr.bf16.gmra.mxu0 %v618
      %v764 = vpop.f32.mrf.mxu0
      %v765 = vadd.f32 %v563, %v764
      %v766 = vpop.f32.mrf.mxu0
      %v767 = vpop.f32.mrf.mxu0
      %v768 = vadd.f32 %v563, %v767
      %v769 = vpop.f32.mrf.mxu0
      %770 = vmatprep.mubr.bf16.mxu0 0
      %771 = vmatmul.mubr.bf16.gmra.mxu0 %v621
      %v772 = vpop.f32.mrf.mxu0
      %v773 = vadd.f32 %v563, %v772
      %v774 = vpop.f32.mrf.mxu0
      %v775 = vpop.f32.mrf.mxu0
      %v776 = vadd.f32 %v563, %v775
      %v777 = vpop.f32.mrf.mxu0
      %778 = vmatprep.mubr.bf16.mxu0 0
      %779 = vmatmul.mubr.bf16.gmra.mxu0 %v624
      %v780 = vpop.f32.mrf.mxu0
      %v781 = vadd.f32 %v563, %v780
      %v782 = vpop.f32.mrf.mxu0
      %v783 = vpop.f32.mrf.mxu0
      %v784 = vadd.f32 %v563, %v783
      %v785 = vpop.f32.mrf.mxu0
      %786 = vdwg.mxu0
      %v787 = vmul.f32 %v661, %v661
      %v788 = vmul.f32 %v664, %v664
      %v789 = vmul.f32 %v669, %v669
      %v790 = vmul.f32 %v672, %v672
      %v791 = vmul.f32 %v677, %v677
      %v792 = vmul.f32 %v680, %v680
      %v793 = vmul.f32 %v685, %v685
      %v794 = vmul.f32 %v688, %v688
      %v795 = vmul.f32 %v693, %v693
      %v796 = vmul.f32 %v696, %v696
      %v797 = vmul.f32 %v701, %v701
      %v798 = vmul.f32 %v704, %v704
      %v799 = vmul.f32 %v709, %v709
      %v800 = vmul.f32 %v712, %v712
      %v801 = vmul.f32 %v717, %v717
      %v802 = vmul.f32 %v720, %v720
      %v803 = vmul.f32 %v725, %v725
      %v804 = vmul.f32 %v728, %v728
      %v805 = vmul.f32 %v733, %v733
      %v806 = vmul.f32 %v736, %v736
      %v807 = vmul.f32 %v741, %v741
      %v808 = vmul.f32 %v744, %v744
      %v809 = vmul.f32 %v749, %v749
      %v810 = vmul.f32 %v752, %v752
      %v811 = vmul.f32 %v757, %v757
      %v812 = vmul.f32 %v760, %v760
      %v813 = vmul.f32 %v765, %v765
      %v814 = vmul.f32 %v768, %v768
      %v815 = vmul.f32 %v773, %v773
      %v816 = vmul.f32 %v776, %v776
      %v817 = vmul.f32 %v781, %v781
      %v818 = vmul.f32 %v784, %v784
      %851 = vrot.lane.b32.xlu0 %v787, 64
      %v852 = vpop.permute.xlu0 %851
      %853 = vrot.lane.b32.xlu0 %v788, 64
      %v854 = vpop.permute.xlu0 %853
      %855 = vrot.lane.b32.xlu0 %v789, 64
      %v856 = vpop.permute.xlu0 %855
      %857 = vrot.lane.b32.xlu0 %v790, 64
      %v858 = vpop.permute.xlu0 %857
      %859 = vrot.lane.b32.xlu0 %v791, 64
      %v860 = vpop.permute.xlu0 %859
      %861 = vrot.lane.b32.xlu0 %v792, 64
      %v862 = vpop.permute.xlu0 %861
      %863 = vrot.lane.b32.xlu0 %v793, 64
      %v864 = vpop.permute.xlu0 %863
      %865 = vrot.lane.b32.xlu0 %v794, 64
      %v866 = vpop.permute.xlu0 %865
      %867 = vrot.lane.b32.xlu0 %v795, 64
      %v868 = vpop.permute.xlu0 %867
      %869 = vrot.lane.b32.xlu0 %v796, 64
      %v870 = vpop.permute.xlu0 %869
      %871 = vrot.lane.b32.xlu0 %v797, 64
      %v872 = vpop.permute.xlu0 %871
      %873 = vrot.lane.b32.xlu0 %v798, 64
      %v874 = vpop.permute.xlu0 %873
      %875 = vrot.lane.b32.xlu0 %v799, 64
      %v876 = vpop.permute.xlu0 %875
      %877 = vrot.lane.b32.xlu0 %v800, 64
      %v878 = vpop.permute.xlu0 %877
      %879 = vrot.lane.b32.xlu0 %v801, 64
      %v880 = vpop.permute.xlu0 %879
      %881 = vrot.lane.b32.xlu0 %v802, 64
      %v882 = vpop.permute.xlu0 %881
      %883 = vrot.lane.b32.xlu0 %v803, 64
      %v884 = vpop.permute.xlu0 %883
      %885 = vrot.lane.b32.xlu0 %v804, 64
      %v886 = vpop.permute.xlu0 %885
      %887 = vrot.lane.b32.xlu0 %v805, 64
      %v888 = vpop.permute.xlu0 %887
      %889 = vrot.lane.b32.xlu0 %v806, 64
      %v890 = vpop.permute.xlu0 %889
      %891 = vrot.lane.b32.xlu0 %v807, 64
      %v892 = vpop.permute.xlu0 %891
      %893 = vrot.lane.b32.xlu0 %v808, 64
      %v894 = vpop.permute.xlu0 %893
      %895 = vrot.lane.b32.xlu0 %v809, 64
      %v896 = vpop.permute.xlu0 %895
      %897 = vrot.lane.b32.xlu0 %v810, 64
      %v898 = vpop.permute.xlu0 %897
      %899 = vrot.lane.b32.xlu0 %v811, 64
      %v900 = vpop.permute.xlu0 %899
      %901 = vrot.lane.b32.xlu0 %v812, 64
      %v902 = vpop.permute.xlu0 %901
      %903 = vrot.lane.b32.xlu0 %v813, 64
      %v904 = vpop.permute.xlu0 %903
      %905 = vrot.lane.b32.xlu0 %v814, 64
      %v906 = vpop.permute.xlu0 %905
      %907 = vrot.lane.b32.xlu0 %v815, 64
      %v908 = vpop.permute.xlu0 %907
      %909 = vrot.lane.b32.xlu0 %v816, 64
      %v910 = vpop.permute.xlu0 %909
      %911 = vrot.lane.b32.xlu0 %v817, 64
      %v912 = vpop.permute.xlu0 %911
      %913 = vrot.lane.b32.xlu0 %v818, 64
      %v914 = vpop.permute.xlu0 %913
      %vm947 = vcmask 523264
      %v948 = vsel %vm947, %v852, 0.0
      %949 = vadd.xlane.f32.xlu0 %v948
      %v950 = vpop.xlane.xlu0 %949
      %v951 = vsel %vm947, %v854, 0.0
      %952 = vadd.xlane.f32.xlu0 %v951
      %v953 = vpop.xlane.xlu0 %952
      %v954 = vsel %vm947, %v856, 0.0
      %955 = vadd.xlane.f32.xlu0 %v954
      %v956 = vpop.xlane.xlu0 %955
      %v957 = vsel %vm947, %v858, 0.0
      %958 = vadd.xlane.f32.xlu0 %v957
      %v959 = vpop.xlane.xlu0 %958
      %v960 = vsel %vm947, %v860, 0.0
      %961 = vadd.xlane.f32.xlu0 %v960
      %v962 = vpop.xlane.xlu0 %961
      %v963 = vsel %vm947, %v862, 0.0
      %964 = vadd.xlane.f32.xlu0 %v963
      %v965 = vpop.xlane.xlu0 %964
      %v966 = vsel %vm947, %v864, 0.0
      %967 = vadd.xlane.f32.xlu0 %v966
      %v968 = vpop.xlane.xlu0 %967
      %v969 = vsel %vm947, %v866, 0.0
      %970 = vadd.xlane.f32.xlu0 %v969
      %v971 = vpop.xlane.xlu0 %970
      %v972 = vsel %vm947, %v868, 0.0
      %973 = vadd.xlane.f32.xlu0 %v972
      %v974 = vpop.xlane.xlu0 %973
      %v975 = vsel %vm947, %v870, 0.0
      %976 = vadd.xlane.f32.xlu0 %v975
      %v977 = vpop.xlane.xlu0 %976
      %v978 = vsel %vm947, %v872, 0.0
      %979 = vadd.xlane.f32.xlu0 %v978
      %v980 = vpop.xlane.xlu0 %979
      %v981 = vsel %vm947, %v874, 0.0
      %982 = vadd.xlane.f32.xlu0 %v981
      %v983 = vpop.xlane.xlu0 %982
      %v984 = vsel %vm947, %v876, 0.0
      %985 = vadd.xlane.f32.xlu0 %v984
      %v986 = vpop.xlane.xlu0 %985
      %v987 = vsel %vm947, %v878, 0.0
      %988 = vadd.xlane.f32.xlu0 %v987
      %v989 = vpop.xlane.xlu0 %988
      %v990 = vsel %vm947, %v880, 0.0
      %991 = vadd.xlane.f32.xlu0 %v990
      %v992 = vpop.xlane.xlu0 %991
      %v993 = vsel %vm947, %v882, 0.0
      %994 = vadd.xlane.f32.xlu0 %v993
      %v995 = vpop.xlane.xlu0 %994
      %v996 = vsel %vm947, %v884, 0.0
      %997 = vadd.xlane.f32.xlu0 %v996
      %v998 = vpop.xlane.xlu0 %997
      %v999 = vsel %vm947, %v886, 0.0
      %1000 = vadd.xlane.f32.xlu0 %v999
      %v1001 = vpop.xlane.xlu0 %1000
      %v1002 = vsel %vm947, %v888, 0.0
      %1003 = vadd.xlane.f32.xlu0 %v1002
      %v1004 = vpop.xlane.xlu0 %1003
      %v1005 = vsel %vm947, %v890, 0.0
      %1006 = vadd.xlane.f32.xlu0 %v1005
      %v1007 = vpop.xlane.xlu0 %1006
      %v1008 = vsel %vm947, %v892, 0.0
      %1009 = vadd.xlane.f32.xlu0 %v1008
      %v1010 = vpop.xlane.xlu0 %1009
      %v1011 = vsel %vm947, %v894, 0.0
      %1012 = vadd.xlane.f32.xlu0 %v1011
      %v1013 = vpop.xlane.xlu0 %1012
      %v1014 = vsel %vm947, %v896, 0.0
      %1015 = vadd.xlane.f32.xlu0 %v1014
      %v1016 = vpop.xlane.xlu0 %1015
      %v1017 = vsel %vm947, %v898, 0.0
      %1018 = vadd.xlane.f32.xlu0 %v1017
      %v1019 = vpop.xlane.xlu0 %1018
      %v1020 = vsel %vm947, %v900, 0.0
      %1021 = vadd.xlane.f32.xlu0 %v1020
      %v1022 = vpop.xlane.xlu0 %1021
      %v1023 = vsel %vm947, %v902, 0.0
      %1024 = vadd.xlane.f32.xlu0 %v1023
      %v1025 = vpop.xlane.xlu0 %1024
      %v1026 = vsel %vm947, %v904, 0.0
      %1027 = vadd.xlane.f32.xlu0 %v1026
      %v1028 = vpop.xlane.xlu0 %1027
      %v1029 = vsel %vm947, %v906, 0.0
      %1030 = vadd.xlane.f32.xlu0 %v1029
      %v1031 = vpop.xlane.xlu0 %1030
      %v1032 = vsel %vm947, %v908, 0.0
      %1033 = vadd.xlane.f32.xlu0 %v1032
      %v1034 = vpop.xlane.xlu0 %1033
      %v1035 = vsel %vm947, %v910, 0.0
      %1036 = vadd.xlane.f32.xlu0 %v1035
      %v1037 = vpop.xlane.xlu0 %1036
      %v1038 = vsel %vm947, %v912, 0.0
      %1039 = vadd.xlane.f32.xlu0 %v1038
      %v1040 = vpop.xlane.xlu0 %1039
      %v1041 = vsel %vm947, %v914, 0.0
      %1042 = vadd.xlane.f32.xlu0 %v1041
      %v1043 = vpop.xlane.xlu0 %1042
      %v1044 = vmax.f32 %v950, 1e-24
      %v1045 = vmax.f32 %v953, 1e-24
      %v1046 = vmax.f32 %v956, 1e-24
      %v1047 = vmax.f32 %v959, 1e-24
      %v1048 = vmax.f32 %v962, 1e-24
      %v1049 = vmax.f32 %v965, 1e-24
      %v1050 = vmax.f32 %v968, 1e-24
      %v1051 = vmax.f32 %v971, 1e-24
      %v1052 = vmax.f32 %v974, 1e-24
      %v1053 = vmax.f32 %v977, 1e-24
      %v1054 = vmax.f32 %v980, 1e-24
      %v1055 = vmax.f32 %v983, 1e-24
      %v1056 = vmax.f32 %v986, 1e-24
      %v1057 = vmax.f32 %v989, 1e-24
      %v1058 = vmax.f32 %v992, 1e-24
      %v1059 = vmax.f32 %v995, 1e-24
      %v1060 = vmax.f32 %v998, 1e-24
      %v1061 = vmax.f32 %v1001, 1e-24
      %v1062 = vmax.f32 %v1004, 1e-24
      %v1063 = vmax.f32 %v1007, 1e-24
      %v1064 = vmax.f32 %v1010, 1e-24
      %v1065 = vmax.f32 %v1013, 1e-24
      %v1066 = vmax.f32 %v1016, 1e-24
      %v1067 = vmax.f32 %v1019, 1e-24
      %v1068 = vmax.f32 %v1022, 1e-24
      %v1069 = vmax.f32 %v1025, 1e-24
      %v1070 = vmax.f32 %v1028, 1e-24
      %v1071 = vmax.f32 %v1031, 1e-24
      %v1072 = vmax.f32 %v1034, 1e-24
      %v1073 = vmax.f32 %v1037, 1e-24
      %v1074 = vmax.f32 %v1040, 1e-24
      %v1075 = vmax.f32 %v1043, 1e-24
      %v1076 = vrsqrt.pop %v1044
      %v1077 = vrsqrt.pop %v1045
      %v1078 = vrsqrt.pop %v1046
      %v1079 = vrsqrt.pop %v1047
      %v1080 = vrsqrt.pop %v1048
      %v1081 = vrsqrt.pop %v1049
      %v1082 = vrsqrt.pop %v1050
      %v1083 = vrsqrt.pop %v1051
      %v1084 = vrsqrt.pop %v1052
      %v1085 = vrsqrt.pop %v1053
      %v1086 = vrsqrt.pop %v1054
      %v1087 = vrsqrt.pop %v1055
      %v1088 = vrsqrt.pop %v1056
      %v1089 = vrsqrt.pop %v1057
      %v1090 = vrsqrt.pop %v1058
      %v1091 = vrsqrt.pop %v1059
      %v1092 = vrsqrt.pop %v1060
      %v1093 = vrsqrt.pop %v1061
      %v1094 = vrsqrt.pop %v1062
      %v1095 = vrsqrt.pop %v1063
      %v1096 = vrsqrt.pop %v1064
      %v1097 = vrsqrt.pop %v1065
      %v1098 = vrsqrt.pop %v1066
      %v1099 = vrsqrt.pop %v1067
      %v1100 = vrsqrt.pop %v1068
      %v1101 = vrsqrt.pop %v1069
      %v1102 = vrsqrt.pop %v1070
      %v1103 = vrsqrt.pop %v1071
      %v1104 = vrsqrt.pop %v1072
      %v1105 = vrsqrt.pop %v1073
      %v1106 = vrsqrt.pop %v1074
      %v1107 = vrsqrt.pop %v1075
      %v1108 = vmul.f32 %v661, %v1076
      %v1109 = vmul.f32 %v664, %v1077
      %v1110 = vmul.f32 %v669, %v1078
      %v1111 = vmul.f32 %v672, %v1079
      %v1112 = vmul.f32 %v677, %v1080
      %v1113 = vmul.f32 %v680, %v1081
      %v1114 = vmul.f32 %v685, %v1082
      %v1115 = vmul.f32 %v688, %v1083
      %v1116 = vmul.f32 %v693, %v1084
      %v1117 = vmul.f32 %v696, %v1085
      %v1118 = vmul.f32 %v701, %v1086
      %v1119 = vmul.f32 %v704, %v1087
      %v1120 = vmul.f32 %v709, %v1088
      %v1121 = vmul.f32 %v712, %v1089
      %v1122 = vmul.f32 %v717, %v1090
      %v1123 = vmul.f32 %v720, %v1091
      %v1124 = vmul.f32 %v725, %v1092
      %v1125 = vmul.f32 %v728, %v1093
      %v1126 = vmul.f32 %v733, %v1094
      %v1127 = vmul.f32 %v736, %v1095
      %v1128 = vmul.f32 %v741, %v1096
      %v1129 = vmul.f32 %v744, %v1097
      %v1130 = vmul.f32 %v749, %v1098
      %v1131 = vmul.f32 %v752, %v1099
      %v1132 = vmul.f32 %v757, %v1100
      %v1133 = vmul.f32 %v760, %v1101
      %v1134 = vmul.f32 %v765, %v1102
      %v1135 = vmul.f32 %v768, %v1103
      %v1136 = vmul.f32 %v773, %v1104
      %v1137 = vmul.f32 %v776, %v1105
      %v1138 = vmul.f32 %v781, %v1106
      %v1139 = vmul.f32 %v784, %v1107
      %v1140 = vpack.c.bf16 %v664, %v661
      %v1141 = vpack.c.bf16 %v672, %v669
      %v1142 = vpack.c.bf16 %v680, %v677
      %v1143 = vpack.c.bf16 %v688, %v685
      %v1144 = vpack.c.bf16 %v696, %v693
      %v1145 = vpack.c.bf16 %v704, %v701
      %v1146 = vpack.c.bf16 %v712, %v709
      %v1147 = vpack.c.bf16 %v720, %v717
      %v1148 = vpack.c.bf16 %v728, %v725
      %v1149 = vpack.c.bf16 %v736, %v733
      %v1150 = vpack.c.bf16 %v744, %v741
      %v1151 = vpack.c.bf16 %v752, %v749
      %v1152 = vpack.c.bf16 %v760, %v757
      %v1153 = vpack.c.bf16 %v768, %v765
      %v1154 = vpack.c.bf16 %v776, %v773
      %v1155 = vpack.c.bf16 %v784, %v781
      %v1156 = vld [vmem:[%s3] sm:$0xf]
      %v1157 = vld [vmem:[%s3 + $0x4] sm:$0xf]
      %v1158 = vld [vmem:[%s3 + $0x8] sm:$0xf]
      %v1159 = vld [vmem:[%s3 + $0xc] sm:$0xf]
      %v1160 = vld [vmem:[%s3 + $0x10] sm:$0xf]
      %v1161 = vld [vmem:[%s3 + $0x14] sm:$0xf]
      %v1162 = vld [vmem:[%s3 + $0x18] sm:$0xf]
      %v1163 = vld [vmem:[%s3 + $0x1c] sm:$0xf]
      %v1164 = vld [vmem:[%s4] sm:$0x1]
      %v1166 = vlaneseq
      %v1167 = vshrl.u32 %v1166, 7
      %v1168 = vsub.s32 0, %v1167
      %v1169 = vrot.slane %v1164, %v1168
      %v1179 = vunpack.c.l.b16 %v1156
      %v1180 = vunpack.c.l.b16 %v1157
      %v1181 = vunpack.c.l.b16 %v1158
      %v1182 = vunpack.c.l.b16 %v1159
      %v1183 = vunpack.c.l.b16 %v1160
      %v1184 = vunpack.c.l.b16 %v1161
      %v1185 = vunpack.c.l.b16 %v1162
      %v1186 = vunpack.c.l.b16 %v1163
      %v1187 = vpack.c.b16 %v1180, %v1179
      %v1188 = vpack.c.b16 %v1182, %v1181
      %v1189 = vpack.c.b16 %v1184, %v1183
      %v1190 = vpack.c.b16 %v1186, %v1185
      %v1196 = vsel %vm947, %v1140, 0
      %v1199 = vsel %vm947, %v1141, 0
      %v1202 = vsel %vm947, %v1142, 0
      %v1205 = vsel %vm947, %v1143, 0
      %v1208 = vsel %vm947, %v1144, 0
      %v1211 = vsel %vm947, %v1145, 0
      %v1214 = vsel %vm947, %v1146, 0
      %v1217 = vsel %vm947, %v1147, 0
      %v1220 = vsel %vm947, %v1148, 0
      %v1223 = vsel %vm947, %v1149, 0
      %v1226 = vsel %vm947, %v1150, 0
      %v1229 = vsel %vm947, %v1151, 0
      %v1232 = vsel %vm947, %v1152, 0
      %v1235 = vsel %vm947, %v1153, 0
      %v1238 = vsel %vm947, %v1154, 0
      %v1241 = vsel %vm947, %v1155, 0
      %1243 = vmatprep.subr.bf16.mxu0 0
      %1244 = vmatpush1.bf16.msra.mxu0 0
      %1245 = vmatprep.subr.bf16.mxu0 0
      %1246 = vmatpush1.bf16.msra.mxu0 0
      %1247 = vmatprep.subr.bf16.mxu0 0
      %1248 = vmatpush1.bf16.msra.mxu0 0
      %1249 = vmatprep.subr.bf16.mxu0 0
      %1250 = vmatpush1.bf16.msra.mxu0 0
      %1251 = vmatprep.subr.bf16.mxu0 0
      %1252 = vmatpush1.bf16.msra.mxu0 %v1190
      %1253 = vmatprep.subr.bf16.mxu0 0
      %1254 = vmatpush1.bf16.msra.mxu0 %v1189
      %1255 = vmatprep.subr.bf16.mxu0 0
      %1256 = vmatpush1.bf16.msra.mxu0 %v1188
      %1257 = vmatprep.subr.bf16.mxu0 0
      %1258 = vmatpush1.bf16.msra.mxu0 %v1187
      %1259 = vmatprep.subr.bf16.mxu0 0
      %1260 = vmatpush2.bf16.msra.mxu0 0
      %1261 = vmatprep.subr.bf16.mxu0 0
      %1262 = vmatpush2.bf16.msra.mxu0 0
      %1263 = vmatprep.subr.bf16.mxu0 0
      %1264 = vmatpush2.bf16.msra.mxu0 0
      %1265 = vmatprep.subr.bf16.mxu0 0
      %1266 = vmatpush2.bf16.msra.mxu0 0
      %1267 = vmatprep.subr.bf16.mxu0 0
      %1268 = vmatpush2.bf16.msra.mxu0 0
      %1269 = vmatprep.subr.bf16.mxu0 0
      %1270 = vmatpush2.bf16.msra.mxu0 0
      %1271 = vmatprep.subr.bf16.mxu0 0
      %1272 = vmatpush2.bf16.msra.mxu0 0
      %1273 = vmatprep.subr.bf16.mxu0 0
      %1274 = vmatpush2.bf16.msra.mxu0 0
      %1275 = vmatprep.mubr.bf16.mxu0 0
      %1276 = vmatmul.mubr.bf16.gmra.mxu0 %v1196
      %v1277 = vpop.f32.mrf.mxu0
      %v1278 = vadd.f32 %v1169, %v1277
      %v1279 = vpop.f32.mrf.mxu0
      %v1280 = vpop.f32.mrf.mxu0
      %v1281 = vadd.f32 %v1169, %v1280
      %v1282 = vpop.f32.mrf.mxu0
      %1283 = vmatprep.mubr.bf16.mxu0 0
      %1284 = vmatmul.mubr.bf16.gmra.mxu0 %v1199
      %v1285 = vpop.f32.mrf.mxu0
      %v1286 = vadd.f32 %v1169, %v1285
      %v1287 = vpop.f32.mrf.mxu0
      %v1288 = vpop.f32.mrf.mxu0
      %v1289 = vadd.f32 %v1169, %v1288
      %v1290 = vpop.f32.mrf.mxu0
      %1291 = vmatprep.mubr.bf16.mxu0 0
      %1292 = vmatmul.mubr.bf16.gmra.mxu0 %v1202
      %v1293 = vpop.f32.mrf.mxu0
      %v1294 = vadd.f32 %v1169, %v1293
      %v1295 = vpop.f32.mrf.mxu0
      %v1296 = vpop.f32.mrf.mxu0
      %v1297 = vadd.f32 %v1169, %v1296
      %v1298 = vpop.f32.mrf.mxu0
      %1299 = vmatprep.mubr.bf16.mxu0 0
      %1300 = vmatmul.mubr.bf16.gmra.mxu0 %v1205
      %v1301 = vpop.f32.mrf.mxu0
      %v1302 = vadd.f32 %v1169, %v1301
      %v1303 = vpop.f32.mrf.mxu0
      %v1304 = vpop.f32.mrf.mxu0
      %v1305 = vadd.f32 %v1169, %v1304
      %v1306 = vpop.f32.mrf.mxu0
      %1307 = vmatprep.mubr.bf16.mxu0 0
      %1308 = vmatmul.mubr.bf16.gmra.mxu0 %v1208
      %v1309 = vpop.f32.mrf.mxu0
      %v1310 = vadd.f32 %v1169, %v1309
      %v1311 = vpop.f32.mrf.mxu0
      %v1312 = vpop.f32.mrf.mxu0
      %v1313 = vadd.f32 %v1169, %v1312
      %v1314 = vpop.f32.mrf.mxu0
      %1315 = vmatprep.mubr.bf16.mxu0 0
      %1316 = vmatmul.mubr.bf16.gmra.mxu0 %v1211
      %v1317 = vpop.f32.mrf.mxu0
      %v1318 = vadd.f32 %v1169, %v1317
      %v1319 = vpop.f32.mrf.mxu0
      %v1320 = vpop.f32.mrf.mxu0
      %v1321 = vadd.f32 %v1169, %v1320
      %v1322 = vpop.f32.mrf.mxu0
      %1323 = vmatprep.mubr.bf16.mxu0 0
      %1324 = vmatmul.mubr.bf16.gmra.mxu0 %v1214
      %v1325 = vpop.f32.mrf.mxu0
      %v1326 = vadd.f32 %v1169, %v1325
      %v1327 = vpop.f32.mrf.mxu0
      %v1328 = vpop.f32.mrf.mxu0
      %v1329 = vadd.f32 %v1169, %v1328
      %v1330 = vpop.f32.mrf.mxu0
      %1331 = vmatprep.mubr.bf16.mxu0 0
      %1332 = vmatmul.mubr.bf16.gmra.mxu0 %v1217
      %v1333 = vpop.f32.mrf.mxu0
      %v1334 = vadd.f32 %v1169, %v1333
      %v1335 = vpop.f32.mrf.mxu0
      %v1336 = vpop.f32.mrf.mxu0
      %v1337 = vadd.f32 %v1169, %v1336
      %v1338 = vpop.f32.mrf.mxu0
      %1339 = vmatprep.mubr.bf16.mxu0 0
      %1340 = vmatmul.mubr.bf16.gmra.mxu0 %v1220
      %v1341 = vpop.f32.mrf.mxu0
      %v1342 = vadd.f32 %v1169, %v1341
      %v1343 = vpop.f32.mrf.mxu0
      %v1344 = vpop.f32.mrf.mxu0
      %v1345 = vadd.f32 %v1169, %v1344
      %v1346 = vpop.f32.mrf.mxu0
      %1347 = vmatprep.mubr.bf16.mxu0 0
      %1348 = vmatmul.mubr.bf16.gmra.mxu0 %v1223
      %v1349 = vpop.f32.mrf.mxu0
      %v1350 = vadd.f32 %v1169, %v1349
      %v1351 = vpop.f32.mrf.mxu0
      %v1352 = vpop.f32.mrf.mxu0
      %v1353 = vadd.f32 %v1169, %v1352
      %v1354 = vpop.f32.mrf.mxu0
      %1355 = vmatprep.mubr.bf16.mxu0 0
      %1356 = vmatmul.mubr.bf16.gmra.mxu0 %v1226
      %v1357 = vpop.f32.mrf.mxu0
      %v1358 = vadd.f32 %v1169, %v1357
      %v1359 = vpop.f32.mrf.mxu0
      %v1360 = vpop.f32.mrf.mxu0
      %v1361 = vadd.f32 %v1169, %v1360
      %v1362 = vpop.f32.mrf.mxu0
      %1363 = vmatprep.mubr.bf16.mxu0 0
      %1364 = vmatmul.mubr.bf16.gmra.mxu0 %v1229
      %v1365 = vpop.f32.mrf.mxu0
      %v1366 = vadd.f32 %v1169, %v1365
      %v1367 = vpop.f32.mrf.mxu0
      %v1368 = vpop.f32.mrf.mxu0
      %v1369 = vadd.f32 %v1169, %v1368
      %v1370 = vpop.f32.mrf.mxu0
      %1371 = vmatprep.mubr.bf16.mxu0 0
      %1372 = vmatmul.mubr.bf16.gmra.mxu0 %v1232
      %v1373 = vpop.f32.mrf.mxu0
      %v1374 = vadd.f32 %v1169, %v1373
      %v1375 = vpop.f32.mrf.mxu0
      %v1376 = vpop.f32.mrf.mxu0
      %v1377 = vadd.f32 %v1169, %v1376
      %v1378 = vpop.f32.mrf.mxu0
      %1379 = vmatprep.mubr.bf16.mxu0 0
      %1380 = vmatmul.mubr.bf16.gmra.mxu0 %v1235
      %v1381 = vpop.f32.mrf.mxu0
      %v1382 = vadd.f32 %v1169, %v1381
      %v1383 = vpop.f32.mrf.mxu0
      %v1384 = vpop.f32.mrf.mxu0
      %v1385 = vadd.f32 %v1169, %v1384
      %v1386 = vpop.f32.mrf.mxu0
      %1387 = vmatprep.mubr.bf16.mxu0 0
      %1388 = vmatmul.mubr.bf16.gmra.mxu0 %v1238
      %v1389 = vpop.f32.mrf.mxu0
      %v1390 = vadd.f32 %v1169, %v1389
      %v1391 = vpop.f32.mrf.mxu0
      %v1392 = vpop.f32.mrf.mxu0
      %v1393 = vadd.f32 %v1169, %v1392
      %v1394 = vpop.f32.mrf.mxu0
      %1395 = vmatprep.mubr.bf16.mxu0 0
      %1396 = vmatmul.mubr.bf16.gmra.mxu0 %v1241
      %v1397 = vpop.f32.mrf.mxu0
      %v1398 = vadd.f32 %v1169, %v1397
      %v1399 = vpop.f32.mrf.mxu0
      %v1400 = vpop.f32.mrf.mxu0
      %v1401 = vadd.f32 %v1169, %v1400
      %v1402 = vpop.f32.mrf.mxu0
      %1403 = vdwg.mxu0
      %v1404 = vld [vmem:[%s6] sm:$0x3]
      %v1405 = vld [vmem:[%s5] sm:$0xff]
      %v1406 = vld [vmem:[%s5 + $0x8] sm:$0xff]
      %v1407 = vld [vmem:[%s5 + $0x10] sm:$0xff]
      %v1408 = vld [vmem:[%s5 + $0x18] sm:$0xff]
      %v1409 = vld [vmem:[%s5 + $0x20] sm:$0xff]
      %v1410 = vld [vmem:[%s5 + $0x28] sm:$0xff]
      %v1411 = vld [vmem:[%s5 + $0x30] sm:$0xff]
      %v1412 = vld [vmem:[%s5 + $0x38] sm:$0xff]
      %v1414 = vsel %vm577, %v1278, 0
      %v1417 = vsel %vm577, %v1281, 0
      %v1420 = vsel %vm577, %v1286, 0
      %v1423 = vsel %vm577, %v1289, 0
      %v1426 = vsel %vm577, %v1294, 0
      %v1429 = vsel %vm577, %v1297, 0
      %v1432 = vsel %vm577, %v1302, 0
      %v1435 = vsel %vm577, %v1305, 0
      %v1438 = vsel %vm577, %v1310, 0
      %v1441 = vsel %vm577, %v1313, 0
      %v1444 = vsel %vm577, %v1318, 0
      %v1447 = vsel %vm577, %v1321, 0
      %v1450 = vsel %vm577, %v1326, 0
      %v1453 = vsel %vm577, %v1329, 0
      %v1456 = vsel %vm577, %v1334, 0
      %v1459 = vsel %vm577, %v1337, 0
      %v1462 = vsel %vm577, %v1342, 0
      %v1465 = vsel %vm577, %v1345, 0
      %v1468 = vsel %vm577, %v1350, 0
      %v1471 = vsel %vm577, %v1353, 0
      %v1474 = vsel %vm577, %v1358, 0
      %v1477 = vsel %vm577, %v1361, 0
      %v1480 = vsel %vm577, %v1366, 0
      %v1483 = vsel %vm577, %v1369, 0
      %v1486 = vsel %vm577, %v1374, 0
      %v1489 = vsel %vm577, %v1377, 0
      %v1492 = vsel %vm577, %v1382, 0
      %v1495 = vsel %vm577, %v1385, 0
      %v1498 = vsel %vm577, %v1390, 0
      %v1501 = vsel %vm577, %v1393, 0
      %v1504 = vsel %vm577, %v1398, 0
      %v1507 = vsel %vm577, %v1401, 0
      %1509 = vmatprep.subr.mxu0 0.0
      %1510 = vmatpush1.msra.mxu0 0.0
      %1511 = vmatprep.subr.mxu0 0.0
      %1512 = vmatpush1.msra.mxu0 0.0
      %1513 = vmatprep.subr.mxu0 0.0
      %1514 = vmatpush1.msra.mxu0 0.0
      %1515 = vmatprep.subr.mxu0 0.0
      %1516 = vmatpush1.msra.mxu0 0.0
      %1517 = vmatprep.subr.mxu0 0.0
      %1518 = vmatpush1.msra.mxu0 0.0
      %1519 = vmatprep.subr.mxu0 0.0
      %1520 = vmatpush1.msra.mxu0 0.0
      %1521 = vmatprep.subr.mxu0 0.0
      %1522 = vmatpush1.msra.mxu0 0.0
      %1523 = vmatprep.subr.mxu0 0.0
      %1524 = vmatpush1.msra.mxu0 0.0
      %1525 = vmatprep.subr.mxu0 0.0
      %1526 = vmatpush1.msra.mxu0 0.0
      %1527 = vmatprep.subr.mxu0 0.0
      %1528 = vmatpush1.msra.mxu0 0.0
      %1529 = vmatprep.subr.mxu0 0.0
      %1530 = vmatpush1.msra.mxu0 0.0
      %1531 = vmatprep.subr.mxu0 0.0
      %1532 = vmatpush1.msra.mxu0 0.0
      %1533 = vmatprep.subr.mxu0 %v1412
      %1534 = vmatpush1.msra.mxu0 %v1411
      %1535 = vmatprep.subr.mxu0 %v1410
      %1536 = vmatpush1.msra.mxu0 %v1409
      %1537 = vmatprep.subr.mxu0 %v1408
      %1538 = vmatpush1.msra.mxu0 %v1407
      %1539 = vmatprep.subr.mxu0 %v1406
      %1540 = vmatpush1.msra.mxu0 %v1405
      %1541 = vmatprep.subr.mxu0 0.0
      %1542 = vmatpush2.msra.mxu0 0.0
      %1543 = vmatprep.subr.mxu0 0.0
      %1544 = vmatpush2.msra.mxu0 0.0
      %1545 = vmatprep.subr.mxu0 0.0
      %1546 = vmatpush2.msra.mxu0 0.0
      %1547 = vmatprep.subr.mxu0 0.0
      %1548 = vmatpush2.msra.mxu0 0.0
      %1549 = vmatprep.subr.mxu0 0.0
      %1550 = vmatpush2.msra.mxu0 0.0
      %1551 = vmatprep.subr.mxu0 0.0
      %1552 = vmatpush2.msra.mxu0 0.0
      %1553 = vmatprep.subr.mxu0 0.0
      %1554 = vmatpush2.msra.mxu0 0.0
      %1555 = vmatprep.subr.mxu0 0.0
      %1556 = vmatpush2.msra.mxu0 0.0
      %1557 = vmatprep.subr.mxu0 0.0
      %1558 = vmatpush2.msra.mxu0 0.0
      %1559 = vmatprep.subr.mxu0 0.0
      %1560 = vmatpush2.msra.mxu0 0.0
      %1561 = vmatprep.subr.mxu0 0.0
      %1562 = vmatpush2.msra.mxu0 0.0
      %1563 = vmatprep.subr.mxu0 0.0
      %1564 = vmatpush2.msra.mxu0 0.0
      %1565 = vmatprep.subr.mxu0 0.0
      %1566 = vmatpush2.msra.mxu0 0.0
      %1567 = vmatprep.subr.mxu0 0.0
      %1568 = vmatpush2.msra.mxu0 0.0
      %1569 = vmatprep.subr.mxu0 0.0
      %1570 = vmatpush2.msra.mxu0 0.0
      %1571 = vmatprep.subr.mxu0 0.0
      %1572 = vmatpush2.msra.mxu0 0.0
      %1573 = vmatprep.mubr.f32.mxu0 0.0
      %1574 = vmatmul.mubr.f32.gmra.mxu0 %v1414
      %v1575 = vpop.f32.mrf.mxu0
      %v1576 = vadd.f32 0.0, %v1575
      %v1577 = vpop.f32.mrf.mxu0
      %v1578 = vadd.f32 0.0, %v1577
      %1579 = vmatprep.mubr.f32.mxu0 0.0
      %1580 = vmatmul.mubr.f32.gmra.mxu0 %v1417
      %v1581 = vpop.f32.mrf.mxu0
      %v1582 = vadd.f32 0.0, %v1581
      %v1583 = vpop.f32.mrf.mxu0
      %v1584 = vadd.f32 0.0, %v1583
      %1585 = vmatprep.mubr.f32.mxu0 0.0
      %1586 = vmatmul.mubr.f32.gmra.mxu0 %v1420
      %v1587 = vpop.f32.mrf.mxu0
      %v1588 = vadd.f32 0.0, %v1587
      %v1589 = vpop.f32.mrf.mxu0
      %v1590 = vadd.f32 0.0, %v1589
      %1591 = vmatprep.mubr.f32.mxu0 0.0
      %1592 = vmatmul.mubr.f32.gmra.mxu0 %v1423
      %v1593 = vpop.f32.mrf.mxu0
      %v1594 = vadd.f32 0.0, %v1593
      %v1595 = vpop.f32.mrf.mxu0
      %v1596 = vadd.f32 0.0, %v1595
      %1597 = vmatprep.mubr.f32.mxu0 0.0
      %1598 = vmatmul.mubr.f32.gmra.mxu0 %v1426
      %v1599 = vpop.f32.mrf.mxu0
      %v1600 = vadd.f32 0.0, %v1599
      %v1601 = vpop.f32.mrf.mxu0
      %v1602 = vadd.f32 0.0, %v1601
      %1603 = vmatprep.mubr.f32.mxu0 0.0
      %1604 = vmatmul.mubr.f32.gmra.mxu0 %v1429
      %v1605 = vpop.f32.mrf.mxu0
      %v1606 = vadd.f32 0.0, %v1605
      %v1607 = vpop.f32.mrf.mxu0
      %v1608 = vadd.f32 0.0, %v1607
      %1609 = vmatprep.mubr.f32.mxu0 0.0
      %1610 = vmatmul.mubr.f32.gmra.mxu0 %v1432
      %v1611 = vpop.f32.mrf.mxu0
      %v1612 = vadd.f32 0.0, %v1611
      %v1613 = vpop.f32.mrf.mxu0
      %v1614 = vadd.f32 0.0, %v1613
      %1615 = vmatprep.mubr.f32.mxu0 0.0
      %1616 = vmatmul.mubr.f32.gmra.mxu0 %v1435
      %v1617 = vpop.f32.mrf.mxu0
      %v1618 = vadd.f32 0.0, %v1617
      %v1619 = vpop.f32.mrf.mxu0
      %v1620 = vadd.f32 0.0, %v1619
      %1621 = vmatprep.mubr.f32.mxu0 0.0
      %1622 = vmatmul.mubr.f32.gmra.mxu0 %v1438
      %v1623 = vpop.f32.mrf.mxu0
      %v1624 = vadd.f32 0.0, %v1623
      %v1625 = vpop.f32.mrf.mxu0
      %v1626 = vadd.f32 0.0, %v1625
      %1627 = vmatprep.mubr.f32.mxu0 0.0
      %1628 = vmatmul.mubr.f32.gmra.mxu0 %v1441
      %v1629 = vpop.f32.mrf.mxu0
      %v1630 = vadd.f32 0.0, %v1629
      %v1631 = vpop.f32.mrf.mxu0
      %v1632 = vadd.f32 0.0, %v1631
      %1633 = vmatprep.mubr.f32.mxu0 0.0
      %1634 = vmatmul.mubr.f32.gmra.mxu0 %v1444
      %v1635 = vpop.f32.mrf.mxu0
      %v1636 = vadd.f32 0.0, %v1635
      %v1637 = vpop.f32.mrf.mxu0
      %v1638 = vadd.f32 0.0, %v1637
      %1639 = vmatprep.mubr.f32.mxu0 0.0
      %1640 = vmatmul.mubr.f32.gmra.mxu0 %v1447
      %v1641 = vpop.f32.mrf.mxu0
      %v1642 = vadd.f32 0.0, %v1641
      %v1643 = vpop.f32.mrf.mxu0
      %v1644 = vadd.f32 0.0, %v1643
      %1645 = vmatprep.mubr.f32.mxu0 0.0
      %1646 = vmatmul.mubr.f32.gmra.mxu0 %v1450
      %v1647 = vpop.f32.mrf.mxu0
      %v1648 = vadd.f32 0.0, %v1647
      %v1649 = vpop.f32.mrf.mxu0
      %v1650 = vadd.f32 0.0, %v1649
      %1651 = vmatprep.mubr.f32.mxu0 0.0
      %1652 = vmatmul.mubr.f32.gmra.mxu0 %v1453
      %v1653 = vpop.f32.mrf.mxu0
      %v1654 = vadd.f32 0.0, %v1653
      %v1655 = vpop.f32.mrf.mxu0
      %v1656 = vadd.f32 0.0, %v1655
      %1657 = vmatprep.mubr.f32.mxu0 0.0
      %1658 = vmatmul.mubr.f32.gmra.mxu0 %v1456
      %v1659 = vpop.f32.mrf.mxu0
      %v1660 = vadd.f32 0.0, %v1659
      %v1661 = vpop.f32.mrf.mxu0
      %v1662 = vadd.f32 0.0, %v1661
      %1663 = vmatprep.mubr.f32.mxu0 0.0
      %1664 = vmatmul.mubr.f32.gmra.mxu0 %v1459
      %v1665 = vpop.f32.mrf.mxu0
      %v1666 = vadd.f32 0.0, %v1665
      %v1667 = vpop.f32.mrf.mxu0
      %v1668 = vadd.f32 0.0, %v1667
      %1669 = vmatprep.mubr.f32.mxu0 0.0
      %1670 = vmatmul.mubr.f32.gmra.mxu0 %v1462
      %v1671 = vpop.f32.mrf.mxu0
      %v1672 = vadd.f32 0.0, %v1671
      %v1673 = vpop.f32.mrf.mxu0
      %v1674 = vadd.f32 0.0, %v1673
      %1675 = vmatprep.mubr.f32.mxu0 0.0
      %1676 = vmatmul.mubr.f32.gmra.mxu0 %v1465
      %v1677 = vpop.f32.mrf.mxu0
      %v1678 = vadd.f32 0.0, %v1677
      %v1679 = vpop.f32.mrf.mxu0
      %v1680 = vadd.f32 0.0, %v1679
      %1681 = vmatprep.mubr.f32.mxu0 0.0
      %1682 = vmatmul.mubr.f32.gmra.mxu0 %v1468
      %v1683 = vpop.f32.mrf.mxu0
      %v1684 = vadd.f32 0.0, %v1683
      %v1685 = vpop.f32.mrf.mxu0
      %v1686 = vadd.f32 0.0, %v1685
      %1687 = vmatprep.mubr.f32.mxu0 0.0
      %1688 = vmatmul.mubr.f32.gmra.mxu0 %v1471
      %v1689 = vpop.f32.mrf.mxu0
      %v1690 = vadd.f32 0.0, %v1689
      %v1691 = vpop.f32.mrf.mxu0
      %v1692 = vadd.f32 0.0, %v1691
      %1693 = vmatprep.mubr.f32.mxu0 0.0
      %1694 = vmatmul.mubr.f32.gmra.mxu0 %v1474
      %v1695 = vpop.f32.mrf.mxu0
      %v1696 = vadd.f32 0.0, %v1695
      %v1697 = vpop.f32.mrf.mxu0
      %v1698 = vadd.f32 0.0, %v1697
      %1699 = vmatprep.mubr.f32.mxu0 0.0
      %1700 = vmatmul.mubr.f32.gmra.mxu0 %v1477
      %v1701 = vpop.f32.mrf.mxu0
      %v1702 = vadd.f32 0.0, %v1701
      %v1703 = vpop.f32.mrf.mxu0
      %v1704 = vadd.f32 0.0, %v1703
      %1705 = vmatprep.mubr.f32.mxu0 0.0
      %1706 = vmatmul.mubr.f32.gmra.mxu0 %v1480
      %v1707 = vpop.f32.mrf.mxu0
      %v1708 = vadd.f32 0.0, %v1707
      %v1709 = vpop.f32.mrf.mxu0
      %v1710 = vadd.f32 0.0, %v1709
      %1711 = vmatprep.mubr.f32.mxu0 0.0
      %1712 = vmatmul.mubr.f32.gmra.mxu0 %v1483
      %v1713 = vpop.f32.mrf.mxu0
      %v1714 = vadd.f32 0.0, %v1713
      %v1715 = vpop.f32.mrf.mxu0
      %v1716 = vadd.f32 0.0, %v1715
      %1717 = vmatprep.mubr.f32.mxu0 0.0
      %1718 = vmatmul.mubr.f32.gmra.mxu0 %v1486
      %v1719 = vpop.f32.mrf.mxu0
      %v1720 = vadd.f32 0.0, %v1719
      %v1721 = vpop.f32.mrf.mxu0
      %v1722 = vadd.f32 0.0, %v1721
      %1723 = vmatprep.mubr.f32.mxu0 0.0
      %1724 = vmatmul.mubr.f32.gmra.mxu0 %v1489
      %v1725 = vpop.f32.mrf.mxu0
      %v1726 = vadd.f32 0.0, %v1725
      %v1727 = vpop.f32.mrf.mxu0
      %v1728 = vadd.f32 0.0, %v1727
      %1729 = vmatprep.mubr.f32.mxu0 0.0
      %1730 = vmatmul.mubr.f32.gmra.mxu0 %v1492
      %v1731 = vpop.f32.mrf.mxu0
      %v1732 = vadd.f32 0.0, %v1731
      %v1733 = vpop.f32.mrf.mxu0
      %v1734 = vadd.f32 0.0, %v1733
      %1735 = vmatprep.mubr.f32.mxu0 0.0
      %1736 = vmatmul.mubr.f32.gmra.mxu0 %v1495
      %v1737 = vpop.f32.mrf.mxu0
      %v1738 = vadd.f32 0.0, %v1737
      %v1739 = vpop.f32.mrf.mxu0
      %v1740 = vadd.f32 0.0, %v1739
      %1741 = vmatprep.mubr.f32.mxu0 0.0
      %1742 = vmatmul.mubr.f32.gmra.mxu0 %v1498
      %v1743 = vpop.f32.mrf.mxu0
      %v1744 = vadd.f32 0.0, %v1743
      %v1745 = vpop.f32.mrf.mxu0
      %v1746 = vadd.f32 0.0, %v1745
      %1747 = vmatprep.mubr.f32.mxu0 0.0
      %1748 = vmatmul.mubr.f32.gmra.mxu0 %v1501
      %v1749 = vpop.f32.mrf.mxu0
      %v1750 = vadd.f32 0.0, %v1749
      %v1751 = vpop.f32.mrf.mxu0
      %v1752 = vadd.f32 0.0, %v1751
      %1753 = vmatprep.mubr.f32.mxu0 0.0
      %1754 = vmatmul.mubr.f32.gmra.mxu0 %v1504
      %v1755 = vpop.f32.mrf.mxu0
      %v1756 = vadd.f32 0.0, %v1755
      %v1757 = vpop.f32.mrf.mxu0
      %v1758 = vadd.f32 0.0, %v1757
      %1759 = vmatprep.mubr.f32.mxu0 0.0
      %1760 = vmatmul.mubr.f32.gmra.mxu0 %v1507
      %v1761 = vpop.f32.mrf.mxu0
      %v1762 = vadd.f32 0.0, %v1761
      %v1763 = vpop.f32.mrf.mxu0
      %v1764 = vadd.f32 0.0, %v1763
      %1765 = vdwg.mxu0
      %v1766 = vmul.f32 %v1576, 2.0
      %v1767 = vmul.f32 %v1578, 2.0
      %v1768 = vmul.f32 %v1582, 2.0
      %v1769 = vmul.f32 %v1584, 2.0
      %v1770 = vmul.f32 %v1588, 2.0
      %v1771 = vmul.f32 %v1590, 2.0
      %v1772 = vmul.f32 %v1594, 2.0
      %v1773 = vmul.f32 %v1596, 2.0
      %v1774 = vmul.f32 %v1600, 2.0
      %v1775 = vmul.f32 %v1602, 2.0
      %v1776 = vmul.f32 %v1606, 2.0
      %v1777 = vmul.f32 %v1608, 2.0
      %v1778 = vmul.f32 %v1612, 2.0
      %v1779 = vmul.f32 %v1614, 2.0
      %v1780 = vmul.f32 %v1618, 2.0
      %v1781 = vmul.f32 %v1620, 2.0
      %v1782 = vmul.f32 %v1624, 2.0
      %v1783 = vmul.f32 %v1626, 2.0
      %v1784 = vmul.f32 %v1630, 2.0
      %v1785 = vmul.f32 %v1632, 2.0
      %v1786 = vmul.f32 %v1636, 2.0
      %v1787 = vmul.f32 %v1638, 2.0
      %v1788 = vmul.f32 %v1642, 2.0
      %v1789 = vmul.f32 %v1644, 2.0
      %v1790 = vmul.f32 %v1648, 2.0
      %v1791 = vmul.f32 %v1650, 2.0
      %v1792 = vmul.f32 %v1654, 2.0
      %v1793 = vmul.f32 %v1656, 2.0
      %v1794 = vmul.f32 %v1660, 2.0
      %v1795 = vmul.f32 %v1662, 2.0
      %v1796 = vmul.f32 %v1666, 2.0
      %v1797 = vmul.f32 %v1668, 2.0
      %v1798 = vmul.f32 %v1672, 2.0
      %v1799 = vmul.f32 %v1674, 2.0
      %v1800 = vmul.f32 %v1678, 2.0
      %v1801 = vmul.f32 %v1680, 2.0
      %v1802 = vmul.f32 %v1684, 2.0
      %v1803 = vmul.f32 %v1686, 2.0
      %v1804 = vmul.f32 %v1690, 2.0
      %v1805 = vmul.f32 %v1692, 2.0
      %v1806 = vmul.f32 %v1696, 2.0
      %v1807 = vmul.f32 %v1698, 2.0
      %v1808 = vmul.f32 %v1702, 2.0
      %v1809 = vmul.f32 %v1704, 2.0
      %v1810 = vmul.f32 %v1708, 2.0
      %v1811 = vmul.f32 %v1710, 2.0
      %v1812 = vmul.f32 %v1714, 2.0
      %v1813 = vmul.f32 %v1716, 2.0
      %v1814 = vmul.f32 %v1720, 2.0
      %v1815 = vmul.f32 %v1722, 2.0
      %v1816 = vmul.f32 %v1726, 2.0
      %v1817 = vmul.f32 %v1728, 2.0
      %v1818 = vmul.f32 %v1732, 2.0
      %v1819 = vmul.f32 %v1734, 2.0
      %v1820 = vmul.f32 %v1738, 2.0
      %v1821 = vmul.f32 %v1740, 2.0
      %v1822 = vmul.f32 %v1744, 2.0
      %v1823 = vmul.f32 %v1746, 2.0
      %v1824 = vmul.f32 %v1750, 2.0
      %v1825 = vmul.f32 %v1752, 2.0
      %v1826 = vmul.f32 %v1756, 2.0
      %v1827 = vmul.f32 %v1758, 2.0
      %v1828 = vmul.f32 %v1762, 2.0
      %v1829 = vmul.f32 %v1764, 2.0
      %v1831 = vlaneseq
      %v1832 = vshrl.u32 %v1831, 7
      %v1833 = vsub.s32 0, %v1832
      %v1834 = vrot.slane %v1404, %v1833
      %v1835 = vlaneseq
      %v1836 = vshrl.u32 %v1835, 7
      %v1837 = vsub.s32 1, %v1836
      %v1838 = vrot.slane %v1404, %v1837
      %v1841 = vsub.f32 %v1834, %v1766
      %v1842 = vsub.f32 %v1838, %v1767
      %v1843 = vsub.f32 %v1834, %v1768
      %v1844 = vsub.f32 %v1838, %v1769
      %v1845 = vsub.f32 %v1834, %v1770
      %v1846 = vsub.f32 %v1838, %v1771
      %v1847 = vsub.f32 %v1834, %v1772
      %v1848 = vsub.f32 %v1838, %v1773
      %v1849 = vsub.f32 %v1834, %v1774
      %v1850 = vsub.f32 %v1838, %v1775
      %v1851 = vsub.f32 %v1834, %v1776
      %v1852 = vsub.f32 %v1838, %v1777
      %v1853 = vsub.f32 %v1834, %v1778
      %v1854 = vsub.f32 %v1838, %v1779
      %v1855 = vsub.f32 %v1834, %v1780
      %v1856 = vsub.f32 %v1838, %v1781
      %v1857 = vsub.f32 %v1834, %v1782
      %v1858 = vsub.f32 %v1838, %v1783
      %v1859 = vsub.f32 %v1834, %v1784
      %v1860 = vsub.f32 %v1838, %v1785
      %v1861 = vsub.f32 %v1834, %v1786
      %v1862 = vsub.f32 %v1838, %v1787
      %v1863 = vsub.f32 %v1834, %v1788
      %v1864 = vsub.f32 %v1838, %v1789
      %v1865 = vsub.f32 %v1834, %v1790
      %v1866 = vsub.f32 %v1838, %v1791
      %v1867 = vsub.f32 %v1834, %v1792
      %v1868 = vsub.f32 %v1838, %v1793
      %v1869 = vsub.f32 %v1834, %v1794
      %v1870 = vsub.f32 %v1838, %v1795
      %v1871 = vsub.f32 %v1834, %v1796
      %v1872 = vsub.f32 %v1838, %v1797
      %v1873 = vsub.f32 %v1834, %v1798
      %v1874 = vsub.f32 %v1838, %v1799
      %v1875 = vsub.f32 %v1834, %v1800
      %v1876 = vsub.f32 %v1838, %v1801
      %v1877 = vsub.f32 %v1834, %v1802
      %v1878 = vsub.f32 %v1838, %v1803
      %v1879 = vsub.f32 %v1834, %v1804
      %v1880 = vsub.f32 %v1838, %v1805
      %v1881 = vsub.f32 %v1834, %v1806
      %v1882 = vsub.f32 %v1838, %v1807
      %v1883 = vsub.f32 %v1834, %v1808
      %v1884 = vsub.f32 %v1838, %v1809
      %v1885 = vsub.f32 %v1834, %v1810
      %v1886 = vsub.f32 %v1838, %v1811
      %v1887 = vsub.f32 %v1834, %v1812
      %v1888 = vsub.f32 %v1838, %v1813
      %v1889 = vsub.f32 %v1834, %v1814
      %v1890 = vsub.f32 %v1838, %v1815
      %v1891 = vsub.f32 %v1834, %v1816
      %v1892 = vsub.f32 %v1838, %v1817
      %v1893 = vsub.f32 %v1834, %v1818
      %v1894 = vsub.f32 %v1838, %v1819
      %v1895 = vsub.f32 %v1834, %v1820
      %v1896 = vsub.f32 %v1838, %v1821
      %v1897 = vsub.f32 %v1834, %v1822
      %v1898 = vsub.f32 %v1838, %v1823
      %v1899 = vsub.f32 %v1834, %v1824
      %v1900 = vsub.f32 %v1838, %v1825
      %v1901 = vsub.f32 %v1834, %v1826
      %v1902 = vsub.f32 %v1838, %v1827
      %v1903 = vsub.f32 %v1834, %v1828
      %v1904 = vsub.f32 %v1838, %v1829
      %v1905 = vlaneseq
      %v1906 = vand.u32 %v1905, 127
      %1907 = vmin.xlane.f32.xlu0 %v1841
      %v1908 = vpop.xlane.xlu0 %1907
      %1909 = vmin.xlane.f32.xlu0 %v1843
      %v1910 = vpop.xlane.xlu0 %1909
      %1911 = vmin.xlane.f32.xlu0 %v1845
      %v1912 = vpop.xlane.xlu0 %1911
      %1913 = vmin.xlane.f32.xlu0 %v1847
      %v1914 = vpop.xlane.xlu0 %1913
      %1915 = vmin.xlane.f32.xlu0 %v1849
      %v1916 = vpop.xlane.xlu0 %1915
      %1917 = vmin.xlane.f32.xlu0 %v1851
      %v1918 = vpop.xlane.xlu0 %1917
      %1919 = vmin.xlane.f32.xlu0 %v1853
      %v1920 = vpop.xlane.xlu0 %1919
      %1921 = vmin.xlane.f32.xlu0 %v1855
      %v1922 = vpop.xlane.xlu0 %1921
      %1923 = vmin.xlane.f32.xlu0 %v1857
      %v1924 = vpop.xlane.xlu0 %1923
      %1925 = vmin.xlane.f32.xlu0 %v1859
      %v1926 = vpop.xlane.xlu0 %1925
      %1927 = vmin.xlane.f32.xlu0 %v1861
      %v1928 = vpop.xlane.xlu0 %1927
      %1929 = vmin.xlane.f32.xlu0 %v1863
      %v1930 = vpop.xlane.xlu0 %1929
      %1931 = vmin.xlane.f32.xlu0 %v1865
      %v1932 = vpop.xlane.xlu0 %1931
      %1933 = vmin.xlane.f32.xlu0 %v1867
      %v1934 = vpop.xlane.xlu0 %1933
      %1935 = vmin.xlane.f32.xlu0 %v1869
      %v1936 = vpop.xlane.xlu0 %1935
      %1937 = vmin.xlane.f32.xlu0 %v1871
      %v1938 = vpop.xlane.xlu0 %1937
      %1939 = vmin.xlane.f32.xlu0 %v1873
      %v1940 = vpop.xlane.xlu0 %1939
      %1941 = vmin.xlane.f32.xlu0 %v1875
      %v1942 = vpop.xlane.xlu0 %1941
      %1943 = vmin.xlane.f32.xlu0 %v1877
      %v1944 = vpop.xlane.xlu0 %1943
      %1945 = vmin.xlane.f32.xlu0 %v1879
      %v1946 = vpop.xlane.xlu0 %1945
      %1947 = vmin.xlane.f32.xlu0 %v1881
      %v1948 = vpop.xlane.xlu0 %1947
      %1949 = vmin.xlane.f32.xlu0 %v1883
      %v1950 = vpop.xlane.xlu0 %1949
      %1951 = vmin.xlane.f32.xlu0 %v1885
      %v1952 = vpop.xlane.xlu0 %1951
      %1953 = vmin.xlane.f32.xlu0 %v1887
      %v1954 = vpop.xlane.xlu0 %1953
      %1955 = vmin.xlane.f32.xlu0 %v1889
      %v1956 = vpop.xlane.xlu0 %1955
      %1957 = vmin.xlane.f32.xlu0 %v1891
      %v1958 = vpop.xlane.xlu0 %1957
      %1959 = vmin.xlane.f32.xlu0 %v1893
      %v1960 = vpop.xlane.xlu0 %1959
      %1961 = vmin.xlane.f32.xlu0 %v1895
      %v1962 = vpop.xlane.xlu0 %1961
      %1963 = vmin.xlane.f32.xlu0 %v1897
      %v1964 = vpop.xlane.xlu0 %1963
      %1965 = vmin.xlane.f32.xlu0 %v1899
      %v1966 = vpop.xlane.xlu0 %1965
      %1967 = vmin.xlane.f32.xlu0 %v1901
      %v1968 = vpop.xlane.xlu0 %1967
      %1969 = vmin.xlane.f32.xlu0 %v1903
      %v1970 = vpop.xlane.xlu0 %1969
      %vm1971 = vcmp.le.f32.partialorder %v1841, %v1908
      %vm1972 = vcmp.le.f32.partialorder %v1843, %v1910
      %vm1973 = vcmp.le.f32.partialorder %v1845, %v1912
      %vm1974 = vcmp.le.f32.partialorder %v1847, %v1914
      %vm1975 = vcmp.le.f32.partialorder %v1849, %v1916
      %vm1976 = vcmp.le.f32.partialorder %v1851, %v1918
      %vm1977 = vcmp.le.f32.partialorder %v1853, %v1920
      %vm1978 = vcmp.le.f32.partialorder %v1855, %v1922
      %vm1979 = vcmp.le.f32.partialorder %v1857, %v1924
      %vm1980 = vcmp.le.f32.partialorder %v1859, %v1926
      %vm1981 = vcmp.le.f32.partialorder %v1861, %v1928
      %vm1982 = vcmp.le.f32.partialorder %v1863, %v1930
      %vm1983 = vcmp.le.f32.partialorder %v1865, %v1932
      %vm1984 = vcmp.le.f32.partialorder %v1867, %v1934
      %vm1985 = vcmp.le.f32.partialorder %v1869, %v1936
      %vm1986 = vcmp.le.f32.partialorder %v1871, %v1938
      %vm1987 = vcmp.le.f32.partialorder %v1873, %v1940
      %vm1988 = vcmp.le.f32.partialorder %v1875, %v1942
      %vm1989 = vcmp.le.f32.partialorder %v1877, %v1944
      %vm1990 = vcmp.le.f32.partialorder %v1879, %v1946
      %vm1991 = vcmp.le.f32.partialorder %v1881, %v1948
      %vm1992 = vcmp.le.f32.partialorder %v1883, %v1950
      %vm1993 = vcmp.le.f32.partialorder %v1885, %v1952
      %vm1994 = vcmp.le.f32.partialorder %v1887, %v1954
      %vm1995 = vcmp.le.f32.partialorder %v1889, %v1956
      %vm1996 = vcmp.le.f32.partialorder %v1891, %v1958
      %vm1997 = vcmp.le.f32.partialorder %v1893, %v1960
      %vm1998 = vcmp.le.f32.partialorder %v1895, %v1962
      %vm1999 = vcmp.le.f32.partialorder %v1897, %v1964
      %vm2000 = vcmp.le.f32.partialorder %v1899, %v1966
      %vm2001 = vcmp.le.f32.partialorder %v1901, %v1968
      %vm2002 = vcmp.le.f32.partialorder %v1903, %v1970
      %v2003 = vsel %vm1971, %v1906, 128
      %v2004 = vsel %vm1972, %v1906, 128
      %v2005 = vsel %vm1973, %v1906, 128
      %v2006 = vsel %vm1974, %v1906, 128
      %v2007 = vsel %vm1975, %v1906, 128
      %v2008 = vsel %vm1976, %v1906, 128
      %v2009 = vsel %vm1977, %v1906, 128
      %v2010 = vsel %vm1978, %v1906, 128
      %v2011 = vsel %vm1979, %v1906, 128
      %v2012 = vsel %vm1980, %v1906, 128
      %v2013 = vsel %vm1981, %v1906, 128
      %v2014 = vsel %vm1982, %v1906, 128
      %v2015 = vsel %vm1983, %v1906, 128
      %v2016 = vsel %vm1984, %v1906, 128
      %v2017 = vsel %vm1985, %v1906, 128
      %v2018 = vsel %vm1986, %v1906, 128
      %v2019 = vsel %vm1987, %v1906, 128
      %v2020 = vsel %vm1988, %v1906, 128
      %v2021 = vsel %vm1989, %v1906, 128
      %v2022 = vsel %vm1990, %v1906, 128
      %v2023 = vsel %vm1991, %v1906, 128
      %v2024 = vsel %vm1992, %v1906, 128
      %v2025 = vsel %vm1993, %v1906, 128
      %v2026 = vsel %vm1994, %v1906, 128
      %v2027 = vsel %vm1995, %v1906, 128
      %v2028 = vsel %vm1996, %v1906, 128
      %v2029 = vsel %vm1997, %v1906, 128
      %v2030 = vsel %vm1998, %v1906, 128
      %v2031 = vsel %vm1999, %v1906, 128
      %v2032 = vsel %vm2000, %v1906, 128
      %v2033 = vsel %vm2001, %v1906, 128
      %v2034 = vsel %vm2002, %v1906, 128
      %v2035 = vand.u32 %v2003, 65535
      %v2036 = vshra.s32 %v2003, 16
      %v2037 = vcvt.s32.f32 %v2035
      %v2038 = vcvt.s32.f32 %v2036
      %2039 = vmin.xlane.f32.xlu0 %v2038
      %v2040 = vpop.xlane.xlu0 %2039
      %vm2041 = vcmp.eq.f32.partialorder %v2038, %v2040
      %v2042 = vsel %vm2041, %v2037, inf
      %2043 = vmin.xlane.f32.xlu0 %v2042
      %v2044 = vpop.xlane.xlu0 %2043
      %v2045 = vcvt.f32.s32 %v2044
      %v2046 = vcvt.f32.s32 %v2040
      %v2047 = vshll.u32 %v2046, 16
      %v2048 = vadd.s32 %v2047, %v2045
      %v2049 = vand.u32 %v2004, 65535
      %v2050 = vshra.s32 %v2004, 16
      %v2051 = vcvt.s32.f32 %v2049
      %v2052 = vcvt.s32.f32 %v2050
      %2053 = vmin.xlane.f32.xlu0 %v2052
      %v2054 = vpop.xlane.xlu0 %2053
      %vm2055 = vcmp.eq.f32.partialorder %v2052, %v2054
      %v2056 = vsel %vm2055, %v2051, inf
      %2057 = vmin.xlane.f32.xlu0 %v2056
      %v2058 = vpop.xlane.xlu0 %2057
      %v2059 = vcvt.f32.s32 %v2058
      %v2060 = vcvt.f32.s32 %v2054
      %v2061 = vshll.u32 %v2060, 16
      %v2062 = vadd.s32 %v2061, %v2059
      %v2063 = vand.u32 %v2005, 65535
      %v2064 = vshra.s32 %v2005, 16
      %v2065 = vcvt.s32.f32 %v2063
      %v2066 = vcvt.s32.f32 %v2064
      %2067 = vmin.xlane.f32.xlu0 %v2066
      %v2068 = vpop.xlane.xlu0 %2067
      %vm2069 = vcmp.eq.f32.partialorder %v2066, %v2068
      %v2070 = vsel %vm2069, %v2065, inf
      %2071 = vmin.xlane.f32.xlu0 %v2070
      %v2072 = vpop.xlane.xlu0 %2071
      %v2073 = vcvt.f32.s32 %v2072
      %v2074 = vcvt.f32.s32 %v2068
      %v2075 = vshll.u32 %v2074, 16
      %v2076 = vadd.s32 %v2075, %v2073
      %v2077 = vand.u32 %v2006, 65535
      %v2078 = vshra.s32 %v2006, 16
      %v2079 = vcvt.s32.f32 %v2077
      %v2080 = vcvt.s32.f32 %v2078
      %2081 = vmin.xlane.f32.xlu0 %v2080
      %v2082 = vpop.xlane.xlu0 %2081
      %vm2083 = vcmp.eq.f32.partialorder %v2080, %v2082
      %v2084 = vsel %vm2083, %v2079, inf
      %2085 = vmin.xlane.f32.xlu0 %v2084
      %v2086 = vpop.xlane.xlu0 %2085
      %v2087 = vcvt.f32.s32 %v2086
      %v2088 = vcvt.f32.s32 %v2082
      %v2089 = vshll.u32 %v2088, 16
      %v2090 = vadd.s32 %v2089, %v2087
      %v2091 = vand.u32 %v2007, 65535
      %v2092 = vshra.s32 %v2007, 16
      %v2093 = vcvt.s32.f32 %v2091
      %v2094 = vcvt.s32.f32 %v2092
      %2095 = vmin.xlane.f32.xlu0 %v2094
      %v2096 = vpop.xlane.xlu0 %2095
      %vm2097 = vcmp.eq.f32.partialorder %v2094, %v2096
      %v2098 = vsel %vm2097, %v2093, inf
      %2099 = vmin.xlane.f32.xlu0 %v2098
      %v2100 = vpop.xlane.xlu0 %2099
      %v2101 = vcvt.f32.s32 %v2100
      %v2102 = vcvt.f32.s32 %v2096
      %v2103 = vshll.u32 %v2102, 16
      %v2104 = vadd.s32 %v2103, %v2101
      %v2105 = vand.u32 %v2008, 65535
      %v2106 = vshra.s32 %v2008, 16
      %v2107 = vcvt.s32.f32 %v2105
      %v2108 = vcvt.s32.f32 %v2106
      %2109 = vmin.xlane.f32.xlu0 %v2108
      %v2110 = vpop.xlane.xlu0 %2109
      %vm2111 = vcmp.eq.f32.partialorder %v2108, %v2110
      %v2112 = vsel %vm2111, %v2107, inf
      %2113 = vmin.xlane.f32.xlu0 %v2112
      %v2114 = vpop.xlane.xlu0 %2113
      %v2115 = vcvt.f32.s32 %v2114
      %v2116 = vcvt.f32.s32 %v2110
      %v2117 = vshll.u32 %v2116, 16
      %v2118 = vadd.s32 %v2117, %v2115
      %v2119 = vand.u32 %v2009, 65535
      %v2120 = vshra.s32 %v2009, 16
      %v2121 = vcvt.s32.f32 %v2119
      %v2122 = vcvt.s32.f32 %v2120
      %2123 = vmin.xlane.f32.xlu0 %v2122
      %v2124 = vpop.xlane.xlu0 %2123
      %vm2125 = vcmp.eq.f32.partialorder %v2122, %v2124
      %v2126 = vsel %vm2125, %v2121, inf
      %2127 = vmin.xlane.f32.xlu0 %v2126
      %v2128 = vpop.xlane.xlu0 %2127
      %v2129 = vcvt.f32.s32 %v2128
      %v2130 = vcvt.f32.s32 %v2124
      %v2131 = vshll.u32 %v2130, 16
      %v2132 = vadd.s32 %v2131, %v2129
      %v2133 = vand.u32 %v2010, 65535
      %v2134 = vshra.s32 %v2010, 16
      %v2135 = vcvt.s32.f32 %v2133
      %v2136 = vcvt.s32.f32 %v2134
      %2137 = vmin.xlane.f32.xlu0 %v2136
      %v2138 = vpop.xlane.xlu0 %2137
      %vm2139 = vcmp.eq.f32.partialorder %v2136, %v2138
      %v2140 = vsel %vm2139, %v2135, inf
      %2141 = vmin.xlane.f32.xlu0 %v2140
      %v2142 = vpop.xlane.xlu0 %2141
      %v2143 = vcvt.f32.s32 %v2142
      %v2144 = vcvt.f32.s32 %v2138
      %v2145 = vshll.u32 %v2144, 16
      %v2146 = vadd.s32 %v2145, %v2143
      %v2147 = vand.u32 %v2011, 65535
      %v2148 = vshra.s32 %v2011, 16
      %v2149 = vcvt.s32.f32 %v2147
      %v2150 = vcvt.s32.f32 %v2148
      %2151 = vmin.xlane.f32.xlu0 %v2150
      %v2152 = vpop.xlane.xlu0 %2151
      %vm2153 = vcmp.eq.f32.partialorder %v2150, %v2152
      %v2154 = vsel %vm2153, %v2149, inf
      %2155 = vmin.xlane.f32.xlu0 %v2154
      %v2156 = vpop.xlane.xlu0 %2155
      %v2157 = vcvt.f32.s32 %v2156
      %v2158 = vcvt.f32.s32 %v2152
      %v2159 = vshll.u32 %v2158, 16
      %v2160 = vadd.s32 %v2159, %v2157
      %v2161 = vand.u32 %v2012, 65535
      %v2162 = vshra.s32 %v2012, 16
      %v2163 = vcvt.s32.f32 %v2161
      %v2164 = vcvt.s32.f32 %v2162
      %2165 = vmin.xlane.f32.xlu0 %v2164
      %v2166 = vpop.xlane.xlu0 %2165
      %vm2167 = vcmp.eq.f32.partialorder %v2164, %v2166
      %v2168 = vsel %vm2167, %v2163, inf
      %2169 = vmin.xlane.f32.xlu0 %v2168
      %v2170 = vpop.xlane.xlu0 %2169
      %v2171 = vcvt.f32.s32 %v2170
      %v2172 = vcvt.f32.s32 %v2166
      %v2173 = vshll.u32 %v2172, 16
      %v2174 = vadd.s32 %v2173, %v2171
      %v2175 = vand.u32 %v2013, 65535
      %v2176 = vshra.s32 %v2013, 16
      %v2177 = vcvt.s32.f32 %v2175
      %v2178 = vcvt.s32.f32 %v2176
      %2179 = vmin.xlane.f32.xlu0 %v2178
      %v2180 = vpop.xlane.xlu0 %2179
      %vm2181 = vcmp.eq.f32.partialorder %v2178, %v2180
      %v2182 = vsel %vm2181, %v2177, inf
      %2183 = vmin.xlane.f32.xlu0 %v2182
      %v2184 = vpop.xlane.xlu0 %2183
      %v2185 = vcvt.f32.s32 %v2184
      %v2186 = vcvt.f32.s32 %v2180
      %v2187 = vshll.u32 %v2186, 16
      %v2188 = vadd.s32 %v2187, %v2185
      %v2189 = vand.u32 %v2014, 65535
      %v2190 = vshra.s32 %v2014, 16
      %v2191 = vcvt.s32.f32 %v2189
      %v2192 = vcvt.s32.f32 %v2190
      %2193 = vmin.xlane.f32.xlu0 %v2192
      %v2194 = vpop.xlane.xlu0 %2193
      %vm2195 = vcmp.eq.f32.partialorder %v2192, %v2194
      %v2196 = vsel %vm2195, %v2191, inf
      %2197 = vmin.xlane.f32.xlu0 %v2196
      %v2198 = vpop.xlane.xlu0 %2197
      %v2199 = vcvt.f32.s32 %v2198
      %v2200 = vcvt.f32.s32 %v2194
      %v2201 = vshll.u32 %v2200, 16
      %v2202 = vadd.s32 %v2201, %v2199
      %v2203 = vand.u32 %v2015, 65535
      %v2204 = vshra.s32 %v2015, 16
      %v2205 = vcvt.s32.f32 %v2203
      %v2206 = vcvt.s32.f32 %v2204
      %2207 = vmin.xlane.f32.xlu0 %v2206
      %v2208 = vpop.xlane.xlu0 %2207
      %vm2209 = vcmp.eq.f32.partialorder %v2206, %v2208
      %v2210 = vsel %vm2209, %v2205, inf
      %2211 = vmin.xlane.f32.xlu0 %v2210
      %v2212 = vpop.xlane.xlu0 %2211
      %v2213 = vcvt.f32.s32 %v2212
      %v2214 = vcvt.f32.s32 %v2208
      %v2215 = vshll.u32 %v2214, 16
      %v2216 = vadd.s32 %v2215, %v2213
      %v2217 = vand.u32 %v2016, 65535
      %v2218 = vshra.s32 %v2016, 16
      %v2219 = vcvt.s32.f32 %v2217
      %v2220 = vcvt.s32.f32 %v2218
      %2221 = vmin.xlane.f32.xlu0 %v2220
      %v2222 = vpop.xlane.xlu0 %2221
      %vm2223 = vcmp.eq.f32.partialorder %v2220, %v2222
      %v2224 = vsel %vm2223, %v2219, inf
      %2225 = vmin.xlane.f32.xlu0 %v2224
      %v2226 = vpop.xlane.xlu0 %2225
      %v2227 = vcvt.f32.s32 %v2226
      %v2228 = vcvt.f32.s32 %v2222
      %v2229 = vshll.u32 %v2228, 16
      %v2230 = vadd.s32 %v2229, %v2227
      %v2231 = vand.u32 %v2017, 65535
      %v2232 = vshra.s32 %v2017, 16
      %v2233 = vcvt.s32.f32 %v2231
      %v2234 = vcvt.s32.f32 %v2232
      %2235 = vmin.xlane.f32.xlu0 %v2234
      %v2236 = vpop.xlane.xlu0 %2235
      %vm2237 = vcmp.eq.f32.partialorder %v2234, %v2236
      %v2238 = vsel %vm2237, %v2233, inf
      %2239 = vmin.xlane.f32.xlu0 %v2238
      %v2240 = vpop.xlane.xlu0 %2239
      %v2241 = vcvt.f32.s32 %v2240
      %v2242 = vcvt.f32.s32 %v2236
      %v2243 = vshll.u32 %v2242, 16
      %v2244 = vadd.s32 %v2243, %v2241
      %v2245 = vand.u32 %v2018, 65535
      %v2246 = vshra.s32 %v2018, 16
      %v2247 = vcvt.s32.f32 %v2245
      %v2248 = vcvt.s32.f32 %v2246
      %2249 = vmin.xlane.f32.xlu0 %v2248
      %v2250 = vpop.xlane.xlu0 %2249
      %vm2251 = vcmp.eq.f32.partialorder %v2248, %v2250
      %v2252 = vsel %vm2251, %v2247, inf
      %2253 = vmin.xlane.f32.xlu0 %v2252
      %v2254 = vpop.xlane.xlu0 %2253
      %v2255 = vcvt.f32.s32 %v2254
      %v2256 = vcvt.f32.s32 %v2250
      %v2257 = vshll.u32 %v2256, 16
      %v2258 = vadd.s32 %v2257, %v2255
      %v2259 = vand.u32 %v2019, 65535
      %v2260 = vshra.s32 %v2019, 16
      %v2261 = vcvt.s32.f32 %v2259
      %v2262 = vcvt.s32.f32 %v2260
      %2263 = vmin.xlane.f32.xlu0 %v2262
      %v2264 = vpop.xlane.xlu0 %2263
      %vm2265 = vcmp.eq.f32.partialorder %v2262, %v2264
      %v2266 = vsel %vm2265, %v2261, inf
      %2267 = vmin.xlane.f32.xlu0 %v2266
      %v2268 = vpop.xlane.xlu0 %2267
      %v2269 = vcvt.f32.s32 %v2268
      %v2270 = vcvt.f32.s32 %v2264
      %v2271 = vshll.u32 %v2270, 16
      %v2272 = vadd.s32 %v2271, %v2269
      %v2273 = vand.u32 %v2020, 65535
      %v2274 = vshra.s32 %v2020, 16
      %v2275 = vcvt.s32.f32 %v2273
      %v2276 = vcvt.s32.f32 %v2274
      %2277 = vmin.xlane.f32.xlu0 %v2276
      %v2278 = vpop.xlane.xlu0 %2277
      %vm2279 = vcmp.eq.f32.partialorder %v2276, %v2278
      %v2280 = vsel %vm2279, %v2275, inf
      %2281 = vmin.xlane.f32.xlu0 %v2280
      %v2282 = vpop.xlane.xlu0 %2281
      %v2283 = vcvt.f32.s32 %v2282
      %v2284 = vcvt.f32.s32 %v2278
      %v2285 = vshll.u32 %v2284, 16
      %v2286 = vadd.s32 %v2285, %v2283
      %v2287 = vand.u32 %v2021, 65535
      %v2288 = vshra.s32 %v2021, 16
      %v2289 = vcvt.s32.f32 %v2287
      %v2290 = vcvt.s32.f32 %v2288
      %2291 = vmin.xlane.f32.xlu0 %v2290
      %v2292 = vpop.xlane.xlu0 %2291
      %vm2293 = vcmp.eq.f32.partialorder %v2290, %v2292
      %v2294 = vsel %vm2293, %v2289, inf
      %2295 = vmin.xlane.f32.xlu0 %v2294
      %v2296 = vpop.xlane.xlu0 %2295
      %v2297 = vcvt.f32.s32 %v2296
      %v2298 = vcvt.f32.s32 %v2292
      %v2299 = vshll.u32 %v2298, 16
      %v2300 = vadd.s32 %v2299, %v2297
      %v2301 = vand.u32 %v2022, 65535
      %v2302 = vshra.s32 %v2022, 16
      %v2303 = vcvt.s32.f32 %v2301
      %v2304 = vcvt.s32.f32 %v2302
      %2305 = vmin.xlane.f32.xlu0 %v2304
      %v2306 = vpop.xlane.xlu0 %2305
      %vm2307 = vcmp.eq.f32.partialorder %v2304, %v2306
      %v2308 = vsel %vm2307, %v2303, inf
      %2309 = vmin.xlane.f32.xlu0 %v2308
      %v2310 = vpop.xlane.xlu0 %2309
      %v2311 = vcvt.f32.s32 %v2310
      %v2312 = vcvt.f32.s32 %v2306
      %v2313 = vshll.u32 %v2312, 16
      %v2314 = vadd.s32 %v2313, %v2311
      %v2315 = vand.u32 %v2023, 65535
      %v2316 = vshra.s32 %v2023, 16
      %v2317 = vcvt.s32.f32 %v2315
      %v2318 = vcvt.s32.f32 %v2316
      %2319 = vmin.xlane.f32.xlu0 %v2318
      %v2320 = vpop.xlane.xlu0 %2319
      %vm2321 = vcmp.eq.f32.partialorder %v2318, %v2320
      %v2322 = vsel %vm2321, %v2317, inf
      %2323 = vmin.xlane.f32.xlu0 %v2322
      %v2324 = vpop.xlane.xlu0 %2323
      %v2325 = vcvt.f32.s32 %v2324
      %v2326 = vcvt.f32.s32 %v2320
      %v2327 = vshll.u32 %v2326, 16
      %v2328 = vadd.s32 %v2327, %v2325
      %v2329 = vand.u32 %v2024, 65535
      %v2330 = vshra.s32 %v2024, 16
      %v2331 = vcvt.s32.f32 %v2329
      %v2332 = vcvt.s32.f32 %v2330
      %2333 = vmin.xlane.f32.xlu0 %v2332
      %v2334 = vpop.xlane.xlu0 %2333
      %vm2335 = vcmp.eq.f32.partialorder %v2332, %v2334
      %v2336 = vsel %vm2335, %v2331, inf
      %2337 = vmin.xlane.f32.xlu0 %v2336
      %v2338 = vpop.xlane.xlu0 %2337
      %v2339 = vcvt.f32.s32 %v2338
      %v2340 = vcvt.f32.s32 %v2334
      %v2341 = vshll.u32 %v2340, 16
      %v2342 = vadd.s32 %v2341, %v2339
      %v2343 = vand.u32 %v2025, 65535
      %v2344 = vshra.s32 %v2025, 16
      %v2345 = vcvt.s32.f32 %v2343
      %v2346 = vcvt.s32.f32 %v2344
      %2347 = vmin.xlane.f32.xlu0 %v2346
      %v2348 = vpop.xlane.xlu0 %2347
      %vm2349 = vcmp.eq.f32.partialorder %v2346, %v2348
      %v2350 = vsel %vm2349, %v2345, inf
      %2351 = vmin.xlane.f32.xlu0 %v2350
      %v2352 = vpop.xlane.xlu0 %2351
      %v2353 = vcvt.f32.s32 %v2352
      %v2354 = vcvt.f32.s32 %v2348
      %v2355 = vshll.u32 %v2354, 16
      %v2356 = vadd.s32 %v2355, %v2353
      %v2357 = vand.u32 %v2026, 65535
      %v2358 = vshra.s32 %v2026, 16
      %v2359 = vcvt.s32.f32 %v2357
      %v2360 = vcvt.s32.f32 %v2358
      %2361 = vmin.xlane.f32.xlu0 %v2360
      %v2362 = vpop.xlane.xlu0 %2361
      %vm2363 = vcmp.eq.f32.partialorder %v2360, %v2362
      %v2364 = vsel %vm2363, %v2359, inf
      %2365 = vmin.xlane.f32.xlu0 %v2364
      %v2366 = vpop.xlane.xlu0 %2365
      %v2367 = vcvt.f32.s32 %v2366
      %v2368 = vcvt.f32.s32 %v2362
      %v2369 = vshll.u32 %v2368, 16
      %v2370 = vadd.s32 %v2369, %v2367
      %v2371 = vand.u32 %v2027, 65535
      %v2372 = vshra.s32 %v2027, 16
      %v2373 = vcvt.s32.f32 %v2371
      %v2374 = vcvt.s32.f32 %v2372
      %2375 = vmin.xlane.f32.xlu0 %v2374
      %v2376 = vpop.xlane.xlu0 %2375
      %vm2377 = vcmp.eq.f32.partialorder %v2374, %v2376
      %v2378 = vsel %vm2377, %v2373, inf
      %2379 = vmin.xlane.f32.xlu0 %v2378
      %v2380 = vpop.xlane.xlu0 %2379
      %v2381 = vcvt.f32.s32 %v2380
      %v2382 = vcvt.f32.s32 %v2376
      %v2383 = vshll.u32 %v2382, 16
      %v2384 = vadd.s32 %v2383, %v2381
      %v2385 = vand.u32 %v2028, 65535
      %v2386 = vshra.s32 %v2028, 16
      %v2387 = vcvt.s32.f32 %v2385
      %v2388 = vcvt.s32.f32 %v2386
      %2389 = vmin.xlane.f32.xlu0 %v2388
      %v2390 = vpop.xlane.xlu0 %2389
      %vm2391 = vcmp.eq.f32.partialorder %v2388, %v2390
      %v2392 = vsel %vm2391, %v2387, inf
      %2393 = vmin.xlane.f32.xlu0 %v2392
      %v2394 = vpop.xlane.xlu0 %2393
      %v2395 = vcvt.f32.s32 %v2394
      %v2396 = vcvt.f32.s32 %v2390
      %v2397 = vshll.u32 %v2396, 16
      %v2398 = vadd.s32 %v2397, %v2395
      %v2399 = vand.u32 %v2029, 65535
      %v2400 = vshra.s32 %v2029, 16
      %v2401 = vcvt.s32.f32 %v2399
      %v2402 = vcvt.s32.f32 %v2400
      %2403 = vmin.xlane.f32.xlu0 %v2402
      %v2404 = vpop.xlane.xlu0 %2403
      %vm2405 = vcmp.eq.f32.partialorder %v2402, %v2404
      %v2406 = vsel %vm2405, %v2401, inf
      %2407 = vmin.xlane.f32.xlu0 %v2406
      %v2408 = vpop.xlane.xlu0 %2407
      %v2409 = vcvt.f32.s32 %v2408
      %v2410 = vcvt.f32.s32 %v2404
      %v2411 = vshll.u32 %v2410, 16
      %v2412 = vadd.s32 %v2411, %v2409
      %v2413 = vand.u32 %v2030, 65535
      %v2414 = vshra.s32 %v2030, 16
      %v2415 = vcvt.s32.f32 %v2413
      %v2416 = vcvt.s32.f32 %v2414
      %2417 = vmin.xlane.f32.xlu0 %v2416
      %v2418 = vpop.xlane.xlu0 %2417
      %vm2419 = vcmp.eq.f32.partialorder %v2416, %v2418
      %v2420 = vsel %vm2419, %v2415, inf
      %2421 = vmin.xlane.f32.xlu0 %v2420
      %v2422 = vpop.xlane.xlu0 %2421
      %v2423 = vcvt.f32.s32 %v2422
      %v2424 = vcvt.f32.s32 %v2418
      %v2425 = vshll.u32 %v2424, 16
      %v2426 = vadd.s32 %v2425, %v2423
      %v2427 = vand.u32 %v2031, 65535
      %v2428 = vshra.s32 %v2031, 16
      %v2429 = vcvt.s32.f32 %v2427
      %v2430 = vcvt.s32.f32 %v2428
      %2431 = vmin.xlane.f32.xlu0 %v2430
      %v2432 = vpop.xlane.xlu0 %2431
      %vm2433 = vcmp.eq.f32.partialorder %v2430, %v2432
      %v2434 = vsel %vm2433, %v2429, inf
      %2435 = vmin.xlane.f32.xlu0 %v2434
      %v2436 = vpop.xlane.xlu0 %2435
      %v2437 = vcvt.f32.s32 %v2436
      %v2438 = vcvt.f32.s32 %v2432
      %v2439 = vshll.u32 %v2438, 16
      %v2440 = vadd.s32 %v2439, %v2437
      %v2441 = vand.u32 %v2032, 65535
      %v2442 = vshra.s32 %v2032, 16
      %v2443 = vcvt.s32.f32 %v2441
      %v2444 = vcvt.s32.f32 %v2442
      %2445 = vmin.xlane.f32.xlu0 %v2444
      %v2446 = vpop.xlane.xlu0 %2445
      %vm2447 = vcmp.eq.f32.partialorder %v2444, %v2446
      %v2448 = vsel %vm2447, %v2443, inf
      %2449 = vmin.xlane.f32.xlu0 %v2448
      %v2450 = vpop.xlane.xlu0 %2449
      %v2451 = vcvt.f32.s32 %v2450
      %v2452 = vcvt.f32.s32 %v2446
      %v2453 = vshll.u32 %v2452, 16
      %v2454 = vadd.s32 %v2453, %v2451
      %v2455 = vand.u32 %v2033, 65535
      %v2456 = vshra.s32 %v2033, 16
      %v2457 = vcvt.s32.f32 %v2455
      %v2458 = vcvt.s32.f32 %v2456
      %2459 = vmin.xlane.f32.xlu0 %v2458
      %v2460 = vpop.xlane.xlu0 %2459
      %vm2461 = vcmp.eq.f32.partialorder %v2458, %v2460
      %v2462 = vsel %vm2461, %v2457, inf
      %2463 = vmin.xlane.f32.xlu0 %v2462
      %v2464 = vpop.xlane.xlu0 %2463
      %v2465 = vcvt.f32.s32 %v2464
      %v2466 = vcvt.f32.s32 %v2460
      %v2467 = vshll.u32 %v2466, 16
      %v2468 = vadd.s32 %v2467, %v2465
      %v2469 = vand.u32 %v2034, 65535
      %v2470 = vshra.s32 %v2034, 16
      %v2471 = vcvt.s32.f32 %v2469
      %v2472 = vcvt.s32.f32 %v2470
      %2473 = vmin.xlane.f32.xlu0 %v2472
      %v2474 = vpop.xlane.xlu0 %2473
      %vm2475 = vcmp.eq.f32.partialorder %v2472, %v2474
      %v2476 = vsel %vm2475, %v2471, inf
      %2477 = vmin.xlane.f32.xlu0 %v2476
      %v2478 = vpop.xlane.xlu0 %2477
      %v2479 = vcvt.f32.s32 %v2478
      %v2480 = vcvt.f32.s32 %v2474
      %v2481 = vshll.u32 %v2480, 16
      %v2482 = vadd.s32 %v2481, %v2479
      %vm2483 = vcmp.eq.s32.totalorder %v1906, %v2048
      %vm2484 = vcmp.eq.s32.totalorder %v1906, %v2062
      %vm2485 = vcmp.eq.s32.totalorder %v1906, %v2076
      %vm2486 = vcmp.eq.s32.totalorder %v1906, %v2090
      %vm2487 = vcmp.eq.s32.totalorder %v1906, %v2104
      %vm2488 = vcmp.eq.s32.totalorder %v1906, %v2118
      %vm2489 = vcmp.eq.s32.totalorder %v1906, %v2132
      %vm2490 = vcmp.eq.s32.totalorder %v1906, %v2146
      %vm2491 = vcmp.eq.s32.totalorder %v1906, %v2160
      %vm2492 = vcmp.eq.s32.totalorder %v1906, %v2174
      %vm2493 = vcmp.eq.s32.totalorder %v1906, %v2188
      %vm2494 = vcmp.eq.s32.totalorder %v1906, %v2202
      %vm2495 = vcmp.eq.s32.totalorder %v1906, %v2216
      %vm2496 = vcmp.eq.s32.totalorder %v1906, %v2230
      %vm2497 = vcmp.eq.s32.totalorder %v1906, %v2244
      %vm2498 = vcmp.eq.s32.totalorder %v1906, %v2258
      %vm2499 = vcmp.eq.s32.totalorder %v1906, %v2272
      %vm2500 = vcmp.eq.s32.totalorder %v1906, %v2286
      %vm2501 = vcmp.eq.s32.totalorder %v1906, %v2300
      %vm2502 = vcmp.eq.s32.totalorder %v1906, %v2314
      %vm2503 = vcmp.eq.s32.totalorder %v1906, %v2328
      %vm2504 = vcmp.eq.s32.totalorder %v1906, %v2342
      %vm2505 = vcmp.eq.s32.totalorder %v1906, %v2356
      %vm2506 = vcmp.eq.s32.totalorder %v1906, %v2370
      %vm2507 = vcmp.eq.s32.totalorder %v1906, %v2384
      %vm2508 = vcmp.eq.s32.totalorder %v1906, %v2398
      %vm2509 = vcmp.eq.s32.totalorder %v1906, %v2412
      %vm2510 = vcmp.eq.s32.totalorder %v1906, %v2426
      %vm2511 = vcmp.eq.s32.totalorder %v1906, %v2440
      %vm2512 = vcmp.eq.s32.totalorder %v1906, %v2454
      %vm2513 = vcmp.eq.s32.totalorder %v1906, %v2468
      %vm2514 = vcmp.eq.s32.totalorder %v1906, %v2482
      %v2515 = vsel %vm2483, 1, 0
      %v2516 = vsel %vm2484, 1, 0
      %v2517 = vsel %vm2485, 1, 0
      %v2518 = vsel %vm2486, 1, 0
      %v2519 = vsel %vm2487, 1, 0
      %v2520 = vsel %vm2488, 1, 0
      %v2521 = vsel %vm2489, 1, 0
      %v2522 = vsel %vm2490, 1, 0
      %v2523 = vsel %vm2491, 1, 0
      %v2524 = vsel %vm2492, 1, 0
      %v2525 = vsel %vm2493, 1, 0
      %v2526 = vsel %vm2494, 1, 0
      %v2527 = vsel %vm2495, 1, 0
      %v2528 = vsel %vm2496, 1, 0
      %v2529 = vsel %vm2497, 1, 0
      %v2530 = vsel %vm2498, 1, 0
      %v2531 = vsel %vm2499, 1, 0
      %v2532 = vsel %vm2500, 1, 0
      %v2533 = vsel %vm2501, 1, 0
      %v2534 = vsel %vm2502, 1, 0
      %v2535 = vsel %vm2503, 1, 0
      %v2536 = vsel %vm2504, 1, 0
      %v2537 = vsel %vm2505, 1, 0
      %v2538 = vsel %vm2506, 1, 0
      %v2539 = vsel %vm2507, 1, 0
      %v2540 = vsel %vm2508, 1, 0
      %v2541 = vsel %vm2509, 1, 0
      %v2542 = vsel %vm2510, 1, 0
      %v2543 = vsel %vm2511, 1, 0
      %v2544 = vsel %vm2512, 1, 0
      %v2545 = vsel %vm2513, 1, 0
      %v2546 = vsel %vm2514, 1, 0
      %v2547 = vcvt.s32.f32 %v2515
      %v2548 = vcvt.s32.f32 %v2516
      %v2549 = vcvt.s32.f32 %v2517
      %v2550 = vcvt.s32.f32 %v2518
      %v2551 = vcvt.s32.f32 %v2519
      %v2552 = vcvt.s32.f32 %v2520
      %v2553 = vcvt.s32.f32 %v2521
      %v2554 = vcvt.s32.f32 %v2522
      %v2555 = vcvt.s32.f32 %v2523
      %v2556 = vcvt.s32.f32 %v2524
      %v2557 = vcvt.s32.f32 %v2525
      %v2558 = vcvt.s32.f32 %v2526
      %v2559 = vcvt.s32.f32 %v2527
      %v2560 = vcvt.s32.f32 %v2528
      %v2561 = vcvt.s32.f32 %v2529
      %v2562 = vcvt.s32.f32 %v2530
      %v2563 = vcvt.s32.f32 %v2531
      %v2564 = vcvt.s32.f32 %v2532
      %v2565 = vcvt.s32.f32 %v2533
      %v2566 = vcvt.s32.f32 %v2534
      %v2567 = vcvt.s32.f32 %v2535
      %v2568 = vcvt.s32.f32 %v2536
      %v2569 = vcvt.s32.f32 %v2537
      %v2570 = vcvt.s32.f32 %v2538
      %v2571 = vcvt.s32.f32 %v2539
      %v2572 = vcvt.s32.f32 %v2540
      %v2573 = vcvt.s32.f32 %v2541
      %v2574 = vcvt.s32.f32 %v2542
      %v2575 = vcvt.s32.f32 %v2543
      %v2576 = vcvt.s32.f32 %v2544
      %v2577 = vcvt.s32.f32 %v2545
      %v2578 = vcvt.s32.f32 %v2546
      %v2579 = vadd.f32 %v2547, %v2548
      %v2580 = vadd.f32 %v2579, %v2549
      %v2581 = vadd.f32 %v2580, %v2550
      %v2582 = vadd.f32 %v2581, %v2551
      %v2583 = vadd.f32 %v2582, %v2552
      %v2584 = vadd.f32 %v2583, %v2553
      %v2585 = vadd.f32 %v2584, %v2554
      %v2586 = vadd.f32 %v2585, %v2555
      %v2587 = vadd.f32 %v2586, %v2556
      %v2588 = vadd.f32 %v2587, %v2557
      %v2589 = vadd.f32 %v2588, %v2558
      %v2590 = vadd.f32 %v2589, %v2559
      %v2591 = vadd.f32 %v2590, %v2560
      %v2592 = vadd.f32 %v2591, %v2561
      %v2593 = vadd.f32 %v2592, %v2562
      %v2594 = vadd.f32 %v2593, %v2563
      %v2595 = vadd.f32 %v2594, %v2564
      %v2596 = vadd.f32 %v2595, %v2565
      %v2597 = vadd.f32 %v2596, %v2566
      %v2598 = vadd.f32 %v2597, %v2567
      %v2599 = vadd.f32 %v2598, %v2568
      %v2600 = vadd.f32 %v2599, %v2569
      %v2601 = vadd.f32 %v2600, %v2570
      %v2602 = vadd.f32 %v2601, %v2571
      %v2603 = vadd.f32 %v2602, %v2572
      %v2604 = vadd.f32 %v2603, %v2573
      %v2605 = vadd.f32 %v2604, %v2574
      %v2606 = vadd.f32 %v2605, %v2575
      %v2607 = vadd.f32 %v2606, %v2576
      %v2608 = vadd.f32 %v2607, %v2577
      %v2609 = vadd.f32 %v2608, %v2578
      %v2610 = vrot.slane %v2609, 4
      %v2611 = vadd.f32 %v2609, %v2610
      %v2612 = vrot.slane %v2611, 2
      %v2613 = vadd.f32 %v2611, %v2612
      %v2614 = vrot.slane %v2613, 1
      %v2615 = vadd.f32 %v2613, %v2614
      %2616 = vmin.xlane.f32.xlu0 %v1842
      %v2617 = vpop.xlane.xlu0 %2616
      %2618 = vmin.xlane.f32.xlu0 %v1844
      %v2619 = vpop.xlane.xlu0 %2618
      %2620 = vmin.xlane.f32.xlu0 %v1846
      %v2621 = vpop.xlane.xlu0 %2620
      %2622 = vmin.xlane.f32.xlu0 %v1848
      %v2623 = vpop.xlane.xlu0 %2622
      %2624 = vmin.xlane.f32.xlu0 %v1850
      %v2625 = vpop.xlane.xlu0 %2624
      %2626 = vmin.xlane.f32.xlu0 %v1852
      %v2627 = vpop.xlane.xlu0 %2626
      %2628 = vmin.xlane.f32.xlu0 %v1854
      %v2629 = vpop.xlane.xlu0 %2628
      %2630 = vmin.xlane.f32.xlu0 %v1856
      %v2631 = vpop.xlane.xlu0 %2630
      %2632 = vmin.xlane.f32.xlu0 %v1858
      %v2633 = vpop.xlane.xlu0 %2632
      %2634 = vmin.xlane.f32.xlu0 %v1860
      %v2635 = vpop.xlane.xlu0 %2634
      %2636 = vmin.xlane.f32.xlu0 %v1862
      %v2637 = vpop.xlane.xlu0 %2636
      %2638 = vmin.xlane.f32.xlu0 %v1864
      %v2639 = vpop.xlane.xlu0 %2638
      %2640 = vmin.xlane.f32.xlu0 %v1866
      %v2641 = vpop.xlane.xlu0 %2640
      %2642 = vmin.xlane.f32.xlu0 %v1868
      %v2643 = vpop.xlane.xlu0 %2642
      %2644 = vmin.xlane.f32.xlu0 %v1870
      %v2645 = vpop.xlane.xlu0 %2644
      %2646 = vmin.xlane.f32.xlu0 %v1872
      %v2647 = vpop.xlane.xlu0 %2646
      %2648 = vmin.xlane.f32.xlu0 %v1874
      %v2649 = vpop.xlane.xlu0 %2648
      %2650 = vmin.xlane.f32.xlu0 %v1876
      %v2651 = vpop.xlane.xlu0 %2650
      %2652 = vmin.xlane.f32.xlu0 %v1878
      %v2653 = vpop.xlane.xlu0 %2652
      %2654 = vmin.xlane.f32.xlu0 %v1880
      %v2655 = vpop.xlane.xlu0 %2654
      %2656 = vmin.xlane.f32.xlu0 %v1882
      %v2657 = vpop.xlane.xlu0 %2656
      %2658 = vmin.xlane.f32.xlu0 %v1884
      %v2659 = vpop.xlane.xlu0 %2658
      %2660 = vmin.xlane.f32.xlu0 %v1886
      %v2661 = vpop.xlane.xlu0 %2660
      %2662 = vmin.xlane.f32.xlu0 %v1888
      %v2663 = vpop.xlane.xlu0 %2662
      %2664 = vmin.xlane.f32.xlu0 %v1890
      %v2665 = vpop.xlane.xlu0 %2664
      %2666 = vmin.xlane.f32.xlu0 %v1892
      %v2667 = vpop.xlane.xlu0 %2666
      %2668 = vmin.xlane.f32.xlu0 %v1894
      %v2669 = vpop.xlane.xlu0 %2668
      %2670 = vmin.xlane.f32.xlu0 %v1896
      %v2671 = vpop.xlane.xlu0 %2670
      %2672 = vmin.xlane.f32.xlu0 %v1898
      %v2673 = vpop.xlane.xlu0 %2672
      %2674 = vmin.xlane.f32.xlu0 %v1900
      %v2675 = vpop.xlane.xlu0 %2674
      %2676 = vmin.xlane.f32.xlu0 %v1902
      %v2677 = vpop.xlane.xlu0 %2676
      %2678 = vmin.xlane.f32.xlu0 %v1904
      %v2679 = vpop.xlane.xlu0 %2678
      %vm2680 = vcmp.le.f32.partialorder %v1842, %v2617
      %vm2681 = vcmp.le.f32.partialorder %v1844, %v2619
      %vm2682 = vcmp.le.f32.partialorder %v1846, %v2621
      %vm2683 = vcmp.le.f32.partialorder %v1848, %v2623
      %vm2684 = vcmp.le.f32.partialorder %v1850, %v2625
      %vm2685 = vcmp.le.f32.partialorder %v1852, %v2627
      %vm2686 = vcmp.le.f32.partialorder %v1854, %v2629
      %vm2687 = vcmp.le.f32.partialorder %v1856, %v2631
      %vm2688 = vcmp.le.f32.partialorder %v1858, %v2633
      %vm2689 = vcmp.le.f32.partialorder %v1860, %v2635
      %vm2690 = vcmp.le.f32.partialorder %v1862, %v2637
      %vm2691 = vcmp.le.f32.partialorder %v1864, %v2639
      %vm2692 = vcmp.le.f32.partialorder %v1866, %v2641
      %vm2693 = vcmp.le.f32.partialorder %v1868, %v2643
      %vm2694 = vcmp.le.f32.partialorder %v1870, %v2645
      %vm2695 = vcmp.le.f32.partialorder %v1872, %v2647
      %vm2696 = vcmp.le.f32.partialorder %v1874, %v2649
      %vm2697 = vcmp.le.f32.partialorder %v1876, %v2651
      %vm2698 = vcmp.le.f32.partialorder %v1878, %v2653
      %vm2699 = vcmp.le.f32.partialorder %v1880, %v2655
      %vm2700 = vcmp.le.f32.partialorder %v1882, %v2657
      %vm2701 = vcmp.le.f32.partialorder %v1884, %v2659
      %vm2702 = vcmp.le.f32.partialorder %v1886, %v2661
      %vm2703 = vcmp.le.f32.partialorder %v1888, %v2663
      %vm2704 = vcmp.le.f32.partialorder %v1890, %v2665
      %vm2705 = vcmp.le.f32.partialorder %v1892, %v2667
      %vm2706 = vcmp.le.f32.partialorder %v1894, %v2669
      %vm2707 = vcmp.le.f32.partialorder %v1896, %v2671
      %vm2708 = vcmp.le.f32.partialorder %v1898, %v2673
      %vm2709 = vcmp.le.f32.partialorder %v1900, %v2675
      %vm2710 = vcmp.le.f32.partialorder %v1902, %v2677
      %vm2711 = vcmp.le.f32.partialorder %v1904, %v2679
      %v2712 = vsel %vm2680, %v1906, 128
      %v2713 = vsel %vm2681, %v1906, 128
      %v2714 = vsel %vm2682, %v1906, 128
      %v2715 = vsel %vm2683, %v1906, 128
      %v2716 = vsel %vm2684, %v1906, 128
      %v2717 = vsel %vm2685, %v1906, 128
      %v2718 = vsel %vm2686, %v1906, 128
      %v2719 = vsel %vm2687, %v1906, 128
      %v2720 = vsel %vm2688, %v1906, 128
      %v2721 = vsel %vm2689, %v1906, 128
      %v2722 = vsel %vm2690, %v1906, 128
      %v2723 = vsel %vm2691, %v1906, 128
      %v2724 = vsel %vm2692, %v1906, 128
      %v2725 = vsel %vm2693, %v1906, 128
      %v2726 = vsel %vm2694, %v1906, 128
      %v2727 = vsel %vm2695, %v1906, 128
      %v2728 = vsel %vm2696, %v1906, 128
      %v2729 = vsel %vm2697, %v1906, 128
      %v2730 = vsel %vm2698, %v1906, 128
      %v2731 = vsel %vm2699, %v1906, 128
      %v2732 = vsel %vm2700, %v1906, 128
      %v2733 = vsel %vm2701, %v1906, 128
      %v2734 = vsel %vm2702, %v1906, 128
      %v2735 = vsel %vm2703, %v1906, 128
      %v2736 = vsel %vm2704, %v1906, 128
      %v2737 = vsel %vm2705, %v1906, 128
      %v2738 = vsel %vm2706, %v1906, 128
      %v2739 = vsel %vm2707, %v1906, 128
      %v2740 = vsel %vm2708, %v1906, 128
      %v2741 = vsel %vm2709, %v1906, 128
      %v2742 = vsel %vm2710, %v1906, 128
      %v2743 = vsel %vm2711, %v1906, 128
      %v2744 = vand.u32 %v2712, 65535
      %v2745 = vshra.s32 %v2712, 16
      %v2746 = vcvt.s32.f32 %v2744
      %v2747 = vcvt.s32.f32 %v2745
      %2748 = vmin.xlane.f32.xlu0 %v2747
      %v2749 = vpop.xlane.xlu0 %2748
      %vm2750 = vcmp.eq.f32.partialorder %v2747, %v2749
      %v2751 = vsel %vm2750, %v2746, inf
      %2752 = vmin.xlane.f32.xlu0 %v2751
      %v2753 = vpop.xlane.xlu0 %2752
      %v2754 = vcvt.f32.s32 %v2753
      %v2755 = vcvt.f32.s32 %v2749
      %v2756 = vshll.u32 %v2755, 16
      %v2757 = vadd.s32 %v2756, %v2754
      %v2758 = vand.u32 %v2713, 65535
      %v2759 = vshra.s32 %v2713, 16
      %v2760 = vcvt.s32.f32 %v2758
      %v2761 = vcvt.s32.f32 %v2759
      %2762 = vmin.xlane.f32.xlu0 %v2761
      %v2763 = vpop.xlane.xlu0 %2762
      %vm2764 = vcmp.eq.f32.partialorder %v2761, %v2763
      %v2765 = vsel %vm2764, %v2760, inf
      %2766 = vmin.xlane.f32.xlu0 %v2765
      %v2767 = vpop.xlane.xlu0 %2766
      %v2768 = vcvt.f32.s32 %v2767
      %v2769 = vcvt.f32.s32 %v2763
      %v2770 = vshll.u32 %v2769, 16
      %v2771 = vadd.s32 %v2770, %v2768
      %v2772 = vand.u32 %v2714, 65535
      %v2773 = vshra.s32 %v2714, 16
      %v2774 = vcvt.s32.f32 %v2772
      %v2775 = vcvt.s32.f32 %v2773
      %2776 = vmin.xlane.f32.xlu0 %v2775
      %v2777 = vpop.xlane.xlu0 %2776
      %vm2778 = vcmp.eq.f32.partialorder %v2775, %v2777
      %v2779 = vsel %vm2778, %v2774, inf
      %2780 = vmin.xlane.f32.xlu0 %v2779
      %v2781 = vpop.xlane.xlu0 %2780
      %v2782 = vcvt.f32.s32 %v2781
      %v2783 = vcvt.f32.s32 %v2777
      %v2784 = vshll.u32 %v2783, 16
      %v2785 = vadd.s32 %v2784, %v2782
      %v2786 = vand.u32 %v2715, 65535
      %v2787 = vshra.s32 %v2715, 16
      %v2788 = vcvt.s32.f32 %v2786
      %v2789 = vcvt.s32.f32 %v2787
      %2790 = vmin.xlane.f32.xlu0 %v2789
      %v2791 = vpop.xlane.xlu0 %2790
      %vm2792 = vcmp.eq.f32.partialorder %v2789, %v2791
      %v2793 = vsel %vm2792, %v2788, inf
      %2794 = vmin.xlane.f32.xlu0 %v2793
      %v2795 = vpop.xlane.xlu0 %2794
      %v2796 = vcvt.f32.s32 %v2795
      %v2797 = vcvt.f32.s32 %v2791
      %v2798 = vshll.u32 %v2797, 16
      %v2799 = vadd.s32 %v2798, %v2796
      %v2800 = vand.u32 %v2716, 65535
      %v2801 = vshra.s32 %v2716, 16
      %v2802 = vcvt.s32.f32 %v2800
      %v2803 = vcvt.s32.f32 %v2801
      %2804 = vmin.xlane.f32.xlu0 %v2803
      %v2805 = vpop.xlane.xlu0 %2804
      %vm2806 = vcmp.eq.f32.partialorder %v2803, %v2805
      %v2807 = vsel %vm2806, %v2802, inf
      %2808 = vmin.xlane.f32.xlu0 %v2807
      %v2809 = vpop.xlane.xlu0 %2808
      %v2810 = vcvt.f32.s32 %v2809
      %v2811 = vcvt.f32.s32 %v2805
      %v2812 = vshll.u32 %v2811, 16
      %v2813 = vadd.s32 %v2812, %v2810
      %v2814 = vand.u32 %v2717, 65535
      %v2815 = vshra.s32 %v2717, 16
      %v2816 = vcvt.s32.f32 %v2814
      %v2817 = vcvt.s32.f32 %v2815
      %2818 = vmin.xlane.f32.xlu0 %v2817
      %v2819 = vpop.xlane.xlu0 %2818
      %vm2820 = vcmp.eq.f32.partialorder %v2817, %v2819
      %v2821 = vsel %vm2820, %v2816, inf
      %2822 = vmin.xlane.f32.xlu0 %v2821
      %v2823 = vpop.xlane.xlu0 %2822
      %v2824 = vcvt.f32.s32 %v2823
      %v2825 = vcvt.f32.s32 %v2819
      %v2826 = vshll.u32 %v2825, 16
      %v2827 = vadd.s32 %v2826, %v2824
      %v2828 = vand.u32 %v2718, 65535
      %v2829 = vshra.s32 %v2718, 16
      %v2830 = vcvt.s32.f32 %v2828
      %v2831 = vcvt.s32.f32 %v2829
      %2832 = vmin.xlane.f32.xlu0 %v2831
      %v2833 = vpop.xlane.xlu0 %2832
      %vm2834 = vcmp.eq.f32.partialorder %v2831, %v2833
      %v2835 = vsel %vm2834, %v2830, inf
      %2836 = vmin.xlane.f32.xlu0 %v2835
      %v2837 = vpop.xlane.xlu0 %2836
      %v2838 = vcvt.f32.s32 %v2837
      %v2839 = vcvt.f32.s32 %v2833
      %v2840 = vshll.u32 %v2839, 16
      %v2841 = vadd.s32 %v2840, %v2838
      %v2842 = vand.u32 %v2719, 65535
      %v2843 = vshra.s32 %v2719, 16
      %v2844 = vcvt.s32.f32 %v2842
      %v2845 = vcvt.s32.f32 %v2843
      %2846 = vmin.xlane.f32.xlu0 %v2845
      %v2847 = vpop.xlane.xlu0 %2846
      %vm2848 = vcmp.eq.f32.partialorder %v2845, %v2847
      %v2849 = vsel %vm2848, %v2844, inf
      %2850 = vmin.xlane.f32.xlu0 %v2849
      %v2851 = vpop.xlane.xlu0 %2850
      %v2852 = vcvt.f32.s32 %v2851
      %v2853 = vcvt.f32.s32 %v2847
      %v2854 = vshll.u32 %v2853, 16
      %v2855 = vadd.s32 %v2854, %v2852
      %v2856 = vand.u32 %v2720, 65535
      %v2857 = vshra.s32 %v2720, 16
      %v2858 = vcvt.s32.f32 %v2856
      %v2859 = vcvt.s32.f32 %v2857
      %2860 = vmin.xlane.f32.xlu0 %v2859
      %v2861 = vpop.xlane.xlu0 %2860
      %vm2862 = vcmp.eq.f32.partialorder %v2859, %v2861
      %v2863 = vsel %vm2862, %v2858, inf
      %2864 = vmin.xlane.f32.xlu0 %v2863
      %v2865 = vpop.xlane.xlu0 %2864
      %v2866 = vcvt.f32.s32 %v2865
      %v2867 = vcvt.f32.s32 %v2861
      %v2868 = vshll.u32 %v2867, 16
      %v2869 = vadd.s32 %v2868, %v2866
      %v2870 = vand.u32 %v2721, 65535
      %v2871 = vshra.s32 %v2721, 16
      %v2872 = vcvt.s32.f32 %v2870
      %v2873 = vcvt.s32.f32 %v2871
      %2874 = vmin.xlane.f32.xlu0 %v2873
      %v2875 = vpop.xlane.xlu0 %2874
      %vm2876 = vcmp.eq.f32.partialorder %v2873, %v2875
      %v2877 = vsel %vm2876, %v2872, inf
      %2878 = vmin.xlane.f32.xlu0 %v2877
      %v2879 = vpop.xlane.xlu0 %2878
      %v2880 = vcvt.f32.s32 %v2879
      %v2881 = vcvt.f32.s32 %v2875
      %v2882 = vshll.u32 %v2881, 16
      %v2883 = vadd.s32 %v2882, %v2880
      %v2884 = vand.u32 %v2722, 65535
      %v2885 = vshra.s32 %v2722, 16
      %v2886 = vcvt.s32.f32 %v2884
      %v2887 = vcvt.s32.f32 %v2885
      %2888 = vmin.xlane.f32.xlu0 %v2887
      %v2889 = vpop.xlane.xlu0 %2888
      %vm2890 = vcmp.eq.f32.partialorder %v2887, %v2889
      %v2891 = vsel %vm2890, %v2886, inf
      %2892 = vmin.xlane.f32.xlu0 %v2891
      %v2893 = vpop.xlane.xlu0 %2892
      %v2894 = vcvt.f32.s32 %v2893
      %v2895 = vcvt.f32.s32 %v2889
      %v2896 = vshll.u32 %v2895, 16
      %v2897 = vadd.s32 %v2896, %v2894
      %v2898 = vand.u32 %v2723, 65535
      %v2899 = vshra.s32 %v2723, 16
      %v2900 = vcvt.s32.f32 %v2898
      %v2901 = vcvt.s32.f32 %v2899
      %2902 = vmin.xlane.f32.xlu0 %v2901
      %v2903 = vpop.xlane.xlu0 %2902
      %vm2904 = vcmp.eq.f32.partialorder %v2901, %v2903
      %v2905 = vsel %vm2904, %v2900, inf
      %2906 = vmin.xlane.f32.xlu0 %v2905
      %v2907 = vpop.xlane.xlu0 %2906
      %v2908 = vcvt.f32.s32 %v2907
      %v2909 = vcvt.f32.s32 %v2903
      %v2910 = vshll.u32 %v2909, 16
      %v2911 = vadd.s32 %v2910, %v2908
      %v2912 = vand.u32 %v2724, 65535
      %v2913 = vshra.s32 %v2724, 16
      %v2914 = vcvt.s32.f32 %v2912
      %v2915 = vcvt.s32.f32 %v2913
      %2916 = vmin.xlane.f32.xlu0 %v2915
      %v2917 = vpop.xlane.xlu0 %2916
      %vm2918 = vcmp.eq.f32.partialorder %v2915, %v2917
      %v2919 = vsel %vm2918, %v2914, inf
      %2920 = vmin.xlane.f32.xlu0 %v2919
      %v2921 = vpop.xlane.xlu0 %2920
      %v2922 = vcvt.f32.s32 %v2921
      %v2923 = vcvt.f32.s32 %v2917
      %v2924 = vshll.u32 %v2923, 16
      %v2925 = vadd.s32 %v2924, %v2922
      %v2926 = vand.u32 %v2725, 65535
      %v2927 = vshra.s32 %v2725, 16
      %v2928 = vcvt.s32.f32 %v2926
      %v2929 = vcvt.s32.f32 %v2927
      %2930 = vmin.xlane.f32.xlu0 %v2929
      %v2931 = vpop.xlane.xlu0 %2930
      %vm2932 = vcmp.eq.f32.partialorder %v2929, %v2931
      %v2933 = vsel %vm2932, %v2928, inf
      %2934 = vmin.xlane.f32.xlu0 %v2933
      %v2935 = vpop.xlane.xlu0 %2934
      %v2936 = vcvt.f32.s32 %v2935
      %v2937 = vcvt.f32.s32 %v2931
      %v2938 = vshll.u32 %v2937, 16
      %v2939 = vadd.s32 %v2938, %v2936
      %v2940 = vand.u32 %v2726, 65535
      %v2941 = vshra.s32 %v2726, 16
      %v2942 = vcvt.s32.f32 %v2940
      %v2943 = vcvt.s32.f32 %v2941
      %2944 = vmin.xlane.f32.xlu0 %v2943
      %v2945 = vpop.xlane.xlu0 %2944
      %vm2946 = vcmp.eq.f32.partialorder %v2943, %v2945
      %v2947 = vsel %vm2946, %v2942, inf
      %2948 = vmin.xlane.f32.xlu0 %v2947
      %v2949 = vpop.xlane.xlu0 %2948
      %v2950 = vcvt.f32.s32 %v2949
      %v2951 = vcvt.f32.s32 %v2945
      %v2952 = vshll.u32 %v2951, 16
      %v2953 = vadd.s32 %v2952, %v2950
      %v2954 = vand.u32 %v2727, 65535
      %v2955 = vshra.s32 %v2727, 16
      %v2956 = vcvt.s32.f32 %v2954
      %v2957 = vcvt.s32.f32 %v2955
      %2958 = vmin.xlane.f32.xlu0 %v2957
      %v2959 = vpop.xlane.xlu0 %2958
      %vm2960 = vcmp.eq.f32.partialorder %v2957, %v2959
      %v2961 = vsel %vm2960, %v2956, inf
      %2962 = vmin.xlane.f32.xlu0 %v2961
      %v2963 = vpop.xlane.xlu0 %2962
      %v2964 = vcvt.f32.s32 %v2963
      %v2965 = vcvt.f32.s32 %v2959
      %v2966 = vshll.u32 %v2965, 16
      %v2967 = vadd.s32 %v2966, %v2964
      %v2968 = vand.u32 %v2728, 65535
      %v2969 = vshra.s32 %v2728, 16
      %v2970 = vcvt.s32.f32 %v2968
      %v2971 = vcvt.s32.f32 %v2969
      %2972 = vmin.xlane.f32.xlu0 %v2971
      %v2973 = vpop.xlane.xlu0 %2972
      %vm2974 = vcmp.eq.f32.partialorder %v2971, %v2973
      %v2975 = vsel %vm2974, %v2970, inf
      %2976 = vmin.xlane.f32.xlu0 %v2975
      %v2977 = vpop.xlane.xlu0 %2976
      %v2978 = vcvt.f32.s32 %v2977
      %v2979 = vcvt.f32.s32 %v2973
      %v2980 = vshll.u32 %v2979, 16
      %v2981 = vadd.s32 %v2980, %v2978
      %v2982 = vand.u32 %v2729, 65535
      %v2983 = vshra.s32 %v2729, 16
      %v2984 = vcvt.s32.f32 %v2982
      %v2985 = vcvt.s32.f32 %v2983
      %2986 = vmin.xlane.f32.xlu0 %v2985
      %v2987 = vpop.xlane.xlu0 %2986
      %vm2988 = vcmp.eq.f32.partialorder %v2985, %v2987
      %v2989 = vsel %vm2988, %v2984, inf
      %2990 = vmin.xlane.f32.xlu0 %v2989
      %v2991 = vpop.xlane.xlu0 %2990
      %v2992 = vcvt.f32.s32 %v2991
      %v2993 = vcvt.f32.s32 %v2987
      %v2994 = vshll.u32 %v2993, 16
      %v2995 = vadd.s32 %v2994, %v2992
      %v2996 = vand.u32 %v2730, 65535
      %v2997 = vshra.s32 %v2730, 16
      %v2998 = vcvt.s32.f32 %v2996
      %v2999 = vcvt.s32.f32 %v2997
      %3000 = vmin.xlane.f32.xlu0 %v2999
      %v3001 = vpop.xlane.xlu0 %3000
      %vm3002 = vcmp.eq.f32.partialorder %v2999, %v3001
      %v3003 = vsel %vm3002, %v2998, inf
      %3004 = vmin.xlane.f32.xlu0 %v3003
      %v3005 = vpop.xlane.xlu0 %3004
      %v3006 = vcvt.f32.s32 %v3005
      %v3007 = vcvt.f32.s32 %v3001
      %v3008 = vshll.u32 %v3007, 16
      %v3009 = vadd.s32 %v3008, %v3006
      %v3010 = vand.u32 %v2731, 65535
      %v3011 = vshra.s32 %v2731, 16
      %v3012 = vcvt.s32.f32 %v3010
      %v3013 = vcvt.s32.f32 %v3011
      %3014 = vmin.xlane.f32.xlu0 %v3013
      %v3015 = vpop.xlane.xlu0 %3014
      %vm3016 = vcmp.eq.f32.partialorder %v3013, %v3015
      %v3017 = vsel %vm3016, %v3012, inf
      %3018 = vmin.xlane.f32.xlu0 %v3017
      %v3019 = vpop.xlane.xlu0 %3018
      %v3020 = vcvt.f32.s32 %v3019
      %v3021 = vcvt.f32.s32 %v3015
      %v3022 = vshll.u32 %v3021, 16
      %v3023 = vadd.s32 %v3022, %v3020
      %v3024 = vand.u32 %v2732, 65535
      %v3025 = vshra.s32 %v2732, 16
      %v3026 = vcvt.s32.f32 %v3024
      %v3027 = vcvt.s32.f32 %v3025
      %3028 = vmin.xlane.f32.xlu0 %v3027
      %v3029 = vpop.xlane.xlu0 %3028
      %vm3030 = vcmp.eq.f32.partialorder %v3027, %v3029
      %v3031 = vsel %vm3030, %v3026, inf
      %3032 = vmin.xlane.f32.xlu0 %v3031
      %v3033 = vpop.xlane.xlu0 %3032
      %v3034 = vcvt.f32.s32 %v3033
      %v3035 = vcvt.f32.s32 %v3029
      %v3036 = vshll.u32 %v3035, 16
      %v3037 = vadd.s32 %v3036, %v3034
      %v3038 = vand.u32 %v2733, 65535
      %v3039 = vshra.s32 %v2733, 16
      %v3040 = vcvt.s32.f32 %v3038
      %v3041 = vcvt.s32.f32 %v3039
      %3042 = vmin.xlane.f32.xlu0 %v3041
      %v3043 = vpop.xlane.xlu0 %3042
      %vm3044 = vcmp.eq.f32.partialorder %v3041, %v3043
      %v3045 = vsel %vm3044, %v3040, inf
      %3046 = vmin.xlane.f32.xlu0 %v3045
      %v3047 = vpop.xlane.xlu0 %3046
      %v3048 = vcvt.f32.s32 %v3047
      %v3049 = vcvt.f32.s32 %v3043
      %v3050 = vshll.u32 %v3049, 16
      %v3051 = vadd.s32 %v3050, %v3048
      %v3052 = vand.u32 %v2734, 65535
      %v3053 = vshra.s32 %v2734, 16
      %v3054 = vcvt.s32.f32 %v3052
      %v3055 = vcvt.s32.f32 %v3053
      %3056 = vmin.xlane.f32.xlu0 %v3055
      %v3057 = vpop.xlane.xlu0 %3056
      %vm3058 = vcmp.eq.f32.partialorder %v3055, %v3057
      %v3059 = vsel %vm3058, %v3054, inf
      %3060 = vmin.xlane.f32.xlu0 %v3059
      %v3061 = vpop.xlane.xlu0 %3060
      %v3062 = vcvt.f32.s32 %v3061
      %v3063 = vcvt.f32.s32 %v3057
      %v3064 = vshll.u32 %v3063, 16
      %v3065 = vadd.s32 %v3064, %v3062
      %v3066 = vand.u32 %v2735, 65535
      %v3067 = vshra.s32 %v2735, 16
      %v3068 = vcvt.s32.f32 %v3066
      %v3069 = vcvt.s32.f32 %v3067
      %3070 = vmin.xlane.f32.xlu0 %v3069
      %v3071 = vpop.xlane.xlu0 %3070
      %vm3072 = vcmp.eq.f32.partialorder %v3069, %v3071
      %v3073 = vsel %vm3072, %v3068, inf
      %3074 = vmin.xlane.f32.xlu0 %v3073
      %v3075 = vpop.xlane.xlu0 %3074
      %v3076 = vcvt.f32.s32 %v3075
      %v3077 = vcvt.f32.s32 %v3071
      %v3078 = vshll.u32 %v3077, 16
      %v3079 = vadd.s32 %v3078, %v3076
      %v3080 = vand.u32 %v2736, 65535
      %v3081 = vshra.s32 %v2736, 16
      %v3082 = vcvt.s32.f32 %v3080
      %v3083 = vcvt.s32.f32 %v3081
      %3084 = vmin.xlane.f32.xlu0 %v3083
      %v3085 = vpop.xlane.xlu0 %3084
      %vm3086 = vcmp.eq.f32.partialorder %v3083, %v3085
      %v3087 = vsel %vm3086, %v3082, inf
      %3088 = vmin.xlane.f32.xlu0 %v3087
      %v3089 = vpop.xlane.xlu0 %3088
      %v3090 = vcvt.f32.s32 %v3089
      %v3091 = vcvt.f32.s32 %v3085
      %v3092 = vshll.u32 %v3091, 16
      %v3093 = vadd.s32 %v3092, %v3090
      %v3094 = vand.u32 %v2737, 65535
      %v3095 = vshra.s32 %v2737, 16
      %v3096 = vcvt.s32.f32 %v3094
      %v3097 = vcvt.s32.f32 %v3095
      %3098 = vmin.xlane.f32.xlu0 %v3097
      %v3099 = vpop.xlane.xlu0 %3098
      %vm3100 = vcmp.eq.f32.partialorder %v3097, %v3099
      %v3101 = vsel %vm3100, %v3096, inf
      %3102 = vmin.xlane.f32.xlu0 %v3101
      %v3103 = vpop.xlane.xlu0 %3102
      %v3104 = vcvt.f32.s32 %v3103
      %v3105 = vcvt.f32.s32 %v3099
      %v3106 = vshll.u32 %v3105, 16
      %v3107 = vadd.s32 %v3106, %v3104
      %v3108 = vand.u32 %v2738, 65535
      %v3109 = vshra.s32 %v2738, 16
      %v3110 = vcvt.s32.f32 %v3108
      %v3111 = vcvt.s32.f32 %v3109
      %3112 = vmin.xlane.f32.xlu0 %v3111
      %v3113 = vpop.xlane.xlu0 %3112
      %vm3114 = vcmp.eq.f32.partialorder %v3111, %v3113
      %v3115 = vsel %vm3114, %v3110, inf
      %3116 = vmin.xlane.f32.xlu0 %v3115
      %v3117 = vpop.xlane.xlu0 %3116
      %v3118 = vcvt.f32.s32 %v3117
      %v3119 = vcvt.f32.s32 %v3113
      %v3120 = vshll.u32 %v3119, 16
      %v3121 = vadd.s32 %v3120, %v3118
      %v3122 = vand.u32 %v2739, 65535
      %v3123 = vshra.s32 %v2739, 16
      %v3124 = vcvt.s32.f32 %v3122
      %v3125 = vcvt.s32.f32 %v3123
      %3126 = vmin.xlane.f32.xlu0 %v3125
      %v3127 = vpop.xlane.xlu0 %3126
      %vm3128 = vcmp.eq.f32.partialorder %v3125, %v3127
      %v3129 = vsel %vm3128, %v3124, inf
      %3130 = vmin.xlane.f32.xlu0 %v3129
      %v3131 = vpop.xlane.xlu0 %3130
      %v3132 = vcvt.f32.s32 %v3131
      %v3133 = vcvt.f32.s32 %v3127
      %v3134 = vshll.u32 %v3133, 16
      %v3135 = vadd.s32 %v3134, %v3132
      %v3136 = vand.u32 %v2740, 65535
      %v3137 = vshra.s32 %v2740, 16
      %v3138 = vcvt.s32.f32 %v3136
      %v3139 = vcvt.s32.f32 %v3137
      %3140 = vmin.xlane.f32.xlu0 %v3139
      %v3141 = vpop.xlane.xlu0 %3140
      %vm3142 = vcmp.eq.f32.partialorder %v3139, %v3141
      %v3143 = vsel %vm3142, %v3138, inf
      %3144 = vmin.xlane.f32.xlu0 %v3143
      %v3145 = vpop.xlane.xlu0 %3144
      %v3146 = vcvt.f32.s32 %v3145
      %v3147 = vcvt.f32.s32 %v3141
      %v3148 = vshll.u32 %v3147, 16
      %v3149 = vadd.s32 %v3148, %v3146
      %v3150 = vand.u32 %v2741, 65535
      %v3151 = vshra.s32 %v2741, 16
      %v3152 = vcvt.s32.f32 %v3150
      %v3153 = vcvt.s32.f32 %v3151
      %3154 = vmin.xlane.f32.xlu0 %v3153
      %v3155 = vpop.xlane.xlu0 %3154
      %vm3156 = vcmp.eq.f32.partialorder %v3153, %v3155
      %v3157 = vsel %vm3156, %v3152, inf
      %3158 = vmin.xlane.f32.xlu0 %v3157
      %v3159 = vpop.xlane.xlu0 %3158
      %v3160 = vcvt.f32.s32 %v3159
      %v3161 = vcvt.f32.s32 %v3155
      %v3162 = vshll.u32 %v3161, 16
      %v3163 = vadd.s32 %v3162, %v3160
      %v3164 = vand.u32 %v2742, 65535
      %v3165 = vshra.s32 %v2742, 16
      %v3166 = vcvt.s32.f32 %v3164
      %v3167 = vcvt.s32.f32 %v3165
      %3168 = vmin.xlane.f32.xlu0 %v3167
      %v3169 = vpop.xlane.xlu0 %3168
      %vm3170 = vcmp.eq.f32.partialorder %v3167, %v3169
      %v3171 = vsel %vm3170, %v3166, inf
      %3172 = vmin.xlane.f32.xlu0 %v3171
      %v3173 = vpop.xlane.xlu0 %3172
      %v3174 = vcvt.f32.s32 %v3173
      %v3175 = vcvt.f32.s32 %v3169
      %v3176 = vshll.u32 %v3175, 16
      %v3177 = vadd.s32 %v3176, %v3174
      %v3178 = vand.u32 %v2743, 65535
      %v3179 = vshra.s32 %v2743, 16
      %v3180 = vcvt.s32.f32 %v3178
      %v3181 = vcvt.s32.f32 %v3179
      %3182 = vmin.xlane.f32.xlu0 %v3181
      %v3183 = vpop.xlane.xlu0 %3182
      %vm3184 = vcmp.eq.f32.partialorder %v3181, %v3183
      %v3185 = vsel %vm3184, %v3180, inf
      %3186 = vmin.xlane.f32.xlu0 %v3185
      %v3187 = vpop.xlane.xlu0 %3186
      %v3188 = vcvt.f32.s32 %v3187
      %v3189 = vcvt.f32.s32 %v3183
      %v3190 = vshll.u32 %v3189, 16
      %v3191 = vadd.s32 %v3190, %v3188
      %vm3192 = vcmp.eq.s32.totalorder %v1906, %v2757
      %vm3193 = vcmp.eq.s32.totalorder %v1906, %v2771
      %vm3194 = vcmp.eq.s32.totalorder %v1906, %v2785
      %vm3195 = vcmp.eq.s32.totalorder %v1906, %v2799
      %vm3196 = vcmp.eq.s32.totalorder %v1906, %v2813
      %vm3197 = vcmp.eq.s32.totalorder %v1906, %v2827
      %vm3198 = vcmp.eq.s32.totalorder %v1906, %v2841
      %vm3199 = vcmp.eq.s32.totalorder %v1906, %v2855
      %vm3200 = vcmp.eq.s32.totalorder %v1906, %v2869
      %vm3201 = vcmp.eq.s32.totalorder %v1906, %v2883
      %vm3202 = vcmp.eq.s32.totalorder %v1906, %v2897
      %vm3203 = vcmp.eq.s32.totalorder %v1906, %v2911
      %vm3204 = vcmp.eq.s32.totalorder %v1906, %v2925
      %vm3205 = vcmp.eq.s32.totalorder %v1906, %v2939
      %vm3206 = vcmp.eq.s32.totalorder %v1906, %v2953
      %vm3207 = vcmp.eq.s32.totalorder %v1906, %v2967
      %vm3208 = vcmp.eq.s32.totalorder %v1906, %v2981
      %vm3209 = vcmp.eq.s32.totalorder %v1906, %v2995
      %vm3210 = vcmp.eq.s32.totalorder %v1906, %v3009
      %vm3211 = vcmp.eq.s32.totalorder %v1906, %v3023
      %vm3212 = vcmp.eq.s32.totalorder %v1906, %v3037
      %vm3213 = vcmp.eq.s32.totalorder %v1906, %v3051
      %vm3214 = vcmp.eq.s32.totalorder %v1906, %v3065
      %vm3215 = vcmp.eq.s32.totalorder %v1906, %v3079
      %vm3216 = vcmp.eq.s32.totalorder %v1906, %v3093
      %vm3217 = vcmp.eq.s32.totalorder %v1906, %v3107
      %vm3218 = vcmp.eq.s32.totalorder %v1906, %v3121
      %vm3219 = vcmp.eq.s32.totalorder %v1906, %v3135
      %vm3220 = vcmp.eq.s32.totalorder %v1906, %v3149
      %vm3221 = vcmp.eq.s32.totalorder %v1906, %v3163
      %vm3222 = vcmp.eq.s32.totalorder %v1906, %v3177
      %vm3223 = vcmp.eq.s32.totalorder %v1906, %v3191
      %v3224 = vsel %vm3192, 1, 0
      %v3225 = vsel %vm3193, 1, 0
      %v3226 = vsel %vm3194, 1, 0
      %v3227 = vsel %vm3195, 1, 0
      %v3228 = vsel %vm3196, 1, 0
      %v3229 = vsel %vm3197, 1, 0
      %v3230 = vsel %vm3198, 1, 0
      %v3231 = vsel %vm3199, 1, 0
      %v3232 = vsel %vm3200, 1, 0
      %v3233 = vsel %vm3201, 1, 0
      %v3234 = vsel %vm3202, 1, 0
      %v3235 = vsel %vm3203, 1, 0
      %v3236 = vsel %vm3204, 1, 0
      %v3237 = vsel %vm3205, 1, 0
      %v3238 = vsel %vm3206, 1, 0
      %v3239 = vsel %vm3207, 1, 0
      %v3240 = vsel %vm3208, 1, 0
      %v3241 = vsel %vm3209, 1, 0
      %v3242 = vsel %vm3210, 1, 0
      %v3243 = vsel %vm3211, 1, 0
      %v3244 = vsel %vm3212, 1, 0
      %v3245 = vsel %vm3213, 1, 0
      %v3246 = vsel %vm3214, 1, 0
      %v3247 = vsel %vm3215, 1, 0
      %v3248 = vsel %vm3216, 1, 0
      %v3249 = vsel %vm3217, 1, 0
      %v3250 = vsel %vm3218, 1, 0
      %v3251 = vsel %vm3219, 1, 0
      %v3252 = vsel %vm3220, 1, 0
      %v3253 = vsel %vm3221, 1, 0
      %v3254 = vsel %vm3222, 1, 0
      %v3255 = vsel %vm3223, 1, 0
      %v3256 = vcvt.s32.f32 %v3224
      %v3257 = vcvt.s32.f32 %v3225
      %v3258 = vcvt.s32.f32 %v3226
      %v3259 = vcvt.s32.f32 %v3227
      %v3260 = vcvt.s32.f32 %v3228
      %v3261 = vcvt.s32.f32 %v3229
      %v3262 = vcvt.s32.f32 %v3230
      %v3263 = vcvt.s32.f32 %v3231
      %v3264 = vcvt.s32.f32 %v3232
      %v3265 = vcvt.s32.f32 %v3233
      %v3266 = vcvt.s32.f32 %v3234
      %v3267 = vcvt.s32.f32 %v3235
      %v3268 = vcvt.s32.f32 %v3236
      %v3269 = vcvt.s32.f32 %v3237
      %v3270 = vcvt.s32.f32 %v3238
      %v3271 = vcvt.s32.f32 %v3239
      %v3272 = vcvt.s32.f32 %v3240
      %v3273 = vcvt.s32.f32 %v3241
      %v3274 = vcvt.s32.f32 %v3242
      %v3275 = vcvt.s32.f32 %v3243
      %v3276 = vcvt.s32.f32 %v3244
      %v3277 = vcvt.s32.f32 %v3245
      %v3278 = vcvt.s32.f32 %v3246
      %v3279 = vcvt.s32.f32 %v3247
      %v3280 = vcvt.s32.f32 %v3248
      %v3281 = vcvt.s32.f32 %v3249
      %v3282 = vcvt.s32.f32 %v3250
      %v3283 = vcvt.s32.f32 %v3251
      %v3284 = vcvt.s32.f32 %v3252
      %v3285 = vcvt.s32.f32 %v3253
      %v3286 = vcvt.s32.f32 %v3254
      %v3287 = vcvt.s32.f32 %v3255
      %v3288 = vadd.f32 %v3256, %v3257
      %v3289 = vadd.f32 %v3288, %v3258
      %v3290 = vadd.f32 %v3289, %v3259
      %v3291 = vadd.f32 %v3290, %v3260
      %v3292 = vadd.f32 %v3291, %v3261
      %v3293 = vadd.f32 %v3292, %v3262
      %v3294 = vadd.f32 %v3293, %v3263
      %v3295 = vadd.f32 %v3294, %v3264
      %v3296 = vadd.f32 %v3295, %v3265
      %v3297 = vadd.f32 %v3296, %v3266
      %v3298 = vadd.f32 %v3297, %v3267
      %v3299 = vadd.f32 %v3298, %v3268
      %v3300 = vadd.f32 %v3299, %v3269
      %v3301 = vadd.f32 %v3300, %v3270
      %v3302 = vadd.f32 %v3301, %v3271
      %v3303 = vadd.f32 %v3302, %v3272
      %v3304 = vadd.f32 %v3303, %v3273
      %v3305 = vadd.f32 %v3304, %v3274
      %v3306 = vadd.f32 %v3305, %v3275
      %v3307 = vadd.f32 %v3306, %v3276
      %v3308 = vadd.f32 %v3307, %v3277
      %v3309 = vadd.f32 %v3308, %v3278
      %v3310 = vadd.f32 %v3309, %v3279
      %v3311 = vadd.f32 %v3310, %v3280
      %v3312 = vadd.f32 %v3311, %v3281
      %v3313 = vadd.f32 %v3312, %v3282
      %v3314 = vadd.f32 %v3313, %v3283
      %v3315 = vadd.f32 %v3314, %v3284
      %v3316 = vadd.f32 %v3315, %v3285
      %v3317 = vadd.f32 %v3316, %v3286
      %v3318 = vadd.f32 %v3317, %v3287
      %v3319 = vrot.slane %v3318, 4
      %v3320 = vadd.f32 %v3318, %v3319
      %v3321 = vrot.slane %v3320, 2
      %v3322 = vadd.f32 %v3320, %v3321
      %v3323 = vrot.slane %v3322, 1
      %v3324 = vadd.f32 %v3322, %v3323
      %v3325 = vld [vmem:[%s7] sm:$0xff]
      %v3326 = vld [vmem:[%s7 + $0x8] sm:$0xff]
      %v3327 = vld [vmem:[%s7 + $0x10] sm:$0xff]
      %v3328 = vld [vmem:[%s7 + $0x18] sm:$0xff]
      %v3329 = vld [vmem:[%s7 + $0x20] sm:$0xff]
      %v3330 = vld [vmem:[%s7 + $0x28] sm:$0xff]
      %v3331 = vld [vmem:[%s7 + $0x30] sm:$0xff]
      %v3332 = vld [vmem:[%s7 + $0x38] sm:$0xff]
      %v3333 = vld [vmem:[%s7 + $0x40] sm:$0xff]
      %v3334 = vld [vmem:[%s7 + $0x48] sm:$0xff]
      %v3335 = vld [vmem:[%s7 + $0x50] sm:$0xff]
      %v3336 = vld [vmem:[%s7 + $0x58] sm:$0xff]
      %v3337 = vld [vmem:[%s7 + $0x60] sm:$0xff]
      %v3338 = vld [vmem:[%s7 + $0x68] sm:$0xff]
      %v3339 = vld [vmem:[%s7 + $0x70] sm:$0xff]
      %v3340 = vld [vmem:[%s7 + $0x78] sm:$0xff]
      %v3341 = vld [vmem:[%s7 + $0x80] sm:$0xff]
      %v3342 = vld [vmem:[%s7 + $0x88] sm:$0xff]
      %v3343 = vld [vmem:[%s7 + $0x90] sm:$0xff]
      %v3344 = vld [vmem:[%s7 + $0x98] sm:$0xff]
      %v3345 = vld [vmem:[%s7 + $0xa0] sm:$0xff]
      %v3346 = vld [vmem:[%s7 + $0xa8] sm:$0xff]
      %v3347 = vld [vmem:[%s7 + $0xb0] sm:$0xff]
      %v3348 = vld [vmem:[%s7 + $0xb8] sm:$0xff]
      %v3349 = vld [vmem:[%s7 + $0xc0] sm:$0xff]
      %v3350 = vld [vmem:[%s7 + $0xc8] sm:$0xff]
      %v3351 = vld [vmem:[%s7 + $0xd0] sm:$0xff]
      %v3352 = vld [vmem:[%s7 + $0xd8] sm:$0xff]
      %v3353 = vld [vmem:[%s7 + $0xe0] sm:$0xff]
      %v3354 = vld [vmem:[%s7 + $0xe8] sm:$0xff]
      %v3355 = vld [vmem:[%s7 + $0xf0] sm:$0xff]
      %v3356 = vld [vmem:[%s7 + $0xf8] sm:$0xff]
      %3357 = vmatprep.subr.mxu0 0.0
      %3358 = vmatpush1.msra.mxu0 %v3340
      %3359 = vmatprep.subr.mxu0 0.0
      %3360 = vmatpush1.msra.mxu0 %v3339
      %3361 = vmatprep.subr.mxu0 0.0
      %3362 = vmatpush1.msra.mxu0 %v3338
      %3363 = vmatprep.subr.mxu0 0.0
      %3364 = vmatpush1.msra.mxu0 %v3337
      %3365 = vmatprep.subr.mxu0 0.0
      %3366 = vmatpush1.msra.mxu0 %v3336
      %3367 = vmatprep.subr.mxu0 0.0
      %3368 = vmatpush1.msra.mxu0 %v3335
      %3369 = vmatprep.subr.mxu0 0.0
      %3370 = vmatpush1.msra.mxu0 %v3334
      %3371 = vmatprep.subr.mxu0 0.0
      %3372 = vmatpush1.msra.mxu0 %v3333
      %3373 = vmatprep.subr.mxu0 0.0
      %3374 = vmatpush1.msra.mxu0 %v3332
      %3375 = vmatprep.subr.mxu0 0.0
      %3376 = vmatpush1.msra.mxu0 %v3331
      %3377 = vmatprep.subr.mxu0 0.0
      %3378 = vmatpush1.msra.mxu0 %v3330
      %3379 = vmatprep.subr.mxu0 0.0
      %3380 = vmatpush1.msra.mxu0 %v3329
      %3381 = vmatprep.subr.mxu0 0.0
      %3382 = vmatpush1.msra.mxu0 %v3328
      %3383 = vmatprep.subr.mxu0 0.0
      %3384 = vmatpush1.msra.mxu0 %v3327
      %3385 = vmatprep.subr.mxu0 0.0
      %3386 = vmatpush1.msra.mxu0 %v3326
      %3387 = vmatprep.subr.mxu0 0.0
      %3388 = vmatpush1.msra.mxu0 %v3325
      %3389 = vmatprep.subr.mxu0 0.0
      %3390 = vmatpush2.msra.mxu0 %v3356
      %3391 = vmatprep.subr.mxu0 0.0
      %3392 = vmatpush2.msra.mxu0 %v3355
      %3393 = vmatprep.subr.mxu0 0.0
      %3394 = vmatpush2.msra.mxu0 %v3354
      %3395 = vmatprep.subr.mxu0 0.0
      %3396 = vmatpush2.msra.mxu0 %v3353
      %3397 = vmatprep.subr.mxu0 0.0
      %3398 = vmatpush2.msra.mxu0 %v3352
      %3399 = vmatprep.subr.mxu0 0.0
      %3400 = vmatpush2.msra.mxu0 %v3351
      %3401 = vmatprep.subr.mxu0 0.0
      %3402 = vmatpush2.msra.mxu0 %v3350
      %3403 = vmatprep.subr.mxu0 0.0
      %3404 = vmatpush2.msra.mxu0 %v3349
      %3405 = vmatprep.subr.mxu0 0.0
      %3406 = vmatpush2.msra.mxu0 %v3348
      %3407 = vmatprep.subr.mxu0 0.0
      %3408 = vmatpush2.msra.mxu0 %v3347
      %3409 = vmatprep.subr.mxu0 0.0
      %3410 = vmatpush2.msra.mxu0 %v3346
      %3411 = vmatprep.subr.mxu0 0.0
      %3412 = vmatpush2.msra.mxu0 %v3345
      %3413 = vmatprep.subr.mxu0 0.0
      %3414 = vmatpush2.msra.mxu0 %v3344
      %3415 = vmatprep.subr.mxu0 0.0
      %3416 = vmatpush2.msra.mxu0 %v3343
      %3417 = vmatprep.subr.mxu0 0.0
      %3418 = vmatpush2.msra.mxu0 %v3342
      %3419 = vmatprep.subr.mxu0 0.0
      %3420 = vmatpush2.msra.mxu0 %v3341
      %3421 = vmatprep.mubr.f32.mxu0 %v3256
      %3422 = vmatmul.mubr.f32.gmra.mxu0 %v2547
      %v3423 = vpop.f32.mrf.mxu0
      %v3424 = vadd.f32 0.0, %v3423
      %v3425 = vpop.f32.mrf.mxu0
      %3426 = vmatprep.mubr.f32.mxu0 %v3257
      %3427 = vmatmul.mubr.f32.gmra.mxu0 %v2548
      %v3428 = vpop.f32.mrf.mxu0
      %v3429 = vadd.f32 0.0, %v3428
      %v3430 = vpop.f32.mrf.mxu0
      %3431 = vmatprep.mubr.f32.mxu0 %v3258
      %3432 = vmatmul.mubr.f32.gmra.mxu0 %v2549
      %v3433 = vpop.f32.mrf.mxu0
      %v3434 = vadd.f32 0.0, %v3433
      %v3435 = vpop.f32.mrf.mxu0
      %3436 = vmatprep.mubr.f32.mxu0 %v3259
      %3437 = vmatmul.mubr.f32.gmra.mxu0 %v2550
      %v3438 = vpop.f32.mrf.mxu0
      %v3439 = vadd.f32 0.0, %v3438
      %v3440 = vpop.f32.mrf.mxu0
      %3441 = vmatprep.mubr.f32.mxu0 %v3260
      %3442 = vmatmul.mubr.f32.gmra.mxu0 %v2551
      %v3443 = vpop.f32.mrf.mxu0
      %v3444 = vadd.f32 0.0, %v3443
      %v3445 = vpop.f32.mrf.mxu0
      %3446 = vmatprep.mubr.f32.mxu0 %v3261
      %3447 = vmatmul.mubr.f32.gmra.mxu0 %v2552
      %v3448 = vpop.f32.mrf.mxu0
      %v3449 = vadd.f32 0.0, %v3448
      %v3450 = vpop.f32.mrf.mxu0
      %3451 = vmatprep.mubr.f32.mxu0 %v3262
      %3452 = vmatmul.mubr.f32.gmra.mxu0 %v2553
      %v3453 = vpop.f32.mrf.mxu0
      %v3454 = vadd.f32 0.0, %v3453
      %v3455 = vpop.f32.mrf.mxu0
      %3456 = vmatprep.mubr.f32.mxu0 %v3263
      %3457 = vmatmul.mubr.f32.gmra.mxu0 %v2554
      %v3458 = vpop.f32.mrf.mxu0
      %v3459 = vadd.f32 0.0, %v3458
      %v3460 = vpop.f32.mrf.mxu0
      %3461 = vmatprep.mubr.f32.mxu0 %v3264
      %3462 = vmatmul.mubr.f32.gmra.mxu0 %v2555
      %v3463 = vpop.f32.mrf.mxu0
      %v3464 = vadd.f32 0.0, %v3463
      %v3465 = vpop.f32.mrf.mxu0
      %3466 = vmatprep.mubr.f32.mxu0 %v3265
      %3467 = vmatmul.mubr.f32.gmra.mxu0 %v2556
      %v3468 = vpop.f32.mrf.mxu0
      %v3469 = vadd.f32 0.0, %v3468
      %v3470 = vpop.f32.mrf.mxu0
      %3471 = vmatprep.mubr.f32.mxu0 %v3266
      %3472 = vmatmul.mubr.f32.gmra.mxu0 %v2557
      %v3473 = vpop.f32.mrf.mxu0
      %v3474 = vadd.f32 0.0, %v3473
      %v3475 = vpop.f32.mrf.mxu0
      %3476 = vmatprep.mubr.f32.mxu0 %v3267
      %3477 = vmatmul.mubr.f32.gmra.mxu0 %v2558
      %v3478 = vpop.f32.mrf.mxu0
      %v3479 = vadd.f32 0.0, %v3478
      %v3480 = vpop.f32.mrf.mxu0
      %3481 = vmatprep.mubr.f32.mxu0 %v3268
      %3482 = vmatmul.mubr.f32.gmra.mxu0 %v2559
      %v3483 = vpop.f32.mrf.mxu0
      %v3484 = vadd.f32 0.0, %v3483
      %v3485 = vpop.f32.mrf.mxu0
      %3486 = vmatprep.mubr.f32.mxu0 %v3269
      %3487 = vmatmul.mubr.f32.gmra.mxu0 %v2560
      %v3488 = vpop.f32.mrf.mxu0
      %v3489 = vadd.f32 0.0, %v3488
      %v3490 = vpop.f32.mrf.mxu0
      %3491 = vmatprep.mubr.f32.mxu0 %v3270
      %3492 = vmatmul.mubr.f32.gmra.mxu0 %v2561
      %v3493 = vpop.f32.mrf.mxu0
      %v3494 = vadd.f32 0.0, %v3493
      %v3495 = vpop.f32.mrf.mxu0
      %3496 = vmatprep.mubr.f32.mxu0 %v3271
      %3497 = vmatmul.mubr.f32.gmra.mxu0 %v2562
      %v3498 = vpop.f32.mrf.mxu0
      %v3499 = vadd.f32 0.0, %v3498
      %v3500 = vpop.f32.mrf.mxu0
      %3501 = vmatprep.mubr.f32.mxu0 %v3272
      %3502 = vmatmul.mubr.f32.gmra.mxu0 %v2563
      %v3503 = vpop.f32.mrf.mxu0
      %v3504 = vadd.f32 0.0, %v3503
      %v3505 = vpop.f32.mrf.mxu0
      %3506 = vmatprep.mubr.f32.mxu0 %v3273
      %3507 = vmatmul.mubr.f32.gmra.mxu0 %v2564
      %v3508 = vpop.f32.mrf.mxu0
      %v3509 = vadd.f32 0.0, %v3508
      %v3510 = vpop.f32.mrf.mxu0
      %3511 = vmatprep.mubr.f32.mxu0 %v3274
      %3512 = vmatmul.mubr.f32.gmra.mxu0 %v2565
      %v3513 = vpop.f32.mrf.mxu0
      %v3514 = vadd.f32 0.0, %v3513
      %v3515 = vpop.f32.mrf.mxu0
      %3516 = vmatprep.mubr.f32.mxu0 %v3275
      %3517 = vmatmul.mubr.f32.gmra.mxu0 %v2566
      %v3518 = vpop.f32.mrf.mxu0
      %v3519 = vadd.f32 0.0, %v3518
      %v3520 = vpop.f32.mrf.mxu0
      %3521 = vmatprep.mubr.f32.mxu0 %v3276
      %3522 = vmatmul.mubr.f32.gmra.mxu0 %v2567
      %v3523 = vpop.f32.mrf.mxu0
      %v3524 = vadd.f32 0.0, %v3523
      %v3525 = vpop.f32.mrf.mxu0
      %3526 = vmatprep.mubr.f32.mxu0 %v3277
      %3527 = vmatmul.mubr.f32.gmra.mxu0 %v2568
      %v3528 = vpop.f32.mrf.mxu0
      %v3529 = vadd.f32 0.0, %v3528
      %v3530 = vpop.f32.mrf.mxu0
      %3531 = vmatprep.mubr.f32.mxu0 %v3278
      %3532 = vmatmul.mubr.f32.gmra.mxu0 %v2569
      %v3533 = vpop.f32.mrf.mxu0
      %v3534 = vadd.f32 0.0, %v3533
      %v3535 = vpop.f32.mrf.mxu0
      %3536 = vmatprep.mubr.f32.mxu0 %v3279
      %3537 = vmatmul.mubr.f32.gmra.mxu0 %v2570
      %v3538 = vpop.f32.mrf.mxu0
      %v3539 = vadd.f32 0.0, %v3538
      %v3540 = vpop.f32.mrf.mxu0
      %3541 = vmatprep.mubr.f32.mxu0 %v3280
      %3542 = vmatmul.mubr.f32.gmra.mxu0 %v2571
      %v3543 = vpop.f32.mrf.mxu0
      %v3544 = vadd.f32 0.0, %v3543
      %v3545 = vpop.f32.mrf.mxu0
      %3546 = vmatprep.mubr.f32.mxu0 %v3281
      %3547 = vmatmul.mubr.f32.gmra.mxu0 %v2572
      %v3548 = vpop.f32.mrf.mxu0
      %v3549 = vadd.f32 0.0, %v3548
      %v3550 = vpop.f32.mrf.mxu0
      %3551 = vmatprep.mubr.f32.mxu0 %v3282
      %3552 = vmatmul.mubr.f32.gmra.mxu0 %v2573
      %v3553 = vpop.f32.mrf.mxu0
      %v3554 = vadd.f32 0.0, %v3553
      %v3555 = vpop.f32.mrf.mxu0
      %3556 = vmatprep.mubr.f32.mxu0 %v3283
      %3557 = vmatmul.mubr.f32.gmra.mxu0 %v2574
      %v3558 = vpop.f32.mrf.mxu0
      %v3559 = vadd.f32 0.0, %v3558
      %v3560 = vpop.f32.mrf.mxu0
      %3561 = vmatprep.mubr.f32.mxu0 %v3284
      %3562 = vmatmul.mubr.f32.gmra.mxu0 %v2575
      %v3563 = vpop.f32.mrf.mxu0
      %v3564 = vadd.f32 0.0, %v3563
      %v3565 = vpop.f32.mrf.mxu0
      %3566 = vmatprep.mubr.f32.mxu0 %v3285
      %3567 = vmatmul.mubr.f32.gmra.mxu0 %v2576
      %v3568 = vpop.f32.mrf.mxu0
      %v3569 = vadd.f32 0.0, %v3568
      %v3570 = vpop.f32.mrf.mxu0
      %3571 = vmatprep.mubr.f32.mxu0 %v3286
      %3572 = vmatmul.mubr.f32.gmra.mxu0 %v2577
      %v3573 = vpop.f32.mrf.mxu0
      %v3574 = vadd.f32 0.0, %v3573
      %v3575 = vpop.f32.mrf.mxu0
      %3576 = vmatprep.mubr.f32.mxu0 %v3287
      %3577 = vmatmul.mubr.f32.gmra.mxu0 %v2578
      %v3578 = vpop.f32.mrf.mxu0
      %v3579 = vadd.f32 0.0, %v3578
      %v3580 = vpop.f32.mrf.mxu0
      %3581 = vdwg.mxu0
      %v3582 = vpack.c.bf16 %v3429, %v3424
      %v3583 = vpack.c.bf16 %v3439, %v3434
      %v3584 = vpack.c.bf16 %v3449, %v3444
      %v3585 = vpack.c.bf16 %v3459, %v3454
      %v3586 = vpack.c.bf16 %v3469, %v3464
      %v3587 = vpack.c.bf16 %v3479, %v3474
      %v3588 = vpack.c.bf16 %v3489, %v3484
      %v3589 = vpack.c.bf16 %v3499, %v3494
      %v3590 = vpack.c.bf16 %v3509, %v3504
      %v3591 = vpack.c.bf16 %v3519, %v3514
      %v3592 = vpack.c.bf16 %v3529, %v3524
      %v3593 = vpack.c.bf16 %v3539, %v3534
      %v3594 = vpack.c.bf16 %v3549, %v3544
      %v3595 = vpack.c.bf16 %v3559, %v3554
      %v3596 = vpack.c.bf16 %v3569, %v3564
      %v3597 = vpack.c.bf16 %v3579, %v3574
      %v3598 = vld [vmem:[%s8] sm:$0xf]
      %v3599 = vld [vmem:[%s8 + $0x4] sm:$0xf]
      %v3600 = vld [vmem:[%s8 + $0x8] sm:$0xf]
      %v3601 = vld [vmem:[%s8 + $0xc] sm:$0xf]
      %v3602 = vld [vmem:[%s9] sm:$0x1]
      %v3604 = vlaneseq
      %v3605 = vshrl.u32 %v3604, 7
      %v3606 = vsub.s32 0, %v3605
      %v3607 = vrot.slane %v3602, %v3606
      %v3613 = vunpack.c.l.b16 %v3598
      %v3614 = vunpack.c.l.b16 %v3599
      %v3615 = vunpack.c.l.b16 %v3600
      %v3616 = vunpack.c.l.b16 %v3601
      %v3617 = vpack.c.b16 %v3614, %v3613
      %v3618 = vpack.c.b16 %v3616, %v3615
      %v3622 = vsel %vm577, %v3582, 0
      %v3625 = vsel %vm577, %v3583, 0
      %v3628 = vsel %vm577, %v3584, 0
      %v3631 = vsel %vm577, %v3585, 0
      %v3634 = vsel %vm577, %v3586, 0
      %v3637 = vsel %vm577, %v3587, 0
      %v3640 = vsel %vm577, %v3588, 0
      %v3643 = vsel %vm577, %v3589, 0
      %v3646 = vsel %vm577, %v3590, 0
      %v3649 = vsel %vm577, %v3591, 0
      %v3652 = vsel %vm577, %v3592, 0
      %v3655 = vsel %vm577, %v3593, 0
      %v3658 = vsel %vm577, %v3594, 0
      %v3661 = vsel %vm577, %v3595, 0
      %v3664 = vsel %vm577, %v3596, 0
      %v3667 = vsel %vm577, %v3597, 0
      %3669 = vmatprep.subr.bf16.mxu0 0
      %3670 = vmatpush1.bf16.msra.mxu0 0
      %3671 = vmatprep.subr.bf16.mxu0 0
      %3672 = vmatpush1.bf16.msra.mxu0 0
      %3673 = vmatprep.subr.bf16.mxu0 0
      %3674 = vmatpush1.bf16.msra.mxu0 0
      %3675 = vmatprep.subr.bf16.mxu0 0
      %3676 = vmatpush1.bf16.msra.mxu0 0
      %3677 = vmatprep.subr.bf16.mxu0 0
      %3678 = vmatpush1.bf16.msra.mxu0 0
      %3679 = vmatprep.subr.bf16.mxu0 0
      %3680 = vmatpush1.bf16.msra.mxu0 0
      %3681 = vmatprep.subr.bf16.mxu0 0
      %3682 = vmatpush1.bf16.msra.mxu0 %v3618
      %3683 = vmatprep.subr.bf16.mxu0 0
      %3684 = vmatpush1.bf16.msra.mxu0 %v3617
      %3685 = vmatprep.subr.bf16.mxu0 0
      %3686 = vmatpush2.bf16.msra.mxu0 0
      %3687 = vmatprep.subr.bf16.mxu0 0
      %3688 = vmatpush2.bf16.msra.mxu0 0
      %3689 = vmatprep.subr.bf16.mxu0 0
      %3690 = vmatpush2.bf16.msra.mxu0 0
      %3691 = vmatprep.subr.bf16.mxu0 0
      %3692 = vmatpush2.bf16.msra.mxu0 0
      %3693 = vmatprep.subr.bf16.mxu0 0
      %3694 = vmatpush2.bf16.msra.mxu0 0
      %3695 = vmatprep.subr.bf16.mxu0 0
      %3696 = vmatpush2.bf16.msra.mxu0 0
      %3697 = vmatprep.subr.bf16.mxu0 0
      %3698 = vmatpush2.bf16.msra.mxu0 0
      %3699 = vmatprep.subr.bf16.mxu0 0
      %3700 = vmatpush2.bf16.msra.mxu0 0
      %3701 = vmatprep.mubr.bf16.mxu0 0
      %3702 = vmatmul.mubr.bf16.gmra.mxu0 %v3622
      %v3703 = vpop.f32.mrf.mxu0
      %v3704 = vadd.f32 %v3607, %v3703
      %v3705 = vpop.f32.mrf.mxu0
      %v3706 = vpop.f32.mrf.mxu0
      %v3707 = vadd.f32 %v3607, %v3706
      %v3708 = vpop.f32.mrf.mxu0
      %3709 = vmatprep.mubr.bf16.mxu0 0
      %3710 = vmatmul.mubr.bf16.gmra.mxu0 %v3625
      %v3711 = vpop.f32.mrf.mxu0
      %v3712 = vadd.f32 %v3607, %v3711
      %v3713 = vpop.f32.mrf.mxu0
      %v3714 = vpop.f32.mrf.mxu0
      %v3715 = vadd.f32 %v3607, %v3714
      %v3716 = vpop.f32.mrf.mxu0
      %3717 = vmatprep.mubr.bf16.mxu0 0
      %3718 = vmatmul.mubr.bf16.gmra.mxu0 %v3628
      %v3719 = vpop.f32.mrf.mxu0
      %v3720 = vadd.f32 %v3607, %v3719
      %v3721 = vpop.f32.mrf.mxu0
      %v3722 = vpop.f32.mrf.mxu0
      %v3723 = vadd.f32 %v3607, %v3722
      %v3724 = vpop.f32.mrf.mxu0
      %3725 = vmatprep.mubr.bf16.mxu0 0
      %3726 = vmatmul.mubr.bf16.gmra.mxu0 %v3631
      %v3727 = vpop.f32.mrf.mxu0
      %v3728 = vadd.f32 %v3607, %v3727
      %v3729 = vpop.f32.mrf.mxu0
      %v3730 = vpop.f32.mrf.mxu0
      %v3731 = vadd.f32 %v3607, %v3730
      %v3732 = vpop.f32.mrf.mxu0
      %3733 = vmatprep.mubr.bf16.mxu0 0
      %3734 = vmatmul.mubr.bf16.gmra.mxu0 %v3634
      %v3735 = vpop.f32.mrf.mxu0
      %v3736 = vadd.f32 %v3607, %v3735
      %v3737 = vpop.f32.mrf.mxu0
      %v3738 = vpop.f32.mrf.mxu0
      %v3739 = vadd.f32 %v3607, %v3738
      %v3740 = vpop.f32.mrf.mxu0
      %3741 = vmatprep.mubr.bf16.mxu0 0
      %3742 = vmatmul.mubr.bf16.gmra.mxu0 %v3637
      %v3743 = vpop.f32.mrf.mxu0
      %v3744 = vadd.f32 %v3607, %v3743
      %v3745 = vpop.f32.mrf.mxu0
      %v3746 = vpop.f32.mrf.mxu0
      %v3747 = vadd.f32 %v3607, %v3746
      %v3748 = vpop.f32.mrf.mxu0
      %3749 = vmatprep.mubr.bf16.mxu0 0
      %3750 = vmatmul.mubr.bf16.gmra.mxu0 %v3640
      %v3751 = vpop.f32.mrf.mxu0
      %v3752 = vadd.f32 %v3607, %v3751
      %v3753 = vpop.f32.mrf.mxu0
      %v3754 = vpop.f32.mrf.mxu0
      %v3755 = vadd.f32 %v3607, %v3754
      %v3756 = vpop.f32.mrf.mxu0
      %3757 = vmatprep.mubr.bf16.mxu0 0
      %3758 = vmatmul.mubr.bf16.gmra.mxu0 %v3643
      %v3759 = vpop.f32.mrf.mxu0
      %v3760 = vadd.f32 %v3607, %v3759
      %v3761 = vpop.f32.mrf.mxu0
      %v3762 = vpop.f32.mrf.mxu0
      %v3763 = vadd.f32 %v3607, %v3762
      %v3764 = vpop.f32.mrf.mxu0
      %3765 = vmatprep.mubr.bf16.mxu0 0
      %3766 = vmatmul.mubr.bf16.gmra.mxu0 %v3646
      %v3767 = vpop.f32.mrf.mxu0
      %v3768 = vadd.f32 %v3607, %v3767
      %v3769 = vpop.f32.mrf.mxu0
      %v3770 = vpop.f32.mrf.mxu0
      %v3771 = vadd.f32 %v3607, %v3770
      %v3772 = vpop.f32.mrf.mxu0
      %3773 = vmatprep.mubr.bf16.mxu0 0
      %3774 = vmatmul.mubr.bf16.gmra.mxu0 %v3649
      %v3775 = vpop.f32.mrf.mxu0
      %v3776 = vadd.f32 %v3607, %v3775
      %v3777 = vpop.f32.mrf.mxu0
      %v3778 = vpop.f32.mrf.mxu0
      %v3779 = vadd.f32 %v3607, %v3778
      %v3780 = vpop.f32.mrf.mxu0
      %3781 = vmatprep.mubr.bf16.mxu0 0
      %3782 = vmatmul.mubr.bf16.gmra.mxu0 %v3652
      %v3783 = vpop.f32.mrf.mxu0
      %v3784 = vadd.f32 %v3607, %v3783
      %v3785 = vpop.f32.mrf.mxu0
      %v3786 = vpop.f32.mrf.mxu0
      %v3787 = vadd.f32 %v3607, %v3786
      %v3788 = vpop.f32.mrf.mxu0
      %3789 = vmatprep.mubr.bf16.mxu0 0
      %3790 = vmatmul.mubr.bf16.gmra.mxu0 %v3655
      %v3791 = vpop.f32.mrf.mxu0
      %v3792 = vadd.f32 %v3607, %v3791
      %v3793 = vpop.f32.mrf.mxu0
      %v3794 = vpop.f32.mrf.mxu0
      %v3795 = vadd.f32 %v3607, %v3794
      %v3796 = vpop.f32.mrf.mxu0
      %3797 = vmatprep.mubr.bf16.mxu0 0
      %3798 = vmatmul.mubr.bf16.gmra.mxu0 %v3658
      %v3799 = vpop.f32.mrf.mxu0
      %v3800 = vadd.f32 %v3607, %v3799
      %v3801 = vpop.f32.mrf.mxu0
      %v3802 = vpop.f32.mrf.mxu0
      %v3803 = vadd.f32 %v3607, %v3802
      %v3804 = vpop.f32.mrf.mxu0
      %3805 = vmatprep.mubr.bf16.mxu0 0
      %3806 = vmatmul.mubr.bf16.gmra.mxu0 %v3661
      %v3807 = vpop.f32.mrf.mxu0
      %v3808 = vadd.f32 %v3607, %v3807
      %v3809 = vpop.f32.mrf.mxu0
      %v3810 = vpop.f32.mrf.mxu0
      %v3811 = vadd.f32 %v3607, %v3810
      %v3812 = vpop.f32.mrf.mxu0
      %3813 = vmatprep.mubr.bf16.mxu0 0
      %3814 = vmatmul.mubr.bf16.gmra.mxu0 %v3664
      %v3815 = vpop.f32.mrf.mxu0
      %v3816 = vadd.f32 %v3607, %v3815
      %v3817 = vpop.f32.mrf.mxu0
      %v3818 = vpop.f32.mrf.mxu0
      %v3819 = vadd.f32 %v3607, %v3818
      %v3820 = vpop.f32.mrf.mxu0
      %3821 = vmatprep.mubr.bf16.mxu0 0
      %3822 = vmatmul.mubr.bf16.gmra.mxu0 %v3667
      %v3823 = vpop.f32.mrf.mxu0
      %v3824 = vadd.f32 %v3607, %v3823
      %v3825 = vpop.f32.mrf.mxu0
      %v3826 = vpop.f32.mrf.mxu0
      %v3827 = vadd.f32 %v3607, %v3826
      %v3828 = vpop.f32.mrf.mxu0
      %3829 = vdwg.mxu0
      %3862 = vrot.lane.b32.xlu0 %v3704, 64
      %v3863 = vpop.permute.xlu0 %3862
      %3864 = vrot.lane.b32.xlu0 %v3707, 64
      %v3865 = vpop.permute.xlu0 %3864
      %3866 = vrot.lane.b32.xlu0 %v3712, 64
      %v3867 = vpop.permute.xlu0 %3866
      %3868 = vrot.lane.b32.xlu0 %v3715, 64
      %v3869 = vpop.permute.xlu0 %3868
      %3870 = vrot.lane.b32.xlu0 %v3720, 64
      %v3871 = vpop.permute.xlu0 %3870
      %3872 = vrot.lane.b32.xlu0 %v3723, 64
      %v3873 = vpop.permute.xlu0 %3872
      %3874 = vrot.lane.b32.xlu0 %v3728, 64
      %v3875 = vpop.permute.xlu0 %3874
      %3876 = vrot.lane.b32.xlu0 %v3731, 64
      %v3877 = vpop.permute.xlu0 %3876
      %3878 = vrot.lane.b32.xlu0 %v3736, 64
      %v3879 = vpop.permute.xlu0 %3878
      %3880 = vrot.lane.b32.xlu0 %v3739, 64
      %v3881 = vpop.permute.xlu0 %3880
      %3882 = vrot.lane.b32.xlu0 %v3744, 64
      %v3883 = vpop.permute.xlu0 %3882
      %3884 = vrot.lane.b32.xlu0 %v3747, 64
      %v3885 = vpop.permute.xlu0 %3884
      %3886 = vrot.lane.b32.xlu0 %v3752, 64
      %v3887 = vpop.permute.xlu0 %3886
      %3888 = vrot.lane.b32.xlu0 %v3755, 64
      %v3889 = vpop.permute.xlu0 %3888
      %3890 = vrot.lane.b32.xlu0 %v3760, 64
      %v3891 = vpop.permute.xlu0 %3890
      %3892 = vrot.lane.b32.xlu0 %v3763, 64
      %v3893 = vpop.permute.xlu0 %3892
      %3894 = vrot.lane.b32.xlu0 %v3768, 64
      %v3895 = vpop.permute.xlu0 %3894
      %3896 = vrot.lane.b32.xlu0 %v3771, 64
      %v3897 = vpop.permute.xlu0 %3896
      %3898 = vrot.lane.b32.xlu0 %v3776, 64
      %v3899 = vpop.permute.xlu0 %3898
      %3900 = vrot.lane.b32.xlu0 %v3779, 64
      %v3901 = vpop.permute.xlu0 %3900
      %3902 = vrot.lane.b32.xlu0 %v3784, 64
      %v3903 = vpop.permute.xlu0 %3902
      %3904 = vrot.lane.b32.xlu0 %v3787, 64
      %v3905 = vpop.permute.xlu0 %3904
      %3906 = vrot.lane.b32.xlu0 %v3792, 64
      %v3907 = vpop.permute.xlu0 %3906
      %3908 = vrot.lane.b32.xlu0 %v3795, 64
      %v3909 = vpop.permute.xlu0 %3908
      %3910 = vrot.lane.b32.xlu0 %v3800, 64
      %v3911 = vpop.permute.xlu0 %3910
      %3912 = vrot.lane.b32.xlu0 %v3803, 64
      %v3913 = vpop.permute.xlu0 %3912
      %3914 = vrot.lane.b32.xlu0 %v3808, 64
      %v3915 = vpop.permute.xlu0 %3914
      %3916 = vrot.lane.b32.xlu0 %v3811, 64
      %v3917 = vpop.permute.xlu0 %3916
      %3918 = vrot.lane.b32.xlu0 %v3816, 64
      %v3919 = vpop.permute.xlu0 %3918
      %3920 = vrot.lane.b32.xlu0 %v3819, 64
      %v3921 = vpop.permute.xlu0 %3920
      %3922 = vrot.lane.b32.xlu0 %v3824, 64
      %v3923 = vpop.permute.xlu0 %3922
      %3924 = vrot.lane.b32.xlu0 %v3827, 64
      %v3925 = vpop.permute.xlu0 %3924
      %3958 = vst.msk [vmem:[%s495] sm:$0xff] %vm577, %v3863
      %3959 = vst.msk [vmem:[%s495 + $0x8] sm:$0xff] %vm577, %v3865
      %3960 = vst.msk [vmem:[%s495 + $0x10] sm:$0xff] %vm577, %v3867
      %3961 = vst.msk [vmem:[%s495 + $0x18] sm:$0xff] %vm577, %v3869
      %3962 = vst.msk [vmem:[%s495 + $0x20] sm:$0xff] %vm577, %v3871
      %3963 = vst.msk [vmem:[%s495 + $0x28] sm:$0xff] %vm577, %v3873
      %3964 = vst.msk [vmem:[%s495 + $0x30] sm:$0xff] %vm577, %v3875
      %3965 = vst.msk [vmem:[%s495 + $0x38] sm:$0xff] %vm577, %v3877
      %3966 = vst.msk [vmem:[%s495 + $0x40] sm:$0xff] %vm577, %v3879
      %3967 = vst.msk [vmem:[%s495 + $0x48] sm:$0xff] %vm577, %v3881
      %3968 = vst.msk [vmem:[%s495 + $0x50] sm:$0xff] %vm577, %v3883
      %3969 = vst.msk [vmem:[%s495 + $0x58] sm:$0xff] %vm577, %v3885
      %3970 = vst.msk [vmem:[%s495 + $0x60] sm:$0xff] %vm577, %v3887
      %3971 = vst.msk [vmem:[%s495 + $0x68] sm:$0xff] %vm577, %v3889
      %3972 = vst.msk [vmem:[%s495 + $0x70] sm:$0xff] %vm577, %v3891
      %3973 = vst.msk [vmem:[%s495 + $0x78] sm:$0xff] %vm577, %v3893
      %3974 = vst.msk [vmem:[%s495 + $0x80] sm:$0xff] %vm577, %v3895
      %3975 = vst.msk [vmem:[%s495 + $0x88] sm:$0xff] %vm577, %v3897
      %3976 = vst.msk [vmem:[%s495 + $0x90] sm:$0xff] %vm577, %v3899
      %3977 = vst.msk [vmem:[%s495 + $0x98] sm:$0xff] %vm577, %v3901
      %3978 = vst.msk [vmem:[%s495 + $0xa0] sm:$0xff] %vm577, %v3903
      %3979 = vst.msk [vmem:[%s495 + $0xa8] sm:$0xff] %vm577, %v3905
      %3980 = vst.msk [vmem:[%s495 + $0xb0] sm:$0xff] %vm577, %v3907
      %3981 = vst.msk [vmem:[%s495 + $0xb8] sm:$0xff] %vm577, %v3909
      %3982 = vst.msk [vmem:[%s495 + $0xc0] sm:$0xff] %vm577, %v3911
      %3983 = vst.msk [vmem:[%s495 + $0xc8] sm:$0xff] %vm577, %v3913
      %3984 = vst.msk [vmem:[%s495 + $0xd0] sm:$0xff] %vm577, %v3915
      %3985 = vst.msk [vmem:[%s495 + $0xd8] sm:$0xff] %vm577, %v3917
      %3986 = vst.msk [vmem:[%s495 + $0xe0] sm:$0xff] %vm577, %v3919
      %3987 = vst.msk [vmem:[%s495 + $0xe8] sm:$0xff] %vm577, %v3921
      %3988 = vst.msk [vmem:[%s495 + $0xf0] sm:$0xff] %vm577, %v3923
      %3989 = vst.msk [vmem:[%s495 + $0xf8] sm:$0xff] %vm577, %v3925
      %v3990 = vsel %vm947, %v3704, %v1108
      %v3991 = vsel %vm947, %v3707, %v1109
      %v3992 = vsel %vm947, %v3712, %v1110
      %v3993 = vsel %vm947, %v3715, %v1111
      %v3994 = vsel %vm947, %v3720, %v1112
      %v3995 = vsel %vm947, %v3723, %v1113
      %v3996 = vsel %vm947, %v3728, %v1114
      %v3997 = vsel %vm947, %v3731, %v1115
      %v3998 = vsel %vm947, %v3736, %v1116
      %v3999 = vsel %vm947, %v3739, %v1117
      %v4000 = vsel %vm947, %v3744, %v1118
      %v4001 = vsel %vm947, %v3747, %v1119
      %v4002 = vsel %vm947, %v3752, %v1120
      %v4003 = vsel %vm947, %v3755, %v1121
      %v4004 = vsel %vm947, %v3760, %v1122
      %v4005 = vsel %vm947, %v3763, %v1123
      %v4006 = vsel %vm947, %v3768, %v1124
      %v4007 = vsel %vm947, %v3771, %v1125
      %v4008 = vsel %vm947, %v3776, %v1126
      %v4009 = vsel %vm947, %v3779, %v1127
      %v4010 = vsel %vm947, %v3784, %v1128
      %v4011 = vsel %vm947, %v3787, %v1129
      %v4012 = vsel %vm947, %v3792, %v1130
      %v4013 = vsel %vm947, %v3795, %v1131
      %v4014 = vsel %vm947, %v3800, %v1132
      %v4015 = vsel %vm947, %v3803, %v1133
      %v4016 = vsel %vm947, %v3808, %v1134
      %v4017 = vsel %vm947, %v3811, %v1135
      %v4018 = vsel %vm947, %v3816, %v1136
      %v4019 = vsel %vm947, %v3819, %v1137
      %v4020 = vsel %vm947, %v3824, %v1138
      %v4021 = vsel %vm947, %v3827, %v1139
      %4022 = vst [vmem:[%s489] sm:$0xff] %v3990
      %4023 = vst [vmem:[%s489 + $0x8] sm:$0xff] %v3991
      %4024 = vst [vmem:[%s489 + $0x10] sm:$0xff] %v3992
      %4025 = vst [vmem:[%s489 + $0x18] sm:$0xff] %v3993
      %4026 = vst [vmem:[%s489 + $0x20] sm:$0xff] %v3994
      %4027 = vst [vmem:[%s489 + $0x28] sm:$0xff] %v3995
      %4028 = vst [vmem:[%s489 + $0x30] sm:$0xff] %v3996
      %4029 = vst [vmem:[%s489 + $0x38] sm:$0xff] %v3997
      %4030 = vst [vmem:[%s489 + $0x40] sm:$0xff] %v3998
      %4031 = vst [vmem:[%s489 + $0x48] sm:$0xff] %v3999
      %4032 = vst [vmem:[%s489 + $0x50] sm:$0xff] %v4000
      %4033 = vst [vmem:[%s489 + $0x58] sm:$0xff] %v4001
      %4034 = vst [vmem:[%s489 + $0x60] sm:$0xff] %v4002
      %4035 = vst [vmem:[%s489 + $0x68] sm:$0xff] %v4003
      %4036 = vst [vmem:[%s489 + $0x70] sm:$0xff] %v4004
      %4037 = vst [vmem:[%s489 + $0x78] sm:$0xff] %v4005
      %4038 = vst [vmem:[%s489 + $0x80] sm:$0xff] %v4006
      %4039 = vst [vmem:[%s489 + $0x88] sm:$0xff] %v4007
      %4040 = vst [vmem:[%s489 + $0x90] sm:$0xff] %v4008
      %4041 = vst [vmem:[%s489 + $0x98] sm:$0xff] %v4009
      %4042 = vst [vmem:[%s489 + $0xa0] sm:$0xff] %v4010
      %4043 = vst [vmem:[%s489 + $0xa8] sm:$0xff] %v4011
      %4044 = vst [vmem:[%s489 + $0xb0] sm:$0xff] %v4012
      %4045 = vst [vmem:[%s489 + $0xb8] sm:$0xff] %v4013
      %4046 = vst [vmem:[%s489 + $0xc0] sm:$0xff] %v4014
      %4047 = vst [vmem:[%s489 + $0xc8] sm:$0xff] %v4015
      %4048 = vst [vmem:[%s489 + $0xd0] sm:$0xff] %v4016
      %4049 = vst [vmem:[%s489 + $0xd8] sm:$0xff] %v4017
      %4050 = vst [vmem:[%s489 + $0xe0] sm:$0xff] %v4018
      %4051 = vst [vmem:[%s489 + $0xe8] sm:$0xff] %v4019
      %4052 = vst [vmem:[%s489 + $0xf0] sm:$0xff] %v4020
      %4053 = vst [vmem:[%s489 + $0xf8] sm:$0xff] %v4021
      %v4054 = vsub.f32 %v3424, %v1278
      %v4055 = vsub.f32 %v3429, %v1281
      %v4056 = vsub.f32 %v3434, %v1286
      %v4057 = vsub.f32 %v3439, %v1289
      %v4058 = vsub.f32 %v3444, %v1294
      %v4059 = vsub.f32 %v3449, %v1297
      %v4060 = vsub.f32 %v3454, %v1302
      %v4061 = vsub.f32 %v3459, %v1305
      %v4062 = vsub.f32 %v3464, %v1310
      %v4063 = vsub.f32 %v3469, %v1313
      %v4064 = vsub.f32 %v3474, %v1318
      %v4065 = vsub.f32 %v3479, %v1321
      %v4066 = vsub.f32 %v3484, %v1326
      %v4067 = vsub.f32 %v3489, %v1329
      %v4068 = vsub.f32 %v3494, %v1334
      %v4069 = vsub.f32 %v3499, %v1337
      %v4070 = vsub.f32 %v3504, %v1342
      %v4071 = vsub.f32 %v3509, %v1345
      %v4072 = vsub.f32 %v3514, %v1350
      %v4073 = vsub.f32 %v3519, %v1353
      %v4074 = vsub.f32 %v3524, %v1358
      %v4075 = vsub.f32 %v3529, %v1361
      %v4076 = vsub.f32 %v3534, %v1366
      %v4077 = vsub.f32 %v3539, %v1369
      %v4078 = vsub.f32 %v3544, %v1374
      %v4079 = vsub.f32 %v3549, %v1377
      %v4080 = vsub.f32 %v3554, %v1382
      %v4081 = vsub.f32 %v3559, %v1385
      %v4082 = vsub.f32 %v3564, %v1390
      %v4083 = vsub.f32 %v3569, %v1393
      %v4084 = vsub.f32 %v3574, %v1398
      %v4085 = vsub.f32 %v3579, %v1401
      %v4086 = vmul.f32 %v4054, %v4054
      %v4087 = vmul.f32 %v4055, %v4055
      %v4088 = vmul.f32 %v4056, %v4056
      %v4089 = vmul.f32 %v4057, %v4057
      %v4090 = vmul.f32 %v4058, %v4058
      %v4091 = vmul.f32 %v4059, %v4059
      %v4092 = vmul.f32 %v4060, %v4060
      %v4093 = vmul.f32 %v4061, %v4061
      %v4094 = vmul.f32 %v4062, %v4062
      %v4095 = vmul.f32 %v4063, %v4063
      %v4096 = vmul.f32 %v4064, %v4064
      %v4097 = vmul.f32 %v4065, %v4065
      %v4098 = vmul.f32 %v4066, %v4066
      %v4099 = vmul.f32 %v4067, %v4067
      %v4100 = vmul.f32 %v4068, %v4068
      %v4101 = vmul.f32 %v4069, %v4069
      %v4102 = vmul.f32 %v4070, %v4070
      %v4103 = vmul.f32 %v4071, %v4071
      %v4104 = vmul.f32 %v4072, %v4072
      %v4105 = vmul.f32 %v4073, %v4073
      %v4106 = vmul.f32 %v4074, %v4074
      %v4107 = vmul.f32 %v4075, %v4075
      %v4108 = vmul.f32 %v4076, %v4076
      %v4109 = vmul.f32 %v4077, %v4077
      %v4110 = vmul.f32 %v4078, %v4078
      %v4111 = vmul.f32 %v4079, %v4079
      %v4112 = vmul.f32 %v4080, %v4080
      %v4113 = vmul.f32 %v4081, %v4081
      %v4114 = vmul.f32 %v4082, %v4082
      %v4115 = vmul.f32 %v4083, %v4083
      %v4116 = vmul.f32 %v4084, %v4084
      %v4117 = vmul.f32 %v4085, %v4085
      %v4118 = vsel %vm577, %v4086, 0.0
      %v4119 = vsel %vm577, %v4087, 0.0
      %v4120 = vadd.f32 %v4118, %v4119
      %v4121 = vsel %vm577, %v4088, 0.0
      %v4122 = vadd.f32 %v4120, %v4121
      %v4123 = vsel %vm577, %v4089, 0.0
      %v4124 = vadd.f32 %v4122, %v4123
      %v4125 = vsel %vm577, %v4090, 0.0
      %v4126 = vadd.f32 %v4124, %v4125
      %v4127 = vsel %vm577, %v4091, 0.0
      %v4128 = vadd.f32 %v4126, %v4127
      %v4129 = vsel %vm577, %v4092, 0.0
      %v4130 = vadd.f32 %v4128, %v4129
      %v4131 = vsel %vm577, %v4093, 0.0
      %v4132 = vadd.f32 %v4130, %v4131
      %v4133 = vsel %vm577, %v4094, 0.0
      %v4134 = vadd.f32 %v4132, %v4133
      %v4135 = vsel %vm577, %v4095, 0.0
      %v4136 = vadd.f32 %v4134, %v4135
      %v4137 = vsel %vm577, %v4096, 0.0
      %v4138 = vadd.f32 %v4136, %v4137
      %v4139 = vsel %vm577, %v4097, 0.0
      %v4140 = vadd.f32 %v4138, %v4139
      %v4141 = vsel %vm577, %v4098, 0.0
      %v4142 = vadd.f32 %v4140, %v4141
      %v4143 = vsel %vm577, %v4099, 0.0
      %v4144 = vadd.f32 %v4142, %v4143
      %v4145 = vsel %vm577, %v4100, 0.0
      %v4146 = vadd.f32 %v4144, %v4145
      %v4147 = vsel %vm577, %v4101, 0.0
      %v4148 = vadd.f32 %v4146, %v4147
      %v4149 = vsel %vm577, %v4102, 0.0
      %v4150 = vadd.f32 %v4148, %v4149
      %v4151 = vsel %vm577, %v4103, 0.0
      %v4152 = vadd.f32 %v4150, %v4151
      %v4153 = vsel %vm577, %v4104, 0.0
      %v4154 = vadd.f32 %v4152, %v4153
      %v4155 = vsel %vm577, %v4105, 0.0
      %v4156 = vadd.f32 %v4154, %v4155
      %v4157 = vsel %vm577, %v4106, 0.0
      %v4158 = vadd.f32 %v4156, %v4157
      %v4159 = vsel %vm577, %v4107, 0.0
      %v4160 = vadd.f32 %v4158, %v4159
      %v4161 = vsel %vm577, %v4108, 0.0
      %v4162 = vadd.f32 %v4160, %v4161
      %v4163 = vsel %vm577, %v4109, 0.0
      %v4164 = vadd.f32 %v4162, %v4163
      %v4165 = vsel %vm577, %v4110, 0.0
      %v4166 = vadd.f32 %v4164, %v4165
      %v4167 = vsel %vm577, %v4111, 0.0
      %v4168 = vadd.f32 %v4166, %v4167
      %v4169 = vsel %vm577, %v4112, 0.0
      %v4170 = vadd.f32 %v4168, %v4169
      %v4171 = vsel %vm577, %v4113, 0.0
      %v4172 = vadd.f32 %v4170, %v4171
      %v4173 = vsel %vm577, %v4114, 0.0
      %v4174 = vadd.f32 %v4172, %v4173
      %v4175 = vsel %vm577, %v4115, 0.0
      %v4176 = vadd.f32 %v4174, %v4175
      %v4177 = vsel %vm577, %v4116, 0.0
      %v4178 = vadd.f32 %v4176, %v4177
      %v4179 = vsel %vm577, %v4117, 0.0
      %v4180 = vadd.f32 %v4178, %v4179
      %4181 = vadd.xlane.f32.xlu0 %v4180
      %v4182 = vpop.xlane.xlu0 %4181
      %v4183 = vrot.slane %v4182, 4
      %v4184 = vadd.f32 %v4182, %v4183
      %v4185 = vrot.slane %v4184, 2
      %v4186 = vadd.f32 %v4184, %v4185
      %v4187 = vrot.slane %v4186, 1
      %v4188 = vadd.f32 %v4186, %v4187
      %s4189 = vtos %v4188
      %v4190 = vstv %s4189
      %v4194 = vcombine.low %v2615, %v3324
      %v4196 = vunpack.c.l.s4 1966171168
      %v4197 = vunpack.c.0.s8 %v4196
      %v4198 = vlaneseq
      %v4199 = vshrl.u32 %v4198, 7
      %v4200 = vsub.s32 %v4197, %v4199
      %v4201 = vrot.slane %v4194, %v4200
      %v4203 = vunpack.c.l.s4 1966171168
      %v4204 = vunpack.c.0.s8 %v4203
      %v4205 = vlaneseq
      %v4206 = vshrl.u32 %v4205, 7
      %v4207 = vsub.s32 %v4204, %v4206
      %v4208 = vrot.slane %v4190, %v4207
      %v4209 = vcombine.low %v4201, %v4208
      %v4211 = vunpack.c.l.s4 1966171168
      %v4212 = vunpack.c.0.s8 %v4211
      %v4213 = vlaneseq
      %v4214 = vshrl.u32 %v4213, 7
      %v4215 = vsub.s32 %v4212, %v4214
      %v4216 = vrot.slane %v4209, %v4215
      %v4218 = vlaneseq
      %vm4219 = vcmp.ge.s32.totalorder %v4218, 0
      %vm4220 = vcmp.lt.s32.totalorder %v4218, 384
      %vm4221 = vmand %vm4219, %vm4220
      %4222 = vst.msk [vmem:[%s500] sm:$0x7] %vm4221, %v4216
      %v4223 = vld [vmem:[%s10] sm:$0xf]
      %v4226 = vunpack.c.l.s4 1983009808
      %v4227 = vunpack.c.0.s8 %v4226
      %v4228 = vlaneseq
      %v4229 = vshrl.u32 %v4228, 7
      %v4230 = vsub.s32 %v4227, %v4229
      %v4231 = vrot.slane %v4223, %v4230
      %v4232 = vcombine.high %v4231, %v4231
      %4235 = vmatprep.subr.mxu0 0.0
      %4236 = vmatpush1.msra.mxu0 %v3763
      %4237 = vmatprep.subr.mxu0 0.0
      %4238 = vmatpush1.msra.mxu0 %v3760
      %4239 = vmatprep.subr.mxu0 0.0
      %4240 = vmatpush1.msra.mxu0 %v3755
      %4241 = vmatprep.subr.mxu0 0.0
      %4242 = vmatpush1.msra.mxu0 %v3752
      %4243 = vmatprep.subr.mxu0 0.0
      %4244 = vmatpush1.msra.mxu0 %v3747
      %4245 = vmatprep.subr.mxu0 0.0
      %4246 = vmatpush1.msra.mxu0 %v3744
      %4247 = vmatprep.subr.mxu0 0.0
      %4248 = vmatpush1.msra.mxu0 %v3739
      %4249 = vmatprep.subr.mxu0 0.0
      %4250 = vmatpush1.msra.mxu0 %v3736
      %4251 = vmatprep.subr.mxu0 0.0
      %4252 = vmatpush1.msra.mxu0 %v3731
      %4253 = vmatprep.subr.mxu0 0.0
      %4254 = vmatpush1.msra.mxu0 %v3728
      %4255 = vmatprep.subr.mxu0 0.0
      %4256 = vmatpush1.msra.mxu0 %v3723
      %4257 = vmatprep.subr.mxu0 0.0
      %4258 = vmatpush1.msra.mxu0 %v3720
      %4259 = vmatprep.subr.mxu0 0.0
      %4260 = vmatpush1.msra.mxu0 %v3715
      %4261 = vmatprep.subr.mxu0 0.0
      %4262 = vmatpush1.msra.mxu0 %v3712
      %4263 = vmatprep.subr.mxu0 0.0
      %4264 = vmatpush1.msra.mxu0 %v3707
      %4265 = vmatprep.subr.mxu0 0.0
      %4266 = vmatpush1.msra.mxu0 %v3704
      %4267 = vmatprep.subr.mxu0 0.0
      %4268 = vmatpush2.msra.mxu0 %v3827
      %4269 = vmatprep.subr.mxu0 0.0
      %4270 = vmatpush2.msra.mxu0 %v3824
      %4271 = vmatprep.subr.mxu0 0.0
      %4272 = vmatpush2.msra.mxu0 %v3819
      %4273 = vmatprep.subr.mxu0 0.0
      %4274 = vmatpush2.msra.mxu0 %v3816
      %4275 = vmatprep.subr.mxu0 0.0
      %4276 = vmatpush2.msra.mxu0 %v3811
      %4277 = vmatprep.subr.mxu0 0.0
      %4278 = vmatpush2.msra.mxu0 %v3808
      %4279 = vmatprep.subr.mxu0 0.0
      %4280 = vmatpush2.msra.mxu0 %v3803
      %4281 = vmatprep.subr.mxu0 0.0
      %4282 = vmatpush2.msra.mxu0 %v3800
      %4283 = vmatprep.subr.mxu0 0.0
      %4284 = vmatpush2.msra.mxu0 %v3795
      %4285 = vmatprep.subr.mxu0 0.0
      %4286 = vmatpush2.msra.mxu0 %v3792
      %4287 = vmatprep.subr.mxu0 0.0
      %4288 = vmatpush2.msra.mxu0 %v3787
      %4289 = vmatprep.subr.mxu0 0.0
      %4290 = vmatpush2.msra.mxu0 %v3784
      %4291 = vmatprep.subr.mxu0 0.0
      %4292 = vmatpush2.msra.mxu0 %v3779
      %4293 = vmatprep.subr.mxu0 0.0
      %4294 = vmatpush2.msra.mxu0 %v3776
      %4295 = vmatprep.subr.mxu0 0.0
      %4296 = vmatpush2.msra.mxu0 %v3771
      %4297 = vmatprep.subr.mxu0 0.0
      %4298 = vmatpush2.msra.mxu0 %v3768
      %4299 = vmatprep.mubr.f32.mxu0 %v4232
      %4300 = vmatmul.mubr.f32.gmra.mxu0 %v4231
      %v4301 = vpop.f32.mrf.mxu0
      %v4302 = vadd.f32 0.0, %v4301
      %v4303 = vpop.f32.mrf.mxu0
      %4304 = vdwg.mxu0
      %vm4305 = vcmask 517120
      %4306 = vst.msk [vmem:[%s504] sm:$0x3] %vm4305, %v4302
      %s4307 = smul.u32 32, %s26
      %p4308 = scmp.lt.s32.totalorder %s4307, 63
      %s4309 = scalar_select %p4308, %s4307, 63
      %s4310 = smul.addr %s4309, 8
      %s4311 = scalar_lea.vmem %s11, %s4310
      %s4312 = smul.u32 32, %s26
      %p4313 = scmp.lt.s32.totalorder %s4312, 63
      %s4314 = scalar_select %p4313, %s4312, 63
      %s4315 = smul.addr %s4314, 8
      %s4316 = scalar_lea.vmem %s12, %s4315
      %p4317 = scmp.lt.s32.totalorder %s26, 1
      %s4318 = scalar_select %p4317, %s26, 1
      %s4319 = smul.addr %s4318, 3
      %s4320 = scalar_lea.vmem %s13, %s4319
      %p4321 = scmp.lt.s32.totalorder %s26, 1
      %s4322 = scalar_select %p4321, %s26, 1
      %s4323 = smul.addr %s4322, 2
      %s4324 = scalar_lea.vmem %s14, %s4323
      // Predicated region
      $region65: #{intentional_tokenizer_forward.1} parent=63 // pred_check
        %p4325 = pneg %p280
      $region66: #{intentional_tokenizer_forward.1} parent=63 // pred_check_branch
        %4327 = sbr.rel (%p4325) target = $region68
      $region67: #{intentional_tokenizer_forward.1} parent=63 // pred_region
        %s4328 = smul.u32 32, %s26
      $region68: #{intentional_tokenizer_forward.1} parent=63 // pred_fallthru
        _
      // Predicated region
      $region69: #{intentional_tokenizer_forward.1} parent=63 // pred_check
        %p4329 = pneg %p306
      $region70: #{intentional_tokenizer_forward.1} parent=63 // pred_check_branch
        %4331 = sbr.rel (%p4329) target = $region72
      $region71: #{intentional_tokenizer_forward.1} parent=63 // pred_region
        %s4332 = smul.u32 32, %s26
      $region72: #{intentional_tokenizer_forward.1} parent=63 // pred_fallthru
        _
      // Predicated region
      $region73: #{intentional_tokenizer_forward.1} parent=63 // pred_check
        %p4333 = pneg %p332
      $region74: #{intentional_tokenizer_forward.1} parent=63 // pred_check_branch
        %4335 = sbr.rel (%p4333) target = $region76
      $region75: #{intentional_tokenizer_forward.1} parent=63 // pred_region
        _
      $region76: #{intentional_tokenizer_forward.1} parent=63 // pred_fallthru
        _
      // Predicated region
      $region77: #{intentional_tokenizer_forward.1} parent=63 // pred_check
        %p4336 = pneg %p358
      $region78: #{intentional_tokenizer_forward.1} parent=63 // pred_check_branch
        %4338 = sbr.rel (%p4336) target = $region80
      $region79: #{intentional_tokenizer_forward.1} parent=63 // pred_region
        _
      $region80: #{intentional_tokenizer_forward.1} parent=63 // pred_fallthru
        _
    $region64: #{intentional_tokenizer_forward.1} parent=5 // pred_fallthru
      _
    %p4339 = scmp.le.s32.totalorder 2, %s21
    // Predicated region
    $region81: #{intentional_tokenizer_forward.1} parent=5 // pred_check
      %p4340 = pneg %p4339
    $region82: #{intentional_tokenizer_forward.1} parent=5 // pred_check_branch
      %4342 = sbr.rel (%p4340) target = $region84
    $region83: #{intentional_tokenizer_forward.1} parent=5 // pred_region
      %s4343 = ssub.s32 %s21, 2
      // Predicated region
      $region85: #{intentional_tokenizer_forward.1} parent=83 // pred_check
        %p4344 = pneg %p286
      $region86: #{intentional_tokenizer_forward.1} parent=83 // pred_check_branch
        %4346 = sbr.rel (%p4344) target = $region88
      $region87: #{intentional_tokenizer_forward.1} parent=83 // pred_region
        %s4347 = smul.u32 32, %s27
        %p4348 = scmp.lt.s32.totalorder %s4347, 63
        %s4349 = scalar_select %p4348, %s4347, 63
        %s4350 = smul.addr %s4349, 8
        %s4351 = scalar_lea.vmem %s11, %s4350
      $region88: #{intentional_tokenizer_forward.1} parent=83 // pred_fallthru
        _
      // Predicated region
      $region89: #{intentional_tokenizer_forward.1} parent=83 // pred_check
        %p4352 = pneg %p312
      $region90: #{intentional_tokenizer_forward.1} parent=83 // pred_check_branch
        %4354 = sbr.rel (%p4352) target = $region92
      $region91: #{intentional_tokenizer_forward.1} parent=83 // pred_region
        %s4355 = smul.u32 32, %s27
        %p4356 = scmp.lt.s32.totalorder %s4355, 63
        %s4357 = scalar_select %p4356, %s4355, 63
        %s4358 = smul.addr %s4357, 8
        %s4359 = scalar_lea.vmem %s12, %s4358
      $region92: #{intentional_tokenizer_forward.1} parent=83 // pred_fallthru
        _
      // Predicated region
      $region93: #{intentional_tokenizer_forward.1} parent=83 // pred_check
        %p4360 = pneg %p338
      $region94: #{intentional_tokenizer_forward.1} parent=83 // pred_check_branch
        %4362 = sbr.rel (%p4360) target = $region96
      $region95: #{intentional_tokenizer_forward.1} parent=83 // pred_region
        %p4363 = scmp.lt.s32.totalorder %s27, 1
        %s4364 = scalar_select %p4363, %s27, 1
        %s4365 = smul.addr %s4364, 3
        %s4366 = scalar_lea.vmem %s13, %s4365
      $region96: #{intentional_tokenizer_forward.1} parent=83 // pred_fallthru
        _
      // Predicated region
      $region97: #{intentional_tokenizer_forward.1} parent=83 // pred_check
        %p4367 = pneg %p364
      $region98: #{intentional_tokenizer_forward.1} parent=83 // pred_check_branch
        %4369 = sbr.rel (%p4367) target = $region100
      $region99: #{intentional_tokenizer_forward.1} parent=83 // pred_region
        %p4370 = scmp.lt.s32.totalorder %s27, 1
        %s4371 = scalar_select %p4370, %s27, 1
        %s4372 = smul.addr %s4371, 2
        %s4373 = scalar_lea.vmem %s14, %s4372
      $region100: #{intentional_tokenizer_forward.1} parent=83 // pred_fallthru
        _
    $region84: #{intentional_tokenizer_forward.1} parent=5 // pred_fallthru
      _
  $region6: #{intentional_tokenizer_forward.1} parent=0 // loop_footer
    %s25 = sadd.s32 1, %s21
  $region7: #{intentional_tokenizer_forward.1} parent=0 // loop_footer_branch
    %20 = sbr.rel target = $region3
  $region8: #{intentional_tokenizer_forward.1} parent=0 // loop_exit
    _

</llo_original>
